<compile_context>
chip_gen: v5e
topology: v5e:2x2
jax: 0.10.0
libtpu: 0.0.40
codegen_flags: <defaults>
</compile_context>

<pallas_src>
import jax
import jax.numpy as jnp
from jax import lax
from jax.experimental import pallas as pl
from jax.experimental.pallas import tpu as pltpu

# ----------------------------- config ---------------------------------------
C_IN = 3             # RGB input channels
C_IN_PAD = 8         # padded to one full sublane tile
C_FEAT = 480         # hrnet feature dim (from DECO.__init__)
C_PAD = 512          # 480 -> 512: lane-aligned (4*128) and MXU-tile aligned
NUM_OUT = 64         # TODO(synk): real DECO Classifier predicts 6890 SMPL-vertex
                     # contacts; shrunk to 64 for this synthetic small-shape script.
NUM_OUT_PAD = 128    # padded classifier width -> unmasked lane-dense stores
TILE_HW = 128        # spatial tile for the conv+pool accumulator loop
LN_EPS = 1e-5


# --------------------- fused DECO forward kernel -----------------------------
def deco_fused_kernel(x_ref, we_ref, be_ref, wvo_ref, g_ref, beta_ref,
                      wc_ref, bc_ref, o_ref):
    # x_ref  : (B, C_IN_PAD, HW) f32   channels on sublanes, HW lane-dense
    # we_ref : (C_IN_PAD, 2*C_PAD) f32 [enc_sem | enc_part] fused 1x1-conv weight
    # be_ref : (1, 2*C_PAD) f32        concatenated conv bias
    # wvo_ref: (C_PAD, C_PAD) bf16     folded Wv @ Wo
    # g_ref, beta_ref: (1, C_PAD) f32  LayerNorm affine (zero-padded)
    # wc_ref : (C_PAD, NUM_OUT_PAD) bf16  classifier weight
    # bc_ref : (1, NUM_OUT_PAD) f32       classifier bias
    # o_ref  : (B, NUM_OUT_PAD) f32       sigmoid contacts (lane padded)
    B, _, HW = x_ref.shape
    n_tiles = HW // TILE_HW

    w_enc = we_ref[...]                                   # (8, 1024)
    b_enc = be_ref[...]                                   # (1, 1024)

    # Identity used to transpose (C_IN_PAD, T) -> (T, C_IN_PAD) on the MXU.
    eye = (lax.broadcasted_iota(jnp.int32, (TILE_HW, TILE_HW), 0) ==
           lax.broadcasted_iota(jnp.int32, (TILE_HW, TILE_HW), 1)
           ).astype(jnp.float32)
    nt_dims = (((1,), (1,)), ((), ()))                    # A @ B^T (q @ k.T pattern)

    row_ids = lax.broadcasted_iota(jnp.int32, (B, 1), 0)
    pooled = jnp.zeros((B, 2 * C_PAD), jnp.float32)

    # Dual encoder (1x1 conv + ReLU) + AdaptiveAvgPool2d(1), tiled over HW with
    # an f32 pooled-sum accumulator (full (HW, 2C) activation never built).
    for b in range(B):                                    # static, B small
        psum = jnp.zeros((1, 2 * C_PAD), jnp.float32)
        for t in range(n_tiles):                          # static HW tiling
            x_t = x_ref[b, :, pl.ds(t * TILE_HW, TILE_HW)]        # (8, T)
            # (T, 8) = eye @ x_t^T : spatial positions onto sublanes via MXU.
            x_tT = lax.dot_general(eye, x_t, nt_dims,
                                   preferred_element_type=jnp.float32)
            h = jnp.dot(x_tT, w_enc, preferred_element_type=jnp.float32)
            h = jnp.maximum(h + b_enc, 0.0)                       # (T, 1024)
            psum = psum + jnp.sum(h, axis=0, keepdims=True)       # pooled sum
        # Place row b of the batched pooled matrix (one-hot outer product).
        pooled = pooled + jnp.where(row_ids == b, 1.0, 0.0) * psum
    pooled = pooled * (1.0 / HW)                                  # (B, 1024)

    sem = pooled[:, :C_PAD]                  # (B, 512)  lane-aligned slices
    part = pooled[:, C_PAD:]                 # (B, 512)

    # Cross attention with a single pooled key/value token: softmax == 1, so
    # attn_out == part @ Wv and the output projection folds: part @ (Wv @ Wo).
    proj = jnp.dot(part.astype(jnp.bfloat16), wvo_ref[...],
                   preferred_element_type=jnp.float32)            # (B, 512)
    y = sem + proj                                                # residual

    # LayerNorm over the 480 real features only (mask the 32 pad lanes).
    feat = lax.broadcasted_iota(jnp.int32, (1, C_PAD), 1)
    mask = (feat < C_FEAT).astype(jnp.float32)                    # (1, 512)
    inv_n = 1.0 / C_FEAT
    mu = jnp.sum(y * mask, axis=-1, keepdims=True) * inv_n
    d = (y - mu) * mask                                           # pad lanes -> 0
    var = jnp.sum(d * d, axis=-1, keepdims=True) * inv_n
    yn = d * lax.rsqrt(var + LN_EPS) * g_ref[...] + beta_ref[...]

    # Classifier (lane-dense padded 128-wide output) + sigmoid.
    logits = jnp.dot(yn.astype(jnp.bfloat16), wc_ref[...],
                     preferred_element_type=jnp.float32) + bc_ref[...]
    o_ref[...] = jax.nn.sigmoid(logits)                           # (B, 128)


def deco_fused(x_pad, params):
    """x_pad: (B, C_IN_PAD, HW) f32 -> sigmoid contacts (B, NUM_OUT_PAD) f32."""
    B, _, HW = x_pad.shape
    assert HW % TILE_HW == 0, "TODO(synk): mask / zero-handle partial HW tiles"
    vmem = pl.BlockSpec(memory_space=pltpu.MemorySpace.VMEM)
    return pl.pallas_call(
        deco_fused_kernel,
        out_shape=jax.ShapeDtypeStruct((B, NUM_OUT_PAD), jnp.float32),
        # Single invocation (empty grid): whole batch processed at once, every
        # operand whole-array VMEM-resident, weights single-buffered (no pipeline).
        in_specs=[vmem] * 8,
        out_specs=vmem,
    )(x_pad, params["enc_w"], params["enc_b"], params["wvo"],
      params["ln_g"], params["ln_b"], params["wc"], params["bc"])


# ----------------------------- params / forward -------------------------------
def init_params(key):
    ks = jax.random.split(key, 8)
    s = 0.05
    enc_sem_w = s * jax.random.normal(ks[0], (C_IN, C_FEAT), jnp.float32)
    enc_sem_b = s * jax.random.normal(ks[1], (1, C_FEAT), jnp.float32)
    enc_part_w = s * jax.random.normal(ks[2], (C_IN, C_FEAT), jnp.float32)
    enc_part_b = s * jax.random.normal(ks[3], (1, C_FEAT), jnp.float32)
    wv = s * jax.random.normal(ks[4], (C_FEAT, C_FEAT), jnp.float32)
    wo = s * jax.random.normal(ks[5], (C_FEAT, C_FEAT), jnp.float32)
    wc = s * jax.random.normal(ks[6], (C_FEAT, NUM_OUT), jnp.float32)
    bc = s * jax.random.normal(ks[7], (1, NUM_OUT), jnp.float32)

    cpad = C_PAD - C_FEAT  # 32 zero pad lanes per 512-wide feature block

    def pad2(a, pr, pc):
        return jnp.pad(a, ((0, pr), (0, pc)))

    # Both 1x1-conv encoders fused into one (C_IN_PAD, 2*C_PAD) weight; feature
    # columns are [sem(480) | 0(32) | part(480) | 0(32)]; channel rows pad 3->8.
    enc_w = jnp.concatenate(
        [pad2(enc_sem_w, 0, cpad), pad2(enc_part_w, 0, cpad)], axis=1)
    enc_w = jnp.pad(enc_w, ((0, C_IN_PAD - C_IN), (0, 0)))
    enc_b = jnp.concatenate(
        [pad2(enc_sem_b, 0, cpad), pad2(enc_part_b, 0, cpad)], axis=1)

    # TODO(synk): Cross_Att / Classifier definitions are not in the provided
    # source; single-head cross-attn + LN + linear head stand-ins.  Wq/Wk are
    # mathematically dead (softmax over one pooled K/V token == 1), and Wv @ Wo
    # is folded into a single bf16 weight per the perf review.
    wvo = pad2(wv @ wo, cpad, cpad).astype(jnp.bfloat16)

    ln_g = jnp.pad(jnp.ones((1, C_FEAT), jnp.float32), ((0, 0), (0, cpad)))
    ln_b = jnp.zeros((1, C_PAD), jnp.float32)

    # Classifier padded 480->512 rows and 64->128 outputs (lane-dense stores).
    wc_p = pad2(wc, cpad, NUM_OUT_PAD - NUM_OUT).astype(jnp.bfloat16)
    bc_p = jnp.pad(bc, ((0, 0), (0, NUM_OUT_PAD - NUM_OUT)))

    return {"enc_w": enc_w, "enc_b": enc_b, "wvo": wvo,
            "ln_g": ln_g, "ln_b": ln_b, "wc": wc_p, "bc": bc_p}


@jax.jit
def deco_forward(img_nchw, params):
    """DECO forward, hrnet branch, context=False.  img_nchw: (B, C_IN, H, W)."""
    B, Cin, H, W = img_nchw.shape
    # NCHW -> (B, C, H*W) is a free reshape (channels already leading); pad the
    # channel axis 3 -> 8 so the kernel sees one full sublane tile per image.
    x = img_nchw.reshape(B, Cin, H * W).astype(jnp.float32)
    x = jnp.pad(x, ((0, 0), (0, C_IN_PAD - Cin), (0, 0)))
    cont = deco_fused(x, params)                 # (B, NUM_OUT_PAD)
    return cont[:, :NUM_OUT]                     # slice lane padding -> (B, 64)


if __name__ == "__main__":
    key = jax.random.PRNGKey(0)
    k_img, k_par = jax.random.split(key)
    img = jax.random.normal(k_img, (2, C_IN, 16, 16), jnp.float32)   # NCHW
    params = init_params(k_par)

    cont = deco_forward(img, params)
    cont = jax.block_until_ready(cont)

    assert cont.shape == (2, NUM_OUT)
    assert bool(jnp.all(jnp.isfinite(cont)))
    assert bool(jnp.all((cont >= 0.0) & (cont <= 1.0)))   # sigmoid output
    print("KERNEL_OK")
</pallas_src>

<mosaic_0001>
module attributes {stable_mosaic.version = 11 : i64} {
  func.func @deco_fused_kernel(%arg0: memref<2x8x256xf32, #tpu.memory_space<vmem>>, %arg1: memref<8x1024xf32, #tpu.memory_space<vmem>>, %arg2: memref<1x1024xf32, #tpu.memory_space<vmem>>, %arg3: memref<512x512xbf16, #tpu.memory_space<vmem>>, %arg4: memref<1x512xf32, #tpu.memory_space<vmem>>, %arg5: memref<1x512xf32, #tpu.memory_space<vmem>>, %arg6: memref<512x128xbf16, #tpu.memory_space<vmem>>, %arg7: memref<1x128xf32, #tpu.memory_space<vmem>>, %arg8: memref<2x128xf32, #tpu.memory_space<vmem>>) attributes {dimension_semantics = [], scalar_prefetch = 0 : i64, scratch_operands = 0 : i64, tpu.core_type = #tpu.core_type<tc>} {
    %c0 = arith.constant 0 : index
    %c0_0 = arith.constant 0 : index
    %0 = vector.load %arg1[%c0, %c0_0] : memref<8x1024xf32, #tpu.memory_space<vmem>>, vector<8x1024xf32>
    %c0_1 = arith.constant 0 : index
    %c0_2 = arith.constant 0 : index
    %1 = vector.load %arg2[%c0_1, %c0_2] : memref<1x1024xf32, #tpu.memory_space<vmem>>, vector<1x1024xf32>
    %2 = tpu.iota {dimensions = array<i32: 0>} : vector<128x128xi32>
    %3 = tpu.iota {dimensions = array<i32: 1>} : vector<128x128xi32>
    %4 = arith.cmpi eq, %2, %3 : vector<128x128xi32>
    %5 = arith.extui %4 : vector<128x128xi1> to vector<128x128xi32>
    %6 = arith.sitofp %5 : vector<128x128xi32> to vector<128x128xf32>
    %7 = tpu.iota {dimensions = array<i32: 0>} : vector<2x1xi32>
    %cst = arith.constant 0.000000e+00 : f32
    %8 = vector.broadcast %cst : f32 to vector<2x1024xf32>
    %cst_3 = arith.constant 0.000000e+00 : f32
    %9 = vector.broadcast %cst_3 : f32 to vector<1x1024xf32>
    %c0_4 = arith.constant 0 : index
    %c0_5 = arith.constant 0 : index
    %c0_6 = arith.constant 0 : index
    %10 = vector.load %arg0[%c0_4, %c0_5, %c0_6] : memref<2x8x256xf32, #tpu.memory_space<vmem>>, vector<1x8x128xf32>
    %11 = vector.shape_cast %10 : vector<1x8x128xf32> to vector<8x128xf32>
    %cst_7 = arith.constant dense<0.000000e+00> : vector<128x8xf32>
    %12 = tpu.matmul %6, %11, %cst_7 {dimension_numbers = #tpu.dot_dimension_numbers<[1], [1], [0], [0], [0, 0, 1, 0], [], []>} : vector<128x128xf32>, vector<8x128xf32>, vector<128x8xf32> -> vector<128x8xf32>
    %cst_8 = arith.constant dense<0.000000e+00> : vector<128x1024xf32>
    %13 = tpu.matmul %12, %0, %cst_8 {dimension_numbers = #tpu.dot_dimension_numbers<[1], [0], [0], [1], [0, 0, 1, 1], [], []>} : vector<128x8xf32>, vector<8x1024xf32>, vector<128x1024xf32> -> vector<128x1024xf32>
    %14 = vector.broadcast %1 : vector<1x1024xf32> to vector<128x1024xf32>
    %15 = arith.addf %13, %14 : vector<128x1024xf32>
    %cst_9 = arith.constant 0.000000e+00 : f32
    %16 = vector.broadcast %cst_9 : f32 to vector<128x1024xf32>
    %17 = arith.maximumf %15, %16 : vector<128x1024xf32>
    %cst_10 = arith.constant dense<0.000000e+00> : vector<1024xf32>
    %18 = vector.multi_reduction <add>, %17, %cst_10 [0] : vector<128x1024xf32> to vector<1024xf32>
    %19 = vector.shape_cast %18 : vector<1024xf32> to vector<1x1024xf32>
    %20 = arith.addf %9, %19 : vector<1x1024xf32>
    %c0_11 = arith.constant 0 : index
    %c0_12 = arith.constant 0 : index
    %c128 = arith.constant 128 : index
    %21 = vector.load %arg0[%c0_11, %c0_12, %c128] : memref<2x8x256xf32, #tpu.memory_space<vmem>>, vector<1x8x128xf32>
    %22 = vector.shape_cast %21 : vector<1x8x128xf32> to vector<8x128xf32>
    %cst_13 = arith.constant dense<0.000000e+00> : vector<128x8xf32>
    %23 = tpu.matmul %6, %22, %cst_13 {dimension_numbers = #tpu.dot_dimension_numbers<[1], [1], [0], [0], [0, 0, 1, 0], [], []>} : vector<128x128xf32>, vector<8x128xf32>, vector<128x8xf32> -> vector<128x8xf32>
    %cst_14 = arith.constant dense<0.000000e+00> : vector<128x1024xf32>
    %24 = tpu.matmul %23, %0, %cst_14 {dimension_numbers = #tpu.dot_dimension_numbers<[1], [0], [0], [1], [0, 0, 1, 1], [], []>} : vector<128x8xf32>, vector<8x1024xf32>, vector<128x1024xf32> -> vector<128x1024xf32>
    %25 = vector.broadcast %1 : vector<1x1024xf32> to vector<128x1024xf32>
    %26 = arith.addf %24, %25 : vector<128x1024xf32>
    %cst_15 = arith.constant 0.000000e+00 : f32
    %27 = vector.broadcast %cst_15 : f32 to vector<128x1024xf32>
    %28 = arith.maximumf %26, %27 : vector<128x1024xf32>
    %cst_16 = arith.constant dense<0.000000e+00> : vector<1024xf32>
    %29 = vector.multi_reduction <add>, %28, %cst_16 [0] : vector<128x1024xf32> to vector<1024xf32>
    %30 = vector.shape_cast %29 : vector<1024xf32> to vector<1x1024xf32>
    %31 = arith.addf %20, %30 : vector<1x1024xf32>
    %c0_i32 = arith.constant 0 : i32
    %32 = vector.broadcast %c0_i32 : i32 to vector<2x1xi32>
    %33 = arith.cmpi eq, %7, %32 : vector<2x1xi32>
    %cst_17 = arith.constant 1.000000e+00 : f32
    %cst_18 = arith.constant 0.000000e+00 : f32
    %34 = vector.broadcast %cst_17 : f32 to vector<2x1xf32>
    %35 = vector.broadcast %cst_18 : f32 to vector<2x1xf32>
    %36 = arith.select %33, %34, %35 : vector<2x1xi1>, vector<2x1xf32>
    %37 = vector.broadcast %36 : vector<2x1xf32> to vector<2x1024xf32>
    %38 = vector.broadcast %31 : vector<1x1024xf32> to vector<2x1024xf32>
    %39 = arith.mulf %37, %38 : vector<2x1024xf32>
    %40 = arith.addf %8, %39 : vector<2x1024xf32>
    %cst_19 = arith.constant 0.000000e+00 : f32
    %41 = vector.broadcast %cst_19 : f32 to vector<1x1024xf32>
    %c1 = arith.constant 1 : index
    %c0_20 = arith.constant 0 : index
    %c0_21 = arith.constant 0 : index
    %42 = vector.load %arg0[%c1, %c0_20, %c0_21] : memref<2x8x256xf32, #tpu.memory_space<vmem>>, vector<1x8x128xf32>
    %43 = vector.shape_cast %42 : vector<1x8x128xf32> to vector<8x128xf32>
    %cst_22 = arith.constant dense<0.000000e+00> : vector<128x8xf32>
    %44 = tpu.matmul %6, %43, %cst_22 {dimension_numbers = #tpu.dot_dimension_numbers<[1], [1], [0], [0], [0, 0, 1, 0], [], []>} : vector<128x128xf32>, vector<8x128xf32>, vector<128x8xf32> -> vector<128x8xf32>
    %cst_23 = arith.constant dense<0.000000e+00> : vector<128x1024xf32>
    %45 = tpu.matmul %44, %0, %cst_23 {dimension_numbers = #tpu.dot_dimension_numbers<[1], [0], [0], [1], [0, 0, 1, 1], [], []>} : vector<128x8xf32>, vector<8x1024xf32>, vector<128x1024xf32> -> vector<128x1024xf32>
    %46 = vector.broadcast %1 : vector<1x1024xf32> to vector<128x1024xf32>
    %47 = arith.addf %45, %46 : vector<128x1024xf32>
    %cst_24 = arith.constant 0.000000e+00 : f32
    %48 = vector.broadcast %cst_24 : f32 to vector<128x1024xf32>
    %49 = arith.maximumf %47, %48 : vector<128x1024xf32>
    %cst_25 = arith.constant dense<0.000000e+00> : vector<1024xf32>
    %50 = vector.multi_reduction <add>, %49, %cst_25 [0] : vector<128x1024xf32> to vector<1024xf32>
    %51 = vector.shape_cast %50 : vector<1024xf32> to vector<1x1024xf32>
    %52 = arith.addf %41, %51 : vector<1x1024xf32>
    %c1_26 = arith.constant 1 : index
    %c0_27 = arith.constant 0 : index
    %c128_28 = arith.constant 128 : index
    %53 = vector.load %arg0[%c1_26, %c0_27, %c128_28] : memref<2x8x256xf32, #tpu.memory_space<vmem>>, vector<1x8x128xf32>
    %54 = vector.shape_cast %53 : vector<1x8x128xf32> to vector<8x128xf32>
    %cst_29 = arith.constant dense<0.000000e+00> : vector<128x8xf32>
    %55 = tpu.matmul %6, %54, %cst_29 {dimension_numbers = #tpu.dot_dimension_numbers<[1], [1], [0], [0], [0, 0, 1, 0], [], []>} : vector<128x128xf32>, vector<8x128xf32>, vector<128x8xf32> -> vector<128x8xf32>
    %cst_30 = arith.constant dense<0.000000e+00> : vector<128x1024xf32>
    %56 = tpu.matmul %55, %0, %cst_30 {dimension_numbers = #tpu.dot_dimension_numbers<[1], [0], [0], [1], [0, 0, 1, 1], [], []>} : vector<128x8xf32>, vector<8x1024xf32>, vector<128x1024xf32> -> vector<128x1024xf32>
    %57 = vector.broadcast %1 : vector<1x1024xf32> to vector<128x1024xf32>
    %58 = arith.addf %56, %57 : vector<128x1024xf32>
    %cst_31 = arith.constant 0.000000e+00 : f32
    %59 = vector.broadcast %cst_31 : f32 to vector<128x1024xf32>
    %60 = arith.maximumf %58, %59 : vector<128x1024xf32>
    %cst_32 = arith.constant dense<0.000000e+00> : vector<1024xf32>
    %61 = vector.multi_reduction <add>, %60, %cst_32 [0] : vector<128x1024xf32> to vector<1024xf32>
    %62 = vector.shape_cast %61 : vector<1024xf32> to vector<1x1024xf32>
    %63 = arith.addf %52, %62 : vector<1x1024xf32>
    %c1_i32 = arith.constant 1 : i32
    %64 = vector.broadcast %c1_i32 : i32 to vector<2x1xi32>
    %65 = arith.cmpi eq, %7, %64 : vector<2x1xi32>
    %cst_33 = arith.constant 1.000000e+00 : f32
    %cst_34 = arith.constant 0.000000e+00 : f32
    %66 = vector.broadcast %cst_33 : f32 to vector<2x1xf32>
    %67 = vector.broadcast %cst_34 : f32 to vector<2x1xf32>
    %68 = arith.select %65, %66, %67 : vector<2x1xi1>, vector<2x1xf32>
    %69 = vector.broadcast %68 : vector<2x1xf32> to vector<2x1024xf32>
    %70 = vector.broadcast %63 : vector<1x1024xf32> to vector<2x1024xf32>
    %71 = arith.mulf %69, %70 : vector<2x1024xf32>
    %72 = arith.addf %40, %71 : vector<2x1024xf32>
    %cst_35 = arith.constant 3.906250e-03 : f32
    %73 = vector.broadcast %cst_35 : f32 to vector<2x1024xf32>
    %74 = arith.mulf %72, %73 : vector<2x1024xf32>
    %75 = vector.extract_strided_slice %74 {offsets = [0, 0], sizes = [2, 512], strides = [1, 1]} : vector<2x1024xf32> to vector<2x512xf32>
    %76 = vector.extract_strided_slice %74 {offsets = [0, 512], sizes = [2, 512], strides = [1, 1]} : vector<2x1024xf32> to vector<2x512xf32>
    %77 = arith.truncf %76 : vector<2x512xf32> to vector<2x512xbf16>
    %c0_36 = arith.constant 0 : index
    %c0_37 = arith.constant 0 : index
    %78 = vector.load %arg3[%c0_36, %c0_37] : memref<512x512xbf16, #tpu.memory_space<vmem>>, vector<512x512xbf16>
    %cst_38 = arith.constant dense<0.000000e+00> : vector<2x512xf32>
    %79 = tpu.matmul %77, %78, %cst_38 {dimension_numbers = #tpu.dot_dimension_numbers<[1], [0], [0], [1], [0, 0, 1, 1], [], []>} : vector<2x512xbf16>, vector<512x512xbf16>, vector<2x512xf32> -> vector<2x512xf32>
    %80 = arith.addf %75, %79 : vector<2x512xf32>
    %81 = tpu.iota {dimensions = array<i32: 1>} : vector<1x512xi32>
    %c480_i32 = arith.constant 480 : i32
    %82 = vector.broadcast %c480_i32 : i32 to vector<1x512xi32>
    %83 = arith.cmpi slt, %81, %82 : vector<1x512xi32>
    %84 = arith.extui %83 : vector<1x512xi1> to vector<1x512xi32>
    %85 = arith.sitofp %84 : vector<1x512xi32> to vector<1x512xf32>
    %86 = vector.broadcast %85 : vector<1x512xf32> to vector<2x512xf32>
    %87 = arith.mulf %80, %86 : vector<2x512xf32>
    %cst_39 = arith.constant dense<0.000000e+00> : vector<2xf32>
    %88 = vector.multi_reduction <add>, %87, %cst_39 [1] : vector<2x512xf32> to vector<2xf32>
    %89 = vector.shape_cast %88 : vector<2xf32> to vector<2x1xf32>
    %cst_40 = arith.constant 0.00208333344 : f32
    %90 = vector.broadcast %cst_40 : f32 to vector<2x1xf32>
    %91 = arith.mulf %89, %90 : vector<2x1xf32>
    %92 = vector.broadcast %91 : vector<2x1xf32> to vector<2x512xf32>
    %93 = arith.subf %80, %92 : vector<2x512xf32>
    %94 = vector.broadcast %85 : vector<1x512xf32> to vector<2x512xf32>
    %95 = arith.mulf %93, %94 : vector<2x512xf32>
    %96 = arith.mulf %95, %95 : vector<2x512xf32>
    %cst_41 = arith.constant dense<0.000000e+00> : vector<2xf32>
    %97 = vector.multi_reduction <add>, %96, %cst_41 [1] : vector<2x512xf32> to vector<2xf32>
    %98 = vector.shape_cast %97 : vector<2xf32> to vector<2x1xf32>
    %cst_42 = arith.constant 0.00208333344 : f32
    %99 = vector.broadcast %cst_42 : f32 to vector<2x1xf32>
    %100 = arith.mulf %98, %99 : vector<2x1xf32>
    %cst_43 = arith.constant 9.99999974E-6 : f32
    %101 = vector.broadcast %cst_43 : f32 to vector<2x1xf32>
    %102 = arith.addf %100, %101 : vector<2x1xf32>
    %103 = math.rsqrt %102 : vector<2x1xf32>
    %104 = vector.broadcast %103 : vector<2x1xf32> to vector<2x512xf32>
    %105 = arith.mulf %95, %104 : vector<2x512xf32>
    %c0_44 = arith.constant 0 : index
    %c0_45 = arith.constant 0 : index
    %106 = vector.load %arg4[%c0_44, %c0_45] : memref<1x512xf32, #tpu.memory_space<vmem>>, vector<1x512xf32>
    %107 = vector.broadcast %106 : vector<1x512xf32> to vector<2x512xf32>
    %108 = arith.mulf %105, %107 : vector<2x512xf32>
    %c0_46 = arith.constant 0 : index
    %c0_47 = arith.constant 0 : index
    %109 = vector.load %arg5[%c0_46, %c0_47] : memref<1x512xf32, #tpu.memory_space<vmem>>, vector<1x512xf32>
    %110 = vector.broadcast %109 : vector<1x512xf32> to vector<2x512xf32>
    %111 = arith.addf %108, %110 : vector<2x512xf32>
    %112 = arith.truncf %111 : vector<2x512xf32> to vector<2x512xbf16>
    %c0_48 = arith.constant 0 : index
    %c0_49 = arith.constant 0 : index
    %113 = vector.load %arg6[%c0_48, %c0_49] : memref<512x128xbf16, #tpu.memory_space<vmem>>, vector<512x128xbf16>
    %cst_50 = arith.constant dense<0.000000e+00> : vector<2x128xf32>
    %114 = tpu.matmul %112, %113, %cst_50 {dimension_numbers = #tpu.dot_dimension_numbers<[1], [0], [0], [1], [0, 0, 1, 1], [], []>} : vector<2x512xbf16>, vector<512x128xbf16>, vector<2x128xf32> -> vector<2x128xf32>
    %c0_51 = arith.constant 0 : index
    %c0_52 = arith.constant 0 : index
    %115 = vector.load %arg7[%c0_51, %c0_52] : memref<1x128xf32, #tpu.memory_space<vmem>>, vector<1x128xf32>
    %116 = vector.broadcast %115 : vector<1x128xf32> to vector<2x128xf32>
    %117 = arith.addf %114, %116 : vector<2x128xf32>
    %118 = arith.negf %117 : vector<2x128xf32>
    %119 = math.exp %118 : vector<2x128xf32>
    %cst_53 = arith.constant 1.000000e+00 : f32
    %120 = vector.broadcast %cst_53 : f32 to vector<2x128xf32>
    %121 = arith.addf %120, %119 : vector<2x128xf32>
    %122 = arith.divf %120, %121 : vector<2x128xf32>
    %c0_54 = arith.constant 0 : index
    %c0_55 = arith.constant 0 : index
    %123 = vector.load %arg8[%c0_54, %c0_55] : memref<2x128xf32, #tpu.memory_space<vmem>>, vector<2x128xf32>
    tpu.vector_store %arg8[%c0_54, %c0_55], %122 {strides = array<i32>} : memref<2x128xf32, #tpu.memory_space<vmem>>, vector<2x128xf32>,
    return
  }
}

</mosaic_0001>

<llo_original>
// kernel: deco_forward.1
$region0: #{deco_forward.1}
  #allocation0 [shape = 'u32[]', space=smem, size = 0x4, offset = 0x4, fixed_abs, tag = 'smem constant byte address 0x4 - core index']
  #allocation1 [shape = 'u32[72,128]{1,0:T(1,128)}', space=vmem, size = 0x9000, scoped, tag = 'internal scratch']
  %s0 = inlined_call_operand.vmem [shape: f32[2,8,256], index: 0, kind: input, shape index: {}]
  %s1 = inlined_call_operand.vmem [shape: f32[8,1024], index: 1, kind: input, shape index: {}]
  %s2 = inlined_call_operand.vmem [shape: f32[1,1024], index: 2, kind: input, shape index: {}]
  %s3 = inlined_call_operand.hbm [shape: bf16[512,512], index: 3, kind: input, shape index: {}]
  %s4 = inlined_call_operand.vmem [shape: f32[1,512], index: 4, kind: input, shape index: {}]
  %s5 = inlined_call_operand.vmem [shape: f32[1,512], index: 5, kind: input, shape index: {}]
  %s6 = inlined_call_operand.hbm [shape: bf16[512,128], index: 6, kind: input, shape index: {}]
  %s7 = inlined_call_operand.vmem [shape: f32[1,128], index: 7, kind: input, shape index: {}]
  %s8 = inlined_call_operand.hbm [shape: f32[2,128], index: 8, kind: output, shape index: {}]
  %s9 = sld [smem:[#allocation0]]
  $region50: #{deco_forward.1} parent=0
    _
  %s11 = ssub.s32 1, %s9
  %s12 = scalar_select 0, %s11, %s9
  $region1: #{deco_forward.1} parent=0
    #allocation2 [shape = 'u8[524288]{0}', space=vmem, size = 0x80000, scoped, tag = 'input window, operand 3, single buffered']
    #allocation3 [shape = 's32[1]{0}', space=sflag, size = 0x4, scoped, tag = 'scoped memory for deco_forward.1']
    #allocation4 [shape = 's32[1]{0}', space=sflag, size = 0x4, scoped, tag = 'scoped memory for deco_forward.1']
    #allocation5 [shape = 'u8[131072]{0}', space=vmem, size = 0x20000, scoped, tag = 'input window, operand 6, single buffered']
    #allocation6 [shape = 's32[1]{0}', space=sflag, size = 0x4, scoped, tag = 'scoped memory for deco_forward.1']
    #allocation7 [shape = 'u8[1024]{0}', space=vmem, size = 0x400, scoped, tag = 'output window, operand 0, single buffered']
    %13 = vsyncpa [#allocation3], 0
    %14 = vsyncpa [#allocation6], 0
    %15 = vsyncpa [#allocation4], 0
    // Predicated region
    $region2: #{deco_forward.1} parent=1 // pred_check
      _
    $region3: #{deco_forward.1} parent=1 // pred_check_branch
      %17 = sbr.rel (0) target = $region5
    $region4: #{deco_forward.1} parent=1 // pred_region
      _
    $region5: #{deco_forward.1} parent=1 // pred_fallthru
      _
    // Predicated region
    $region6: #{deco_forward.1} parent=1 // pred_check
      _
    $region7: #{deco_forward.1} parent=1 // pred_check_branch
      %19 = sbr.rel (0) target = $region9
    $region8: #{deco_forward.1} parent=1 // pred_region
      _
    $region9: #{deco_forward.1} parent=1 // pred_fallthru
      _
    // Predicated region
    $region10: #{deco_forward.1} parent=1 // pred_check
      _
    $region11: #{deco_forward.1} parent=1 // pred_check_branch
      %21 = sbr.rel (0) target = $region13
    $region12: #{deco_forward.1} parent=1 // pred_region
      _
    $region13: #{deco_forward.1} parent=1 // pred_fallthru
      _
    // Predicated region
    $region14: #{deco_forward.1} parent=1 // pred_check
      _
    $region15: #{deco_forward.1} parent=1 // pred_check_branch
      %23 = sbr.rel (0) target = $region17
    $region16: #{deco_forward.1} parent=1 // pred_region
      %25 = vsyncadd [#allocation3], 0
      %s26 = sshll.u32 %s3, 4
      %s27 = int_to_ptr.hbm [resolvable:$true] %s26
      %s28 = sshll.u32 [#allocation2], 4
      %s29 = int_to_ptr.vmem [resolvable:$true] %s28
      %34 = dma.hbm_to_vmem [thread:$0]  %s27, 16384, %s29, [#allocation3], 256, 256, 16
    $region17: #{deco_forward.1} parent=1 // pred_fallthru
      _
    // Predicated region
    $region18: #{deco_forward.1} parent=1 // pred_check
      _
    $region19: #{deco_forward.1} parent=1 // pred_check_branch
      %36 = sbr.rel (0) target = $region21
    $region20: #{deco_forward.1} parent=1 // pred_region
      _
    $region21: #{deco_forward.1} parent=1 // pred_fallthru
      _
    // Predicated region
    $region22: #{deco_forward.1} parent=1 // pred_check
      _
    $region23: #{deco_forward.1} parent=1 // pred_check_branch
      %38 = sbr.rel (0) target = $region25
    $region24: #{deco_forward.1} parent=1 // pred_region
      _
    $region25: #{deco_forward.1} parent=1 // pred_fallthru
      _
    // Predicated region
    $region26: #{deco_forward.1} parent=1 // pred_check
      _
    $region27: #{deco_forward.1} parent=1 // pred_check_branch
      %40 = sbr.rel (0) target = $region29
    $region28: #{deco_forward.1} parent=1 // pred_region
      %42 = vsyncadd [#allocation6], 0
      %s43 = sshll.u32 %s6, 4
      %s44 = int_to_ptr.hbm [resolvable:$true] %s43
      %s45 = sshll.u32 [#allocation5], 4
      %s46 = int_to_ptr.vmem [resolvable:$true] %s45
      %51 = dma.hbm_to_vmem [thread:$0]  %s44, 4096, %s46, [#allocation6], 64, 64, 4
    $region29: #{deco_forward.1} parent=1 // pred_fallthru
      _
    // Predicated region
    $region30: #{deco_forward.1} parent=1 // pred_check
      _
    $region31: #{deco_forward.1} parent=1 // pred_check_branch
      %53 = sbr.rel (0) target = $region33
    $region32: #{deco_forward.1} parent=1 // pred_region
      _
    $region33: #{deco_forward.1} parent=1 // pred_fallthru
      _
    // Predicated region
    $region34: #{deco_forward.1} parent=1 // pred_check
      _
    $region35: #{deco_forward.1} parent=1 // pred_check_branch
      %55 = sbr.rel (0) target = $region37
    $region36: #{deco_forward.1} parent=1 // pred_region
      %57 = dma.done [#allocation3], 16384
    $region37: #{deco_forward.1} parent=1 // pred_fallthru
      _
    // Predicated region
    $region38: #{deco_forward.1} parent=1 // pred_check
      _
    $region39: #{deco_forward.1} parent=1 // pred_check_branch
      %59 = sbr.rel (0) target = $region41
    $region40: #{deco_forward.1} parent=1 // pred_region
      %61 = dma.done [#allocation6], 4096
    $region41: #{deco_forward.1} parent=1 // pred_fallthru
      _
    %v62 = vld [vmem:[%s1] sm:$0xff]
    %v63 = vld [vmem:[%s1 + $0x8] sm:$0xff]
    %v64 = vld [vmem:[%s1 + $0x10] sm:$0xff]
    %v65 = vld [vmem:[%s1 + $0x18] sm:$0xff]
    %v66 = vld [vmem:[%s1 + $0x20] sm:$0xff]
    %v67 = vld [vmem:[%s1 + $0x28] sm:$0xff]
    %v68 = vld [vmem:[%s1 + $0x30] sm:$0xff]
    %v69 = vld [vmem:[%s1 + $0x38] sm:$0xff]
    %v70 = vld [vmem:[%s2] sm:$0xff]
    %v71 = vlaneseq
    %v72 = vshrl.u32 %v71, 7
    %v73 = vadd.s32 %v72, 8
    %v74 = vadd.s32 %v72, 16
    %v75 = vadd.s32 %v72, 24
    %v76 = vadd.s32 %v72, 32
    %v77 = vadd.s32 %v72, 40
    %v78 = vadd.s32 %v72, 48
    %v79 = vadd.s32 %v72, 56
    %v80 = vadd.s32 %v72, 64
    %v81 = vadd.s32 %v72, 72
    %v82 = vadd.s32 %v72, 80
    %v83 = vadd.s32 %v72, 88
    %v84 = vadd.s32 %v72, 96
    %v85 = vadd.s32 %v72, 104
    %v86 = vadd.s32 %v72, 112
    %v87 = vadd.s32 %v72, 120
    %v88 = vlaneseq
    %v89 = vand.u32 %v88, 127
    %vm90 = vcmp.eq.s32.totalorder %v72, %v89
    %vm91 = vcmp.eq.s32.totalorder %v73, %v89
    %vm92 = vcmp.eq.s32.totalorder %v74, %v89
    %vm93 = vcmp.eq.s32.totalorder %v75, %v89
    %vm94 = vcmp.eq.s32.totalorder %v76, %v89
    %vm95 = vcmp.eq.s32.totalorder %v77, %v89
    %vm96 = vcmp.eq.s32.totalorder %v78, %v89
    %vm97 = vcmp.eq.s32.totalorder %v79, %v89
    %vm98 = vcmp.eq.s32.totalorder %v80, %v89
    %vm99 = vcmp.eq.s32.totalorder %v81, %v89
    %vm100 = vcmp.eq.s32.totalorder %v82, %v89
    %vm101 = vcmp.eq.s32.totalorder %v83, %v89
    %vm102 = vcmp.eq.s32.totalorder %v84, %v89
    %vm103 = vcmp.eq.s32.totalorder %v85, %v89
    %vm104 = vcmp.eq.s32.totalorder %v86, %v89
    %vm105 = vcmp.eq.s32.totalorder %v87, %v89
    %v106 = vsel %vm90, 1, 0
    %v107 = vsel %vm91, 1, 0
    %v108 = vsel %vm92, 1, 0
    %v109 = vsel %vm93, 1, 0
    %v110 = vsel %vm94, 1, 0
    %v111 = vsel %vm95, 1, 0
    %v112 = vsel %vm96, 1, 0
    %v113 = vsel %vm97, 1, 0
    %v114 = vsel %vm98, 1, 0
    %v115 = vsel %vm99, 1, 0
    %v116 = vsel %vm100, 1, 0
    %v117 = vsel %vm101, 1, 0
    %v118 = vsel %vm102, 1, 0
    %v119 = vsel %vm103, 1, 0
    %v120 = vsel %vm104, 1, 0
    %v121 = vsel %vm105, 1, 0
    %v122 = vcvt.s32.f32 %v106
    %v123 = vcvt.s32.f32 %v107
    %v124 = vcvt.s32.f32 %v108
    %v125 = vcvt.s32.f32 %v109
    %v126 = vcvt.s32.f32 %v110
    %v127 = vcvt.s32.f32 %v111
    %v128 = vcvt.s32.f32 %v112
    %v129 = vcvt.s32.f32 %v113
    %v130 = vcvt.s32.f32 %v114
    %v131 = vcvt.s32.f32 %v115
    %v132 = vcvt.s32.f32 %v116
    %v133 = vcvt.s32.f32 %v117
    %v134 = vcvt.s32.f32 %v118
    %v135 = vcvt.s32.f32 %v119
    %v136 = vcvt.s32.f32 %v120
    %v137 = vcvt.s32.f32 %v121
    %v138 = vld [vmem:[%s0] sm:$0xff]
    %139 = vmatpush.xpose.msra.mxu0 0.0
    %140 = vmatpush.xpose.msra.mxu0 0.0
    %141 = vmatpush.xpose.msra.mxu0 0.0
    %142 = vmatpush.xpose.msra.mxu0 0.0
    %143 = vmatpush.xpose.msra.mxu0 0.0
    %144 = vmatpush.xpose.msra.mxu0 0.0
    %145 = vmatpush.xpose.msra.mxu0 0.0
    %146 = vmatpush.xpose.msra.mxu0 0.0
    %147 = vmatpush.xpose.msra.mxu0 0.0
    %148 = vmatpush.xpose.msra.mxu0 0.0
    %149 = vmatpush.xpose.msra.mxu0 0.0
    %150 = vmatpush.xpose.msra.mxu0 0.0
    %151 = vmatpush.xpose.msra.mxu0 0.0
    %152 = vmatpush.xpose.msra.mxu0 0.0
    %153 = vmatpush.xpose.msra.mxu0 0.0
    %154 = vmatpush.xpose.msra.mxu0 %v138
    %155 = vmatmul.f32.gmra.mxu0 %v122
    %v156 = vpop.f32.mrf.mxu0
    %v157 = vadd.f32 0.0, %v156
    %158 = vmatmul.f32.gmra.mxu0 %v123
    %v159 = vpop.f32.mrf.mxu0
    %v160 = vadd.f32 0.0, %v159
    %161 = vmatmul.f32.gmra.mxu0 %v124
    %v162 = vpop.f32.mrf.mxu0
    %v163 = vadd.f32 0.0, %v162
    %164 = vmatmul.f32.gmra.mxu0 %v125
    %v165 = vpop.f32.mrf.mxu0
    %v166 = vadd.f32 0.0, %v165
    %167 = vmatmul.f32.gmra.mxu0 %v126
    %v168 = vpop.f32.mrf.mxu0
    %v169 = vadd.f32 0.0, %v168
    %170 = vmatmul.f32.gmra.mxu0 %v127
    %v171 = vpop.f32.mrf.mxu0
    %v172 = vadd.f32 0.0, %v171
    %173 = vmatmul.f32.gmra.mxu0 %v128
    %v174 = vpop.f32.mrf.mxu0
    %v175 = vadd.f32 0.0, %v174
    %176 = vmatmul.f32.gmra.mxu0 %v129
    %v177 = vpop.f32.mrf.mxu0
    %v178 = vadd.f32 0.0, %v177
    %179 = vmatmul.f32.gmra.mxu0 %v130
    %v180 = vpop.f32.mrf.mxu0
    %v181 = vadd.f32 0.0, %v180
    %182 = vmatmul.f32.gmra.mxu0 %v131
    %v183 = vpop.f32.mrf.mxu0
    %v184 = vadd.f32 0.0, %v183
    %185 = vmatmul.f32.gmra.mxu0 %v132
    %v186 = vpop.f32.mrf.mxu0
    %v187 = vadd.f32 0.0, %v186
    %188 = vmatmul.f32.gmra.mxu0 %v133
    %v189 = vpop.f32.mrf.mxu0
    %v190 = vadd.f32 0.0, %v189
    %191 = vmatmul.f32.gmra.mxu0 %v134
    %v192 = vpop.f32.mrf.mxu0
    %v193 = vadd.f32 0.0, %v192
    %194 = vmatmul.f32.gmra.mxu0 %v135
    %v195 = vpop.f32.mrf.mxu0
    %v196 = vadd.f32 0.0, %v195
    %197 = vmatmul.f32.gmra.mxu0 %v136
    %v198 = vpop.f32.mrf.mxu0
    %v199 = vadd.f32 0.0, %v198
    %200 = vmatmul.f32.gmra.mxu0 %v137
    %v201 = vpop.f32.mrf.mxu0
    %v202 = vadd.f32 0.0, %v201
    %203 = vdwg.mxu0
    %v205 = vperm.slane %v70, 0
    %v206 = vperm.slane %v70, 1
    %v207 = vperm.slane %v70, 2
    %v208 = vperm.slane %v70, 3
    %v209 = vperm.slane %v70, 4
    %v210 = vperm.slane %v70, 5
    %v211 = vperm.slane %v70, 6
    %v212 = vperm.slane %v70, 7
    %vm221 = vcmask 64512
    %v223 = vsel %vm221, %v157, 0
    %v226 = vsel %vm221, %v160, 0
    %v229 = vsel %vm221, %v163, 0
    %v232 = vsel %vm221, %v166, 0
    %v235 = vsel %vm221, %v169, 0
    %v238 = vsel %vm221, %v172, 0
    %v241 = vsel %vm221, %v175, 0
    %v244 = vsel %vm221, %v178, 0
    %v247 = vsel %vm221, %v181, 0
    %v250 = vsel %vm221, %v184, 0
    %v253 = vsel %vm221, %v187, 0
    %v256 = vsel %vm221, %v190, 0
    %v259 = vsel %vm221, %v193, 0
    %v262 = vsel %vm221, %v196, 0
    %v265 = vsel %vm221, %v199, 0
    %v268 = vsel %vm221, %v202, 0
    %270 = vmatpush.msra.mxu0 0.0
    %271 = vmatpush.msra.mxu0 0.0
    %272 = vmatpush.msra.mxu0 0.0
    %273 = vmatpush.msra.mxu0 0.0
    %274 = vmatpush.msra.mxu0 0.0
    %275 = vmatpush.msra.mxu0 0.0
    %276 = vmatpush.msra.mxu0 0.0
    %277 = vmatpush.msra.mxu0 0.0
    %278 = vmatpush.msra.mxu0 0.0
    %279 = vmatpush.msra.mxu0 0.0
    %280 = vmatpush.msra.mxu0 0.0
    %281 = vmatpush.msra.mxu0 0.0
    %282 = vmatpush.msra.mxu0 0.0
    %283 = vmatpush.msra.mxu0 0.0
    %284 = vmatpush.msra.mxu0 0.0
    %285 = vmatpush.msra.mxu0 %v62
    %286 = vmatmul.f32.gmra.mxu0 %v223
    %v287 = vpop.f32.mrf.mxu0
    %v288 = vadd.f32 %v205, %v287
    %289 = vmatmul.f32.gmra.mxu0 %v226
    %v290 = vpop.f32.mrf.mxu0
    %v291 = vadd.f32 %v205, %v290
    %292 = vmatmul.f32.gmra.mxu0 %v229
    %v293 = vpop.f32.mrf.mxu0
    %v294 = vadd.f32 %v205, %v293
    %295 = vmatmul.f32.gmra.mxu0 %v232
    %v296 = vpop.f32.mrf.mxu0
    %v297 = vadd.f32 %v205, %v296
    %298 = vmatmul.f32.gmra.mxu0 %v235
    %v299 = vpop.f32.mrf.mxu0
    %v300 = vadd.f32 %v205, %v299
    %301 = vmatmul.f32.gmra.mxu0 %v238
    %v302 = vpop.f32.mrf.mxu0
    %v303 = vadd.f32 %v205, %v302
    %304 = vmatmul.f32.gmra.mxu0 %v241
    %v305 = vpop.f32.mrf.mxu0
    %v306 = vadd.f32 %v205, %v305
    %307 = vmatmul.f32.gmra.mxu0 %v244
    %v308 = vpop.f32.mrf.mxu0
    %v309 = vadd.f32 %v205, %v308
    %310 = vmatmul.f32.gmra.mxu0 %v247
    %v311 = vpop.f32.mrf.mxu0
    %v312 = vadd.f32 %v205, %v311
    %313 = vmatmul.f32.gmra.mxu0 %v250
    %v314 = vpop.f32.mrf.mxu0
    %v315 = vadd.f32 %v205, %v314
    %316 = vmatmul.f32.gmra.mxu0 %v253
    %v317 = vpop.f32.mrf.mxu0
    %v318 = vadd.f32 %v205, %v317
    %319 = vmatmul.f32.gmra.mxu0 %v256
    %v320 = vpop.f32.mrf.mxu0
    %v321 = vadd.f32 %v205, %v320
    %322 = vmatmul.f32.gmra.mxu0 %v259
    %v323 = vpop.f32.mrf.mxu0
    %v324 = vadd.f32 %v205, %v323
    %325 = vmatmul.f32.gmra.mxu0 %v262
    %v326 = vpop.f32.mrf.mxu0
    %v327 = vadd.f32 %v205, %v326
    %328 = vmatmul.f32.gmra.mxu0 %v265
    %v329 = vpop.f32.mrf.mxu0
    %v330 = vadd.f32 %v205, %v329
    %331 = vmatmul.f32.gmra.mxu0 %v268
    %v332 = vpop.f32.mrf.mxu0
    %v333 = vadd.f32 %v205, %v332
    %334 = vdwg.mxu0
    %335 = vmatpush.msra.mxu0 0.0
    %336 = vmatpush.msra.mxu0 0.0
    %337 = vmatpush.msra.mxu0 0.0
    %338 = vmatpush.msra.mxu0 0.0
    %339 = vmatpush.msra.mxu0 0.0
    %340 = vmatpush.msra.mxu0 0.0
    %341 = vmatpush.msra.mxu0 0.0
    %342 = vmatpush.msra.mxu0 0.0
    %343 = vmatpush.msra.mxu0 0.0
    %344 = vmatpush.msra.mxu0 0.0
    %345 = vmatpush.msra.mxu0 0.0
    %346 = vmatpush.msra.mxu0 0.0
    %347 = vmatpush.msra.mxu0 0.0
    %348 = vmatpush.msra.mxu0 0.0
    %349 = vmatpush.msra.mxu0 0.0
    %350 = vmatpush.msra.mxu0 %v63
    %351 = vmatmul.f32.gmra.mxu0 %v223
    %v352 = vpop.f32.mrf.mxu0
    %v353 = vadd.f32 %v206, %v352
    %354 = vmatmul.f32.gmra.mxu0 %v226
    %v355 = vpop.f32.mrf.mxu0
    %v356 = vadd.f32 %v206, %v355
    %357 = vmatmul.f32.gmra.mxu0 %v229
    %v358 = vpop.f32.mrf.mxu0
    %v359 = vadd.f32 %v206, %v358
    %360 = vmatmul.f32.gmra.mxu0 %v232
    %v361 = vpop.f32.mrf.mxu0
    %v362 = vadd.f32 %v206, %v361
    %363 = vmatmul.f32.gmra.mxu0 %v235
    %v364 = vpop.f32.mrf.mxu0
    %v365 = vadd.f32 %v206, %v364
    %366 = vmatmul.f32.gmra.mxu0 %v238
    %v367 = vpop.f32.mrf.mxu0
    %v368 = vadd.f32 %v206, %v367
    %369 = vmatmul.f32.gmra.mxu0 %v241
    %v370 = vpop.f32.mrf.mxu0
    %v371 = vadd.f32 %v206, %v370
    %372 = vmatmul.f32.gmra.mxu0 %v244
    %v373 = vpop.f32.mrf.mxu0
    %v374 = vadd.f32 %v206, %v373
    %375 = vmatmul.f32.gmra.mxu0 %v247
    %v376 = vpop.f32.mrf.mxu0
    %v377 = vadd.f32 %v206, %v376
    %378 = vmatmul.f32.gmra.mxu0 %v250
    %v379 = vpop.f32.mrf.mxu0
    %v380 = vadd.f32 %v206, %v379
    %381 = vmatmul.f32.gmra.mxu0 %v253
    %v382 = vpop.f32.mrf.mxu0
    %v383 = vadd.f32 %v206, %v382
    %384 = vmatmul.f32.gmra.mxu0 %v256
    %v385 = vpop.f32.mrf.mxu0
    %v386 = vadd.f32 %v206, %v385
    %387 = vmatmul.f32.gmra.mxu0 %v259
    %v388 = vpop.f32.mrf.mxu0
    %v389 = vadd.f32 %v206, %v388
    %390 = vmatmul.f32.gmra.mxu0 %v262
    %v391 = vpop.f32.mrf.mxu0
    %v392 = vadd.f32 %v206, %v391
    %393 = vmatmul.f32.gmra.mxu0 %v265
    %v394 = vpop.f32.mrf.mxu0
    %v395 = vadd.f32 %v206, %v394
    %396 = vmatmul.f32.gmra.mxu0 %v268
    %v397 = vpop.f32.mrf.mxu0
    %v398 = vadd.f32 %v206, %v397
    %399 = vdwg.mxu0
    %400 = vmatpush.msra.mxu0 0.0
    %401 = vmatpush.msra.mxu0 0.0
    %402 = vmatpush.msra.mxu0 0.0
    %403 = vmatpush.msra.mxu0 0.0
    %404 = vmatpush.msra.mxu0 0.0
    %405 = vmatpush.msra.mxu0 0.0
    %406 = vmatpush.msra.mxu0 0.0
    %407 = vmatpush.msra.mxu0 0.0
    %408 = vmatpush.msra.mxu0 0.0
    %409 = vmatpush.msra.mxu0 0.0
    %410 = vmatpush.msra.mxu0 0.0
    %411 = vmatpush.msra.mxu0 0.0
    %412 = vmatpush.msra.mxu0 0.0
    %413 = vmatpush.msra.mxu0 0.0
    %414 = vmatpush.msra.mxu0 0.0
    %415 = vmatpush.msra.mxu0 %v64
    %416 = vmatmul.f32.gmra.mxu0 %v223
    %v417 = vpop.f32.mrf.mxu0
    %v418 = vadd.f32 %v207, %v417
    %419 = vmatmul.f32.gmra.mxu0 %v226
    %v420 = vpop.f32.mrf.mxu0
    %v421 = vadd.f32 %v207, %v420
    %422 = vmatmul.f32.gmra.mxu0 %v229
    %v423 = vpop.f32.mrf.mxu0
    %v424 = vadd.f32 %v207, %v423
    %425 = vmatmul.f32.gmra.mxu0 %v232
    %v426 = vpop.f32.mrf.mxu0
    %v427 = vadd.f32 %v207, %v426
    %428 = vmatmul.f32.gmra.mxu0 %v235
    %v429 = vpop.f32.mrf.mxu0
    %v430 = vadd.f32 %v207, %v429
    %431 = vmatmul.f32.gmra.mxu0 %v238
    %v432 = vpop.f32.mrf.mxu0
    %v433 = vadd.f32 %v207, %v432
    %434 = vmatmul.f32.gmra.mxu0 %v241
    %v435 = vpop.f32.mrf.mxu0
    %v436 = vadd.f32 %v207, %v435
    %437 = vmatmul.f32.gmra.mxu0 %v244
    %v438 = vpop.f32.mrf.mxu0
    %v439 = vadd.f32 %v207, %v438
    %440 = vmatmul.f32.gmra.mxu0 %v247
    %v441 = vpop.f32.mrf.mxu0
    %v442 = vadd.f32 %v207, %v441
    %443 = vmatmul.f32.gmra.mxu0 %v250
    %v444 = vpop.f32.mrf.mxu0
    %v445 = vadd.f32 %v207, %v444
    %446 = vmatmul.f32.gmra.mxu0 %v253
    %v447 = vpop.f32.mrf.mxu0
    %v448 = vadd.f32 %v207, %v447
    %449 = vmatmul.f32.gmra.mxu0 %v256
    %v450 = vpop.f32.mrf.mxu0
    %v451 = vadd.f32 %v207, %v450
    %452 = vmatmul.f32.gmra.mxu0 %v259
    %v453 = vpop.f32.mrf.mxu0
    %v454 = vadd.f32 %v207, %v453
    %455 = vmatmul.f32.gmra.mxu0 %v262
    %v456 = vpop.f32.mrf.mxu0
    %v457 = vadd.f32 %v207, %v456
    %458 = vmatmul.f32.gmra.mxu0 %v265
    %v459 = vpop.f32.mrf.mxu0
    %v460 = vadd.f32 %v207, %v459
    %461 = vmatmul.f32.gmra.mxu0 %v268
    %v462 = vpop.f32.mrf.mxu0
    %v463 = vadd.f32 %v207, %v462
    %464 = vdwg.mxu0
    %465 = vmatpush.msra.mxu0 0.0
    %466 = vmatpush.msra.mxu0 0.0
    %467 = vmatpush.msra.mxu0 0.0
    %468 = vmatpush.msra.mxu0 0.0
    %469 = vmatpush.msra.mxu0 0.0
    %470 = vmatpush.msra.mxu0 0.0
    %471 = vmatpush.msra.mxu0 0.0
    %472 = vmatpush.msra.mxu0 0.0
    %473 = vmatpush.msra.mxu0 0.0
    %474 = vmatpush.msra.mxu0 0.0
    %475 = vmatpush.msra.mxu0 0.0
    %476 = vmatpush.msra.mxu0 0.0
    %477 = vmatpush.msra.mxu0 0.0
    %478 = vmatpush.msra.mxu0 0.0
    %479 = vmatpush.msra.mxu0 0.0
    %480 = vmatpush.msra.mxu0 %v65
    %481 = vmatmul.f32.gmra.mxu0 %v223
    %v482 = vpop.f32.mrf.mxu0
    %v483 = vadd.f32 %v208, %v482
    %484 = vmatmul.f32.gmra.mxu0 %v226
    %v485 = vpop.f32.mrf.mxu0
    %v486 = vadd.f32 %v208, %v485
    %487 = vmatmul.f32.gmra.mxu0 %v229
    %v488 = vpop.f32.mrf.mxu0
    %v489 = vadd.f32 %v208, %v488
    %490 = vmatmul.f32.gmra.mxu0 %v232
    %v491 = vpop.f32.mrf.mxu0
    %v492 = vadd.f32 %v208, %v491
    %493 = vmatmul.f32.gmra.mxu0 %v235
    %v494 = vpop.f32.mrf.mxu0
    %v495 = vadd.f32 %v208, %v494
    %496 = vmatmul.f32.gmra.mxu0 %v238
    %v497 = vpop.f32.mrf.mxu0
    %v498 = vadd.f32 %v208, %v497
    %499 = vmatmul.f32.gmra.mxu0 %v241
    %v500 = vpop.f32.mrf.mxu0
    %v501 = vadd.f32 %v208, %v500
    %502 = vmatmul.f32.gmra.mxu0 %v244
    %v503 = vpop.f32.mrf.mxu0
    %v504 = vadd.f32 %v208, %v503
    %505 = vmatmul.f32.gmra.mxu0 %v247
    %v506 = vpop.f32.mrf.mxu0
    %v507 = vadd.f32 %v208, %v506
    %508 = vmatmul.f32.gmra.mxu0 %v250
    %v509 = vpop.f32.mrf.mxu0
    %v510 = vadd.f32 %v208, %v509
    %511 = vmatmul.f32.gmra.mxu0 %v253
    %v512 = vpop.f32.mrf.mxu0
    %v513 = vadd.f32 %v208, %v512
    %514 = vmatmul.f32.gmra.mxu0 %v256
    %v515 = vpop.f32.mrf.mxu0
    %v516 = vadd.f32 %v208, %v515
    %517 = vmatmul.f32.gmra.mxu0 %v259
    %v518 = vpop.f32.mrf.mxu0
    %v519 = vadd.f32 %v208, %v518
    %520 = vmatmul.f32.gmra.mxu0 %v262
    %v521 = vpop.f32.mrf.mxu0
    %v522 = vadd.f32 %v208, %v521
    %523 = vmatmul.f32.gmra.mxu0 %v265
    %v524 = vpop.f32.mrf.mxu0
    %v525 = vadd.f32 %v208, %v524
    %526 = vmatmul.f32.gmra.mxu0 %v268
    %v527 = vpop.f32.mrf.mxu0
    %v528 = vadd.f32 %v208, %v527
    %529 = vdwg.mxu0
    %530 = vmatpush.msra.mxu0 0.0
    %531 = vmatpush.msra.mxu0 0.0
    %532 = vmatpush.msra.mxu0 0.0
    %533 = vmatpush.msra.mxu0 0.0
    %534 = vmatpush.msra.mxu0 0.0
    %535 = vmatpush.msra.mxu0 0.0
    %536 = vmatpush.msra.mxu0 0.0
    %537 = vmatpush.msra.mxu0 0.0
    %538 = vmatpush.msra.mxu0 0.0
    %539 = vmatpush.msra.mxu0 0.0
    %540 = vmatpush.msra.mxu0 0.0
    %541 = vmatpush.msra.mxu0 0.0
    %542 = vmatpush.msra.mxu0 0.0
    %543 = vmatpush.msra.mxu0 0.0
    %544 = vmatpush.msra.mxu0 0.0
    %545 = vmatpush.msra.mxu0 %v66
    %546 = vmatmul.f32.gmra.mxu0 %v223
    %v547 = vpop.f32.mrf.mxu0
    %v548 = vadd.f32 %v209, %v547
    %549 = vmatmul.f32.gmra.mxu0 %v226
    %v550 = vpop.f32.mrf.mxu0
    %v551 = vadd.f32 %v209, %v550
    %552 = vmatmul.f32.gmra.mxu0 %v229
    %v553 = vpop.f32.mrf.mxu0
    %v554 = vadd.f32 %v209, %v553
    %555 = vmatmul.f32.gmra.mxu0 %v232
    %v556 = vpop.f32.mrf.mxu0
    %v557 = vadd.f32 %v209, %v556
    %558 = vmatmul.f32.gmra.mxu0 %v235
    %v559 = vpop.f32.mrf.mxu0
    %v560 = vadd.f32 %v209, %v559
    %561 = vmatmul.f32.gmra.mxu0 %v238
    %v562 = vpop.f32.mrf.mxu0
    %v563 = vadd.f32 %v209, %v562
    %564 = vmatmul.f32.gmra.mxu0 %v241
    %v565 = vpop.f32.mrf.mxu0
    %v566 = vadd.f32 %v209, %v565
    %567 = vmatmul.f32.gmra.mxu0 %v244
    %v568 = vpop.f32.mrf.mxu0
    %v569 = vadd.f32 %v209, %v568
    %570 = vmatmul.f32.gmra.mxu0 %v247
    %v571 = vpop.f32.mrf.mxu0
    %v572 = vadd.f32 %v209, %v571
    %573 = vmatmul.f32.gmra.mxu0 %v250
    %v574 = vpop.f32.mrf.mxu0
    %v575 = vadd.f32 %v209, %v574
    %576 = vmatmul.f32.gmra.mxu0 %v253
    %v577 = vpop.f32.mrf.mxu0
    %v578 = vadd.f32 %v209, %v577
    %579 = vmatmul.f32.gmra.mxu0 %v256
    %v580 = vpop.f32.mrf.mxu0
    %v581 = vadd.f32 %v209, %v580
    %582 = vmatmul.f32.gmra.mxu0 %v259
    %v583 = vpop.f32.mrf.mxu0
    %v584 = vadd.f32 %v209, %v583
    %585 = vmatmul.f32.gmra.mxu0 %v262
    %v586 = vpop.f32.mrf.mxu0
    %v587 = vadd.f32 %v209, %v586
    %588 = vmatmul.f32.gmra.mxu0 %v265
    %v589 = vpop.f32.mrf.mxu0
    %v590 = vadd.f32 %v209, %v589
    %591 = vmatmul.f32.gmra.mxu0 %v268
    %v592 = vpop.f32.mrf.mxu0
    %v593 = vadd.f32 %v209, %v592
    %594 = vdwg.mxu0
    %595 = vmatpush.msra.mxu0 0.0
    %596 = vmatpush.msra.mxu0 0.0
    %597 = vmatpush.msra.mxu0 0.0
    %598 = vmatpush.msra.mxu0 0.0
    %599 = vmatpush.msra.mxu0 0.0
    %600 = vmatpush.msra.mxu0 0.0
    %601 = vmatpush.msra.mxu0 0.0
    %602 = vmatpush.msra.mxu0 0.0
    %603 = vmatpush.msra.mxu0 0.0
    %604 = vmatpush.msra.mxu0 0.0
    %605 = vmatpush.msra.mxu0 0.0
    %606 = vmatpush.msra.mxu0 0.0
    %607 = vmatpush.msra.mxu0 0.0
    %608 = vmatpush.msra.mxu0 0.0
    %609 = vmatpush.msra.mxu0 0.0
    %610 = vmatpush.msra.mxu0 %v67
    %611 = vmatmul.f32.gmra.mxu0 %v223
    %v612 = vpop.f32.mrf.mxu0
    %v613 = vadd.f32 %v210, %v612
    %614 = vmatmul.f32.gmra.mxu0 %v226
    %v615 = vpop.f32.mrf.mxu0
    %v616 = vadd.f32 %v210, %v615
    %617 = vmatmul.f32.gmra.mxu0 %v229
    %v618 = vpop.f32.mrf.mxu0
    %v619 = vadd.f32 %v210, %v618
    %620 = vmatmul.f32.gmra.mxu0 %v232
    %v621 = vpop.f32.mrf.mxu0
    %v622 = vadd.f32 %v210, %v621
    %623 = vmatmul.f32.gmra.mxu0 %v235
    %v624 = vpop.f32.mrf.mxu0
    %v625 = vadd.f32 %v210, %v624
    %626 = vmatmul.f32.gmra.mxu0 %v238
    %v627 = vpop.f32.mrf.mxu0
    %v628 = vadd.f32 %v210, %v627
    %629 = vmatmul.f32.gmra.mxu0 %v241
    %v630 = vpop.f32.mrf.mxu0
    %v631 = vadd.f32 %v210, %v630
    %632 = vmatmul.f32.gmra.mxu0 %v244
    %v633 = vpop.f32.mrf.mxu0
    %v634 = vadd.f32 %v210, %v633
    %635 = vmatmul.f32.gmra.mxu0 %v247
    %v636 = vpop.f32.mrf.mxu0
    %v637 = vadd.f32 %v210, %v636
    %638 = vmatmul.f32.gmra.mxu0 %v250
    %v639 = vpop.f32.mrf.mxu0
    %v640 = vadd.f32 %v210, %v639
    %641 = vmatmul.f32.gmra.mxu0 %v253
    %v642 = vpop.f32.mrf.mxu0
    %v643 = vadd.f32 %v210, %v642
    %644 = vmatmul.f32.gmra.mxu0 %v256
    %v645 = vpop.f32.mrf.mxu0
    %v646 = vadd.f32 %v210, %v645
    %647 = vmatmul.f32.gmra.mxu0 %v259
    %v648 = vpop.f32.mrf.mxu0
    %v649 = vadd.f32 %v210, %v648
    %650 = vmatmul.f32.gmra.mxu0 %v262
    %v651 = vpop.f32.mrf.mxu0
    %v652 = vadd.f32 %v210, %v651
    %653 = vmatmul.f32.gmra.mxu0 %v265
    %v654 = vpop.f32.mrf.mxu0
    %v655 = vadd.f32 %v210, %v654
    %656 = vmatmul.f32.gmra.mxu0 %v268
    %v657 = vpop.f32.mrf.mxu0
    %v658 = vadd.f32 %v210, %v657
    %659 = vdwg.mxu0
    %660 = vmatpush.msra.mxu0 0.0
    %661 = vmatpush.msra.mxu0 0.0
    %662 = vmatpush.msra.mxu0 0.0
    %663 = vmatpush.msra.mxu0 0.0
    %664 = vmatpush.msra.mxu0 0.0
    %665 = vmatpush.msra.mxu0 0.0
    %666 = vmatpush.msra.mxu0 0.0
    %667 = vmatpush.msra.mxu0 0.0
    %668 = vmatpush.msra.mxu0 0.0
    %669 = vmatpush.msra.mxu0 0.0
    %670 = vmatpush.msra.mxu0 0.0
    %671 = vmatpush.msra.mxu0 0.0
    %672 = vmatpush.msra.mxu0 0.0
    %673 = vmatpush.msra.mxu0 0.0
    %674 = vmatpush.msra.mxu0 0.0
    %675 = vmatpush.msra.mxu0 %v68
    %676 = vmatmul.f32.gmra.mxu0 %v223
    %v677 = vpop.f32.mrf.mxu0
    %v678 = vadd.f32 %v211, %v677
    %679 = vmatmul.f32.gmra.mxu0 %v226
    %v680 = vpop.f32.mrf.mxu0
    %v681 = vadd.f32 %v211, %v680
    %682 = vmatmul.f32.gmra.mxu0 %v229
    %v683 = vpop.f32.mrf.mxu0
    %v684 = vadd.f32 %v211, %v683
    %685 = vmatmul.f32.gmra.mxu0 %v232
    %v686 = vpop.f32.mrf.mxu0
    %v687 = vadd.f32 %v211, %v686
    %688 = vmatmul.f32.gmra.mxu0 %v235
    %v689 = vpop.f32.mrf.mxu0
    %v690 = vadd.f32 %v211, %v689
    %691 = vmatmul.f32.gmra.mxu0 %v238
    %v692 = vpop.f32.mrf.mxu0
    %v693 = vadd.f32 %v211, %v692
    %694 = vmatmul.f32.gmra.mxu0 %v241
    %v695 = vpop.f32.mrf.mxu0
    %v696 = vadd.f32 %v211, %v695
    %697 = vmatmul.f32.gmra.mxu0 %v244
    %v698 = vpop.f32.mrf.mxu0
    %v699 = vadd.f32 %v211, %v698
    %700 = vmatmul.f32.gmra.mxu0 %v247
    %v701 = vpop.f32.mrf.mxu0
    %v702 = vadd.f32 %v211, %v701
    %703 = vmatmul.f32.gmra.mxu0 %v250
    %v704 = vpop.f32.mrf.mxu0
    %v705 = vadd.f32 %v211, %v704
    %706 = vmatmul.f32.gmra.mxu0 %v253
    %v707 = vpop.f32.mrf.mxu0
    %v708 = vadd.f32 %v211, %v707
    %709 = vmatmul.f32.gmra.mxu0 %v256
    %v710 = vpop.f32.mrf.mxu0
    %v711 = vadd.f32 %v211, %v710
    %712 = vmatmul.f32.gmra.mxu0 %v259
    %v713 = vpop.f32.mrf.mxu0
    %v714 = vadd.f32 %v211, %v713
    %715 = vmatmul.f32.gmra.mxu0 %v262
    %v716 = vpop.f32.mrf.mxu0
    %v717 = vadd.f32 %v211, %v716
    %718 = vmatmul.f32.gmra.mxu0 %v265
    %v719 = vpop.f32.mrf.mxu0
    %v720 = vadd.f32 %v211, %v719
    %721 = vmatmul.f32.gmra.mxu0 %v268
    %v722 = vpop.f32.mrf.mxu0
    %v723 = vadd.f32 %v211, %v722
    %724 = vdwg.mxu0
    %725 = vmatpush.msra.mxu0 0.0
    %726 = vmatpush.msra.mxu0 0.0
    %727 = vmatpush.msra.mxu0 0.0
    %728 = vmatpush.msra.mxu0 0.0
    %729 = vmatpush.msra.mxu0 0.0
    %730 = vmatpush.msra.mxu0 0.0
    %731 = vmatpush.msra.mxu0 0.0
    %732 = vmatpush.msra.mxu0 0.0
    %733 = vmatpush.msra.mxu0 0.0
    %734 = vmatpush.msra.mxu0 0.0
    %735 = vmatpush.msra.mxu0 0.0
    %736 = vmatpush.msra.mxu0 0.0
    %737 = vmatpush.msra.mxu0 0.0
    %738 = vmatpush.msra.mxu0 0.0
    %739 = vmatpush.msra.mxu0 0.0
    %740 = vmatpush.msra.mxu0 %v69
    %741 = vmatmul.f32.gmra.mxu0 %v223
    %v742 = vpop.f32.mrf.mxu0
    %v743 = vadd.f32 %v212, %v742
    %744 = vmatmul.f32.gmra.mxu0 %v226
    %v745 = vpop.f32.mrf.mxu0
    %v746 = vadd.f32 %v212, %v745
    %747 = vmatmul.f32.gmra.mxu0 %v229
    %v748 = vpop.f32.mrf.mxu0
    %v749 = vadd.f32 %v212, %v748
    %750 = vmatmul.f32.gmra.mxu0 %v232
    %v751 = vpop.f32.mrf.mxu0
    %v752 = vadd.f32 %v212, %v751
    %753 = vmatmul.f32.gmra.mxu0 %v235
    %v754 = vpop.f32.mrf.mxu0
    %v755 = vadd.f32 %v212, %v754
    %756 = vmatmul.f32.gmra.mxu0 %v238
    %v757 = vpop.f32.mrf.mxu0
    %v758 = vadd.f32 %v212, %v757
    %759 = vmatmul.f32.gmra.mxu0 %v241
    %v760 = vpop.f32.mrf.mxu0
    %v761 = vadd.f32 %v212, %v760
    %762 = vmatmul.f32.gmra.mxu0 %v244
    %v763 = vpop.f32.mrf.mxu0
    %v764 = vadd.f32 %v212, %v763
    %765 = vmatmul.f32.gmra.mxu0 %v247
    %v766 = vpop.f32.mrf.mxu0
    %v767 = vadd.f32 %v212, %v766
    %768 = vmatmul.f32.gmra.mxu0 %v250
    %v769 = vpop.f32.mrf.mxu0
    %v770 = vadd.f32 %v212, %v769
    %771 = vmatmul.f32.gmra.mxu0 %v253
    %v772 = vpop.f32.mrf.mxu0
    %v773 = vadd.f32 %v212, %v772
    %774 = vmatmul.f32.gmra.mxu0 %v256
    %v775 = vpop.f32.mrf.mxu0
    %v776 = vadd.f32 %v212, %v775
    %777 = vmatmul.f32.gmra.mxu0 %v259
    %v778 = vpop.f32.mrf.mxu0
    %v779 = vadd.f32 %v212, %v778
    %780 = vmatmul.f32.gmra.mxu0 %v262
    %v781 = vpop.f32.mrf.mxu0
    %v782 = vadd.f32 %v212, %v781
    %783 = vmatmul.f32.gmra.mxu0 %v265
    %v784 = vpop.f32.mrf.mxu0
    %v785 = vadd.f32 %v212, %v784
    %786 = vmatmul.f32.gmra.mxu0 %v268
    %v787 = vpop.f32.mrf.mxu0
    %v788 = vadd.f32 %v212, %v787
    %789 = vdwg.mxu0
    %v790 = vmax.f32 %v288, 0.0
    %v791 = vmax.f32 %v353, 0.0
    %v792 = vmax.f32 %v418, 0.0
    %v793 = vmax.f32 %v483, 0.0
    %v794 = vmax.f32 %v548, 0.0
    %v795 = vmax.f32 %v613, 0.0
    %v796 = vmax.f32 %v678, 0.0
    %v797 = vmax.f32 %v743, 0.0
    %v798 = vmax.f32 %v291, 0.0
    %v799 = vmax.f32 %v356, 0.0
    %v800 = vmax.f32 %v421, 0.0
    %v801 = vmax.f32 %v486, 0.0
    %v802 = vmax.f32 %v551, 0.0
    %v803 = vmax.f32 %v616, 0.0
    %v804 = vmax.f32 %v681, 0.0
    %v805 = vmax.f32 %v746, 0.0
    %v806 = vmax.f32 %v294, 0.0
    %v807 = vmax.f32 %v359, 0.0
    %v808 = vmax.f32 %v424, 0.0
    %v809 = vmax.f32 %v489, 0.0
    %v810 = vmax.f32 %v554, 0.0
    %v811 = vmax.f32 %v619, 0.0
    %v812 = vmax.f32 %v684, 0.0
    %v813 = vmax.f32 %v749, 0.0
    %v814 = vmax.f32 %v297, 0.0
    %v815 = vmax.f32 %v362, 0.0
    %v816 = vmax.f32 %v427, 0.0
    %v817 = vmax.f32 %v492, 0.0
    %v818 = vmax.f32 %v557, 0.0
    %v819 = vmax.f32 %v622, 0.0
    %v820 = vmax.f32 %v687, 0.0
    %v821 = vmax.f32 %v752, 0.0
    %v822 = vmax.f32 %v300, 0.0
    %v823 = vmax.f32 %v365, 0.0
    %v824 = vmax.f32 %v430, 0.0
    %v825 = vmax.f32 %v495, 0.0
    %v826 = vmax.f32 %v560, 0.0
    %v827 = vmax.f32 %v625, 0.0
    %v828 = vmax.f32 %v690, 0.0
    %v829 = vmax.f32 %v755, 0.0
    %v830 = vmax.f32 %v303, 0.0
    %v831 = vmax.f32 %v368, 0.0
    %v832 = vmax.f32 %v433, 0.0
    %v833 = vmax.f32 %v498, 0.0
    %v834 = vmax.f32 %v563, 0.0
    %v835 = vmax.f32 %v628, 0.0
    %v836 = vmax.f32 %v693, 0.0
    %v837 = vmax.f32 %v758, 0.0
    %v838 = vmax.f32 %v306, 0.0
    %v839 = vmax.f32 %v371, 0.0
    %v840 = vmax.f32 %v436, 0.0
    %v841 = vmax.f32 %v501, 0.0
    %v842 = vmax.f32 %v566, 0.0
    %v843 = vmax.f32 %v631, 0.0
    %v844 = vmax.f32 %v696, 0.0
    %v845 = vmax.f32 %v761, 0.0
    %v846 = vmax.f32 %v309, 0.0
    %v847 = vmax.f32 %v374, 0.0
    %v848 = vmax.f32 %v439, 0.0
    %v849 = vmax.f32 %v504, 0.0
    %v850 = vmax.f32 %v569, 0.0
    %v851 = vmax.f32 %v634, 0.0
    %v852 = vmax.f32 %v699, 0.0
    %v853 = vmax.f32 %v764, 0.0
    %v854 = vmax.f32 %v312, 0.0
    %v855 = vmax.f32 %v377, 0.0
    %v856 = vmax.f32 %v442, 0.0
    %v857 = vmax.f32 %v507, 0.0
    %v858 = vmax.f32 %v572, 0.0
    %v859 = vmax.f32 %v637, 0.0
    %v860 = vmax.f32 %v702, 0.0
    %v861 = vmax.f32 %v767, 0.0
    %v862 = vmax.f32 %v315, 0.0
    %v863 = vmax.f32 %v380, 0.0
    %v864 = vmax.f32 %v445, 0.0
    %v865 = vmax.f32 %v510, 0.0
    %v866 = vmax.f32 %v575, 0.0
    %v867 = vmax.f32 %v640, 0.0
    %v868 = vmax.f32 %v705, 0.0
    %v869 = vmax.f32 %v770, 0.0
    %v870 = vmax.f32 %v318, 0.0
    %v871 = vmax.f32 %v383, 0.0
    %v872 = vmax.f32 %v448, 0.0
    %v873 = vmax.f32 %v513, 0.0
    %v874 = vmax.f32 %v578, 0.0
    %v875 = vmax.f32 %v643, 0.0
    %v876 = vmax.f32 %v708, 0.0
    %v877 = vmax.f32 %v773, 0.0
    %v878 = vmax.f32 %v321, 0.0
    %v879 = vmax.f32 %v386, 0.0
    %v880 = vmax.f32 %v451, 0.0
    %v881 = vmax.f32 %v516, 0.0
    %v882 = vmax.f32 %v581, 0.0
    %v883 = vmax.f32 %v646, 0.0
    %v884 = vmax.f32 %v711, 0.0
    %v885 = vmax.f32 %v776, 0.0
    %v886 = vmax.f32 %v324, 0.0
    %v887 = vmax.f32 %v389, 0.0
    %v888 = vmax.f32 %v454, 0.0
    %v889 = vmax.f32 %v519, 0.0
    %v890 = vmax.f32 %v584, 0.0
    %v891 = vmax.f32 %v649, 0.0
    %v892 = vmax.f32 %v714, 0.0
    %v893 = vmax.f32 %v779, 0.0
    %v894 = vmax.f32 %v327, 0.0
    %v895 = vmax.f32 %v392, 0.0
    %v896 = vmax.f32 %v457, 0.0
    %v897 = vmax.f32 %v522, 0.0
    %v898 = vmax.f32 %v587, 0.0
    %v899 = vmax.f32 %v652, 0.0
    %v900 = vmax.f32 %v717, 0.0
    %v901 = vmax.f32 %v782, 0.0
    %v902 = vmax.f32 %v330, 0.0
    %v903 = vmax.f32 %v395, 0.0
    %v904 = vmax.f32 %v460, 0.0
    %v905 = vmax.f32 %v525, 0.0
    %v906 = vmax.f32 %v590, 0.0
    %v907 = vmax.f32 %v655, 0.0
    %v908 = vmax.f32 %v720, 0.0
    %v909 = vmax.f32 %v785, 0.0
    %v910 = vmax.f32 %v333, 0.0
    %v911 = vmax.f32 %v398, 0.0
    %v912 = vmax.f32 %v463, 0.0
    %v913 = vmax.f32 %v528, 0.0
    %v914 = vmax.f32 %v593, 0.0
    %v915 = vmax.f32 %v658, 0.0
    %v916 = vmax.f32 %v723, 0.0
    %v917 = vmax.f32 %v788, 0.0
    %v918 = vadd.f32 %v790, %v798
    %v919 = vadd.f32 %v918, %v806
    %v920 = vadd.f32 %v919, %v814
    %v921 = vadd.f32 %v920, %v822
    %v922 = vadd.f32 %v921, %v830
    %v923 = vadd.f32 %v922, %v838
    %v924 = vadd.f32 %v923, %v846
    %v925 = vadd.f32 %v924, %v854
    %v926 = vadd.f32 %v925, %v862
    %v927 = vadd.f32 %v926, %v870
    %v928 = vadd.f32 %v927, %v878
    %v929 = vadd.f32 %v928, %v886
    %v930 = vadd.f32 %v929, %v894
    %v931 = vadd.f32 %v930, %v902
    %v932 = vadd.f32 %v931, %v910
    %v933 = vrot.slane %v932, 4
    %v934 = vadd.f32 %v932, %v933
    %v935 = vrot.slane %v934, 2
    %v936 = vadd.f32 %v934, %v935
    %v937 = vrot.slane %v936, 1
    %v938 = vadd.f32 %v936, %v937
    %v939 = vadd.f32 %v791, %v799
    %v940 = vadd.f32 %v939, %v807
    %v941 = vadd.f32 %v940, %v815
    %v942 = vadd.f32 %v941, %v823
    %v943 = vadd.f32 %v942, %v831
    %v944 = vadd.f32 %v943, %v839
    %v945 = vadd.f32 %v944, %v847
    %v946 = vadd.f32 %v945, %v855
    %v947 = vadd.f32 %v946, %v863
    %v948 = vadd.f32 %v947, %v871
    %v949 = vadd.f32 %v948, %v879
    %v950 = vadd.f32 %v949, %v887
    %v951 = vadd.f32 %v950, %v895
    %v952 = vadd.f32 %v951, %v903
    %v953 = vadd.f32 %v952, %v911
    %v954 = vrot.slane %v953, 4
    %v955 = vadd.f32 %v953, %v954
    %v956 = vrot.slane %v955, 2
    %v957 = vadd.f32 %v955, %v956
    %v958 = vrot.slane %v957, 1
    %v959 = vadd.f32 %v957, %v958
    %v960 = vadd.f32 %v792, %v800
    %v961 = vadd.f32 %v960, %v808
    %v962 = vadd.f32 %v961, %v816
    %v963 = vadd.f32 %v962, %v824
    %v964 = vadd.f32 %v963, %v832
    %v965 = vadd.f32 %v964, %v840
    %v966 = vadd.f32 %v965, %v848
    %v967 = vadd.f32 %v966, %v856
    %v968 = vadd.f32 %v967, %v864
    %v969 = vadd.f32 %v968, %v872
    %v970 = vadd.f32 %v969, %v880
    %v971 = vadd.f32 %v970, %v888
    %v972 = vadd.f32 %v971, %v896
    %v973 = vadd.f32 %v972, %v904
    %v974 = vadd.f32 %v973, %v912
    %v975 = vrot.slane %v974, 4
    %v976 = vadd.f32 %v974, %v975
    %v977 = vrot.slane %v976, 2
    %v978 = vadd.f32 %v976, %v977
    %v979 = vrot.slane %v978, 1
    %v980 = vadd.f32 %v978, %v979
    %v981 = vadd.f32 %v793, %v801
    %v982 = vadd.f32 %v981, %v809
    %v983 = vadd.f32 %v982, %v817
    %v984 = vadd.f32 %v983, %v825
    %v985 = vadd.f32 %v984, %v833
    %v986 = vadd.f32 %v985, %v841
    %v987 = vadd.f32 %v986, %v849
    %v988 = vadd.f32 %v987, %v857
    %v989 = vadd.f32 %v988, %v865
    %v990 = vadd.f32 %v989, %v873
    %v991 = vadd.f32 %v990, %v881
    %v992 = vadd.f32 %v991, %v889
    %v993 = vadd.f32 %v992, %v897
    %v994 = vadd.f32 %v993, %v905
    %v995 = vadd.f32 %v994, %v913
    %v996 = vrot.slane %v995, 4
    %v997 = vadd.f32 %v995, %v996
    %v998 = vrot.slane %v997, 2
    %v999 = vadd.f32 %v997, %v998
    %v1000 = vrot.slane %v999, 1
    %v1001 = vadd.f32 %v999, %v1000
    %v1002 = vadd.f32 %v794, %v802
    %v1003 = vadd.f32 %v1002, %v810
    %v1004 = vadd.f32 %v1003, %v818
    %v1005 = vadd.f32 %v1004, %v826
    %v1006 = vadd.f32 %v1005, %v834
    %v1007 = vadd.f32 %v1006, %v842
    %v1008 = vadd.f32 %v1007, %v850
    %v1009 = vadd.f32 %v1008, %v858
    %v1010 = vadd.f32 %v1009, %v866
    %v1011 = vadd.f32 %v1010, %v874
    %v1012 = vadd.f32 %v1011, %v882
    %v1013 = vadd.f32 %v1012, %v890
    %v1014 = vadd.f32 %v1013, %v898
    %v1015 = vadd.f32 %v1014, %v906
    %v1016 = vadd.f32 %v1015, %v914
    %v1017 = vrot.slane %v1016, 4
    %v1018 = vadd.f32 %v1016, %v1017
    %v1019 = vrot.slane %v1018, 2
    %v1020 = vadd.f32 %v1018, %v1019
    %v1021 = vrot.slane %v1020, 1
    %v1022 = vadd.f32 %v1020, %v1021
    %v1023 = vadd.f32 %v795, %v803
    %v1024 = vadd.f32 %v1023, %v811
    %v1025 = vadd.f32 %v1024, %v819
    %v1026 = vadd.f32 %v1025, %v827
    %v1027 = vadd.f32 %v1026, %v835
    %v1028 = vadd.f32 %v1027, %v843
    %v1029 = vadd.f32 %v1028, %v851
    %v1030 = vadd.f32 %v1029, %v859
    %v1031 = vadd.f32 %v1030, %v867
    %v1032 = vadd.f32 %v1031, %v875
    %v1033 = vadd.f32 %v1032, %v883
    %v1034 = vadd.f32 %v1033, %v891
    %v1035 = vadd.f32 %v1034, %v899
    %v1036 = vadd.f32 %v1035, %v907
    %v1037 = vadd.f32 %v1036, %v915
    %v1038 = vrot.slane %v1037, 4
    %v1039 = vadd.f32 %v1037, %v1038
    %v1040 = vrot.slane %v1039, 2
    %v1041 = vadd.f32 %v1039, %v1040
    %v1042 = vrot.slane %v1041, 1
    %v1043 = vadd.f32 %v1041, %v1042
    %v1044 = vadd.f32 %v796, %v804
    %v1045 = vadd.f32 %v1044, %v812
    %v1046 = vadd.f32 %v1045, %v820
    %v1047 = vadd.f32 %v1046, %v828
    %v1048 = vadd.f32 %v1047, %v836
    %v1049 = vadd.f32 %v1048, %v844
    %v1050 = vadd.f32 %v1049, %v852
    %v1051 = vadd.f32 %v1050, %v860
    %v1052 = vadd.f32 %v1051, %v868
    %v1053 = vadd.f32 %v1052, %v876
    %v1054 = vadd.f32 %v1053, %v884
    %v1055 = vadd.f32 %v1054, %v892
    %v1056 = vadd.f32 %v1055, %v900
    %v1057 = vadd.f32 %v1056, %v908
    %v1058 = vadd.f32 %v1057, %v916
    %v1059 = vrot.slane %v1058, 4
    %v1060 = vadd.f32 %v1058, %v1059
    %v1061 = vrot.slane %v1060, 2
    %v1062 = vadd.f32 %v1060, %v1061
    %v1063 = vrot.slane %v1062, 1
    %v1064 = vadd.f32 %v1062, %v1063
    %v1065 = vadd.f32 %v797, %v805
    %v1066 = vadd.f32 %v1065, %v813
    %v1067 = vadd.f32 %v1066, %v821
    %v1068 = vadd.f32 %v1067, %v829
    %v1069 = vadd.f32 %v1068, %v837
    %v1070 = vadd.f32 %v1069, %v845
    %v1071 = vadd.f32 %v1070, %v853
    %v1072 = vadd.f32 %v1071, %v861
    %v1073 = vadd.f32 %v1072, %v869
    %v1074 = vadd.f32 %v1073, %v877
    %v1075 = vadd.f32 %v1074, %v885
    %v1076 = vadd.f32 %v1075, %v893
    %v1077 = vadd.f32 %v1076, %v901
    %v1078 = vadd.f32 %v1077, %v909
    %v1079 = vadd.f32 %v1078, %v917
    %v1080 = vrot.slane %v1079, 4
    %v1081 = vadd.f32 %v1079, %v1080
    %v1082 = vrot.slane %v1081, 2
    %v1083 = vadd.f32 %v1081, %v1082
    %v1084 = vrot.slane %v1083, 1
    %v1085 = vadd.f32 %v1083, %v1084
    %v1086 = vadd.f32 %v938, 0.0
    %v1087 = vadd.f32 %v959, 0.0
    %v1088 = vadd.f32 %v980, 0.0
    %v1089 = vadd.f32 %v1001, 0.0
    %v1090 = vadd.f32 %v1022, 0.0
    %v1091 = vadd.f32 %v1043, 0.0
    %v1092 = vadd.f32 %v1064, 0.0
    %v1093 = vadd.f32 %v1085, 0.0
    %v1094 = vld [vmem:[%s0 + $0x8] sm:$0xff]
    %1095 = vmatpush.xpose.msra.mxu0 0.0
    %1096 = vmatpush.xpose.msra.mxu0 0.0
    %1097 = vmatpush.xpose.msra.mxu0 0.0
    %1098 = vmatpush.xpose.msra.mxu0 0.0
    %1099 = vmatpush.xpose.msra.mxu0 0.0
    %1100 = vmatpush.xpose.msra.mxu0 0.0
    %1101 = vmatpush.xpose.msra.mxu0 0.0
    %1102 = vmatpush.xpose.msra.mxu0 0.0
    %1103 = vmatpush.xpose.msra.mxu0 0.0
    %1104 = vmatpush.xpose.msra.mxu0 0.0
    %1105 = vmatpush.xpose.msra.mxu0 0.0
    %1106 = vmatpush.xpose.msra.mxu0 0.0
    %1107 = vmatpush.xpose.msra.mxu0 0.0
    %1108 = vmatpush.xpose.msra.mxu0 0.0
    %1109 = vmatpush.xpose.msra.mxu0 0.0
    %1110 = vmatpush.xpose.msra.mxu0 %v1094
    %1111 = vmatmul.f32.gmra.mxu0 %v122
    %v1112 = vpop.f32.mrf.mxu0
    %v1113 = vadd.f32 0.0, %v1112
    %1114 = vmatmul.f32.gmra.mxu0 %v123
    %v1115 = vpop.f32.mrf.mxu0
    %v1116 = vadd.f32 0.0, %v1115
    %1117 = vmatmul.f32.gmra.mxu0 %v124
    %v1118 = vpop.f32.mrf.mxu0
    %v1119 = vadd.f32 0.0, %v1118
    %1120 = vmatmul.f32.gmra.mxu0 %v125
    %v1121 = vpop.f32.mrf.mxu0
    %v1122 = vadd.f32 0.0, %v1121
    %1123 = vmatmul.f32.gmra.mxu0 %v126
    %v1124 = vpop.f32.mrf.mxu0
    %v1125 = vadd.f32 0.0, %v1124
    %1126 = vmatmul.f32.gmra.mxu0 %v127
    %v1127 = vpop.f32.mrf.mxu0
    %v1128 = vadd.f32 0.0, %v1127
    %1129 = vmatmul.f32.gmra.mxu0 %v128
    %v1130 = vpop.f32.mrf.mxu0
    %v1131 = vadd.f32 0.0, %v1130
    %1132 = vmatmul.f32.gmra.mxu0 %v129
    %v1133 = vpop.f32.mrf.mxu0
    %v1134 = vadd.f32 0.0, %v1133
    %1135 = vmatmul.f32.gmra.mxu0 %v130
    %v1136 = vpop.f32.mrf.mxu0
    %v1137 = vadd.f32 0.0, %v1136
    %1138 = vmatmul.f32.gmra.mxu0 %v131
    %v1139 = vpop.f32.mrf.mxu0
    %v1140 = vadd.f32 0.0, %v1139
    %1141 = vmatmul.f32.gmra.mxu0 %v132
    %v1142 = vpop.f32.mrf.mxu0
    %v1143 = vadd.f32 0.0, %v1142
    %1144 = vmatmul.f32.gmra.mxu0 %v133
    %v1145 = vpop.f32.mrf.mxu0
    %v1146 = vadd.f32 0.0, %v1145
    %1147 = vmatmul.f32.gmra.mxu0 %v134
    %v1148 = vpop.f32.mrf.mxu0
    %v1149 = vadd.f32 0.0, %v1148
    %1150 = vmatmul.f32.gmra.mxu0 %v135
    %v1151 = vpop.f32.mrf.mxu0
    %v1152 = vadd.f32 0.0, %v1151
    %1153 = vmatmul.f32.gmra.mxu0 %v136
    %v1154 = vpop.f32.mrf.mxu0
    %v1155 = vadd.f32 0.0, %v1154
    %1156 = vmatmul.f32.gmra.mxu0 %v137
    %v1157 = vpop.f32.mrf.mxu0
    %v1158 = vadd.f32 0.0, %v1157
    %1159 = vdwg.mxu0
    %v1161 = vsel %vm221, %v1113, 0
    %v1164 = vsel %vm221, %v1116, 0
    %v1167 = vsel %vm221, %v1119, 0
    %v1170 = vsel %vm221, %v1122, 0
    %v1173 = vsel %vm221, %v1125, 0
    %v1176 = vsel %vm221, %v1128, 0
    %v1179 = vsel %vm221, %v1131, 0
    %v1182 = vsel %vm221, %v1134, 0
    %v1185 = vsel %vm221, %v1137, 0
    %v1188 = vsel %vm221, %v1140, 0
    %v1191 = vsel %vm221, %v1143, 0
    %v1194 = vsel %vm221, %v1146, 0
    %v1197 = vsel %vm221, %v1149, 0
    %v1200 = vsel %vm221, %v1152, 0
    %v1203 = vsel %vm221, %v1155, 0
    %v1206 = vsel %vm221, %v1158, 0
    %1208 = vmatpush.msra.mxu0 0.0
    %1209 = vmatpush.msra.mxu0 0.0
    %1210 = vmatpush.msra.mxu0 0.0
    %1211 = vmatpush.msra.mxu0 0.0
    %1212 = vmatpush.msra.mxu0 0.0
    %1213 = vmatpush.msra.mxu0 0.0
    %1214 = vmatpush.msra.mxu0 0.0
    %1215 = vmatpush.msra.mxu0 0.0
    %1216 = vmatpush.msra.mxu0 0.0
    %1217 = vmatpush.msra.mxu0 0.0
    %1218 = vmatpush.msra.mxu0 0.0
    %1219 = vmatpush.msra.mxu0 0.0
    %1220 = vmatpush.msra.mxu0 0.0
    %1221 = vmatpush.msra.mxu0 0.0
    %1222 = vmatpush.msra.mxu0 0.0
    %1223 = vmatpush.msra.mxu0 %v62
    %1224 = vmatmul.f32.gmra.mxu0 %v1161
    %v1225 = vpop.f32.mrf.mxu0
    %v1226 = vadd.f32 %v205, %v1225
    %1227 = vmatmul.f32.gmra.mxu0 %v1164
    %v1228 = vpop.f32.mrf.mxu0
    %v1229 = vadd.f32 %v205, %v1228
    %1230 = vmatmul.f32.gmra.mxu0 %v1167
    %v1231 = vpop.f32.mrf.mxu0
    %v1232 = vadd.f32 %v205, %v1231
    %1233 = vmatmul.f32.gmra.mxu0 %v1170
    %v1234 = vpop.f32.mrf.mxu0
    %v1235 = vadd.f32 %v205, %v1234
    %1236 = vmatmul.f32.gmra.mxu0 %v1173
    %v1237 = vpop.f32.mrf.mxu0
    %v1238 = vadd.f32 %v205, %v1237
    %1239 = vmatmul.f32.gmra.mxu0 %v1176
    %v1240 = vpop.f32.mrf.mxu0
    %v1241 = vadd.f32 %v205, %v1240
    %1242 = vmatmul.f32.gmra.mxu0 %v1179
    %v1243 = vpop.f32.mrf.mxu0
    %v1244 = vadd.f32 %v205, %v1243
    %1245 = vmatmul.f32.gmra.mxu0 %v1182
    %v1246 = vpop.f32.mrf.mxu0
    %v1247 = vadd.f32 %v205, %v1246
    %1248 = vmatmul.f32.gmra.mxu0 %v1185
    %v1249 = vpop.f32.mrf.mxu0
    %v1250 = vadd.f32 %v205, %v1249
    %1251 = vmatmul.f32.gmra.mxu0 %v1188
    %v1252 = vpop.f32.mrf.mxu0
    %v1253 = vadd.f32 %v205, %v1252
    %1254 = vmatmul.f32.gmra.mxu0 %v1191
    %v1255 = vpop.f32.mrf.mxu0
    %v1256 = vadd.f32 %v205, %v1255
    %1257 = vmatmul.f32.gmra.mxu0 %v1194
    %v1258 = vpop.f32.mrf.mxu0
    %v1259 = vadd.f32 %v205, %v1258
    %1260 = vmatmul.f32.gmra.mxu0 %v1197
    %v1261 = vpop.f32.mrf.mxu0
    %v1262 = vadd.f32 %v205, %v1261
    %1263 = vmatmul.f32.gmra.mxu0 %v1200
    %v1264 = vpop.f32.mrf.mxu0
    %v1265 = vadd.f32 %v205, %v1264
    %1266 = vmatmul.f32.gmra.mxu0 %v1203
    %v1267 = vpop.f32.mrf.mxu0
    %v1268 = vadd.f32 %v205, %v1267
    %1269 = vmatmul.f32.gmra.mxu0 %v1206
    %v1270 = vpop.f32.mrf.mxu0
    %v1271 = vadd.f32 %v205, %v1270
    %1272 = vdwg.mxu0
    %1273 = vmatpush.msra.mxu0 0.0
    %1274 = vmatpush.msra.mxu0 0.0
    %1275 = vmatpush.msra.mxu0 0.0
    %1276 = vmatpush.msra.mxu0 0.0
    %1277 = vmatpush.msra.mxu0 0.0
    %1278 = vmatpush.msra.mxu0 0.0
    %1279 = vmatpush.msra.mxu0 0.0
    %1280 = vmatpush.msra.mxu0 0.0
    %1281 = vmatpush.msra.mxu0 0.0
    %1282 = vmatpush.msra.mxu0 0.0
    %1283 = vmatpush.msra.mxu0 0.0
    %1284 = vmatpush.msra.mxu0 0.0
    %1285 = vmatpush.msra.mxu0 0.0
    %1286 = vmatpush.msra.mxu0 0.0
    %1287 = vmatpush.msra.mxu0 0.0
    %1288 = vmatpush.msra.mxu0 %v63
    %1289 = vmatmul.f32.gmra.mxu0 %v1161
    %v1290 = vpop.f32.mrf.mxu0
    %v1291 = vadd.f32 %v206, %v1290
    %1292 = vmatmul.f32.gmra.mxu0 %v1164
    %v1293 = vpop.f32.mrf.mxu0
    %v1294 = vadd.f32 %v206, %v1293
    %1295 = vmatmul.f32.gmra.mxu0 %v1167
    %v1296 = vpop.f32.mrf.mxu0
    %v1297 = vadd.f32 %v206, %v1296
    %1298 = vmatmul.f32.gmra.mxu0 %v1170
    %v1299 = vpop.f32.mrf.mxu0
    %v1300 = vadd.f32 %v206, %v1299
    %1301 = vmatmul.f32.gmra.mxu0 %v1173
    %v1302 = vpop.f32.mrf.mxu0
    %v1303 = vadd.f32 %v206, %v1302
    %1304 = vmatmul.f32.gmra.mxu0 %v1176
    %v1305 = vpop.f32.mrf.mxu0
    %v1306 = vadd.f32 %v206, %v1305
    %1307 = vmatmul.f32.gmra.mxu0 %v1179
    %v1308 = vpop.f32.mrf.mxu0
    %v1309 = vadd.f32 %v206, %v1308
    %1310 = vmatmul.f32.gmra.mxu0 %v1182
    %v1311 = vpop.f32.mrf.mxu0
    %v1312 = vadd.f32 %v206, %v1311
    %1313 = vmatmul.f32.gmra.mxu0 %v1185
    %v1314 = vpop.f32.mrf.mxu0
    %v1315 = vadd.f32 %v206, %v1314
    %1316 = vmatmul.f32.gmra.mxu0 %v1188
    %v1317 = vpop.f32.mrf.mxu0
    %v1318 = vadd.f32 %v206, %v1317
    %1319 = vmatmul.f32.gmra.mxu0 %v1191
    %v1320 = vpop.f32.mrf.mxu0
    %v1321 = vadd.f32 %v206, %v1320
    %1322 = vmatmul.f32.gmra.mxu0 %v1194
    %v1323 = vpop.f32.mrf.mxu0
    %v1324 = vadd.f32 %v206, %v1323
    %1325 = vmatmul.f32.gmra.mxu0 %v1197
    %v1326 = vpop.f32.mrf.mxu0
    %v1327 = vadd.f32 %v206, %v1326
    %1328 = vmatmul.f32.gmra.mxu0 %v1200
    %v1329 = vpop.f32.mrf.mxu0
    %v1330 = vadd.f32 %v206, %v1329
    %1331 = vmatmul.f32.gmra.mxu0 %v1203
    %v1332 = vpop.f32.mrf.mxu0
    %v1333 = vadd.f32 %v206, %v1332
    %1334 = vmatmul.f32.gmra.mxu0 %v1206
    %v1335 = vpop.f32.mrf.mxu0
    %v1336 = vadd.f32 %v206, %v1335
    %1337 = vdwg.mxu0
    %1338 = vmatpush.msra.mxu0 0.0
    %1339 = vmatpush.msra.mxu0 0.0
    %1340 = vmatpush.msra.mxu0 0.0
    %1341 = vmatpush.msra.mxu0 0.0
    %1342 = vmatpush.msra.mxu0 0.0
    %1343 = vmatpush.msra.mxu0 0.0
    %1344 = vmatpush.msra.mxu0 0.0
    %1345 = vmatpush.msra.mxu0 0.0
    %1346 = vmatpush.msra.mxu0 0.0
    %1347 = vmatpush.msra.mxu0 0.0
    %1348 = vmatpush.msra.mxu0 0.0
    %1349 = vmatpush.msra.mxu0 0.0
    %1350 = vmatpush.msra.mxu0 0.0
    %1351 = vmatpush.msra.mxu0 0.0
    %1352 = vmatpush.msra.mxu0 0.0
    %1353 = vmatpush.msra.mxu0 %v64
    %1354 = vmatmul.f32.gmra.mxu0 %v1161
    %v1355 = vpop.f32.mrf.mxu0
    %v1356 = vadd.f32 %v207, %v1355
    %1357 = vmatmul.f32.gmra.mxu0 %v1164
    %v1358 = vpop.f32.mrf.mxu0
    %v1359 = vadd.f32 %v207, %v1358
    %1360 = vmatmul.f32.gmra.mxu0 %v1167
    %v1361 = vpop.f32.mrf.mxu0
    %v1362 = vadd.f32 %v207, %v1361
    %1363 = vmatmul.f32.gmra.mxu0 %v1170
    %v1364 = vpop.f32.mrf.mxu0
    %v1365 = vadd.f32 %v207, %v1364
    %1366 = vmatmul.f32.gmra.mxu0 %v1173
    %v1367 = vpop.f32.mrf.mxu0
    %v1368 = vadd.f32 %v207, %v1367
    %1369 = vmatmul.f32.gmra.mxu0 %v1176
    %v1370 = vpop.f32.mrf.mxu0
    %v1371 = vadd.f32 %v207, %v1370
    %1372 = vmatmul.f32.gmra.mxu0 %v1179
    %v1373 = vpop.f32.mrf.mxu0
    %v1374 = vadd.f32 %v207, %v1373
    %1375 = vmatmul.f32.gmra.mxu0 %v1182
    %v1376 = vpop.f32.mrf.mxu0
    %v1377 = vadd.f32 %v207, %v1376
    %1378 = vmatmul.f32.gmra.mxu0 %v1185
    %v1379 = vpop.f32.mrf.mxu0
    %v1380 = vadd.f32 %v207, %v1379
    %1381 = vmatmul.f32.gmra.mxu0 %v1188
    %v1382 = vpop.f32.mrf.mxu0
    %v1383 = vadd.f32 %v207, %v1382
    %1384 = vmatmul.f32.gmra.mxu0 %v1191
    %v1385 = vpop.f32.mrf.mxu0
    %v1386 = vadd.f32 %v207, %v1385
    %1387 = vmatmul.f32.gmra.mxu0 %v1194
    %v1388 = vpop.f32.mrf.mxu0
    %v1389 = vadd.f32 %v207, %v1388
    %1390 = vmatmul.f32.gmra.mxu0 %v1197
    %v1391 = vpop.f32.mrf.mxu0
    %v1392 = vadd.f32 %v207, %v1391
    %1393 = vmatmul.f32.gmra.mxu0 %v1200
    %v1394 = vpop.f32.mrf.mxu0
    %v1395 = vadd.f32 %v207, %v1394
    %1396 = vmatmul.f32.gmra.mxu0 %v1203
    %v1397 = vpop.f32.mrf.mxu0
    %v1398 = vadd.f32 %v207, %v1397
    %1399 = vmatmul.f32.gmra.mxu0 %v1206
    %v1400 = vpop.f32.mrf.mxu0
    %v1401 = vadd.f32 %v207, %v1400
    %1402 = vdwg.mxu0
    %1403 = vmatpush.msra.mxu0 0.0
    %1404 = vmatpush.msra.mxu0 0.0
    %1405 = vmatpush.msra.mxu0 0.0
    %1406 = vmatpush.msra.mxu0 0.0
    %1407 = vmatpush.msra.mxu0 0.0
    %1408 = vmatpush.msra.mxu0 0.0
    %1409 = vmatpush.msra.mxu0 0.0
    %1410 = vmatpush.msra.mxu0 0.0
    %1411 = vmatpush.msra.mxu0 0.0
    %1412 = vmatpush.msra.mxu0 0.0
    %1413 = vmatpush.msra.mxu0 0.0
    %1414 = vmatpush.msra.mxu0 0.0
    %1415 = vmatpush.msra.mxu0 0.0
    %1416 = vmatpush.msra.mxu0 0.0
    %1417 = vmatpush.msra.mxu0 0.0
    %1418 = vmatpush.msra.mxu0 %v65
    %1419 = vmatmul.f32.gmra.mxu0 %v1161
    %v1420 = vpop.f32.mrf.mxu0
    %v1421 = vadd.f32 %v208, %v1420
    %1422 = vmatmul.f32.gmra.mxu0 %v1164
    %v1423 = vpop.f32.mrf.mxu0
    %v1424 = vadd.f32 %v208, %v1423
    %1425 = vmatmul.f32.gmra.mxu0 %v1167
    %v1426 = vpop.f32.mrf.mxu0
    %v1427 = vadd.f32 %v208, %v1426
    %1428 = vmatmul.f32.gmra.mxu0 %v1170
    %v1429 = vpop.f32.mrf.mxu0
    %v1430 = vadd.f32 %v208, %v1429
    %1431 = vmatmul.f32.gmra.mxu0 %v1173
    %v1432 = vpop.f32.mrf.mxu0
    %v1433 = vadd.f32 %v208, %v1432
    %1434 = vmatmul.f32.gmra.mxu0 %v1176
    %v1435 = vpop.f32.mrf.mxu0
    %v1436 = vadd.f32 %v208, %v1435
    %1437 = vmatmul.f32.gmra.mxu0 %v1179
    %v1438 = vpop.f32.mrf.mxu0
    %v1439 = vadd.f32 %v208, %v1438
    %1440 = vmatmul.f32.gmra.mxu0 %v1182
    %v1441 = vpop.f32.mrf.mxu0
    %v1442 = vadd.f32 %v208, %v1441
    %1443 = vmatmul.f32.gmra.mxu0 %v1185
    %v1444 = vpop.f32.mrf.mxu0
    %v1445 = vadd.f32 %v208, %v1444
    %1446 = vmatmul.f32.gmra.mxu0 %v1188
    %v1447 = vpop.f32.mrf.mxu0
    %v1448 = vadd.f32 %v208, %v1447
    %1449 = vmatmul.f32.gmra.mxu0 %v1191
    %v1450 = vpop.f32.mrf.mxu0
    %v1451 = vadd.f32 %v208, %v1450
    %1452 = vmatmul.f32.gmra.mxu0 %v1194
    %v1453 = vpop.f32.mrf.mxu0
    %v1454 = vadd.f32 %v208, %v1453
    %1455 = vmatmul.f32.gmra.mxu0 %v1197
    %v1456 = vpop.f32.mrf.mxu0
    %v1457 = vadd.f32 %v208, %v1456
    %1458 = vmatmul.f32.gmra.mxu0 %v1200
    %v1459 = vpop.f32.mrf.mxu0
    %v1460 = vadd.f32 %v208, %v1459
    %1461 = vmatmul.f32.gmra.mxu0 %v1203
    %v1462 = vpop.f32.mrf.mxu0
    %v1463 = vadd.f32 %v208, %v1462
    %1464 = vmatmul.f32.gmra.mxu0 %v1206
    %v1465 = vpop.f32.mrf.mxu0
    %v1466 = vadd.f32 %v208, %v1465
    %1467 = vdwg.mxu0
    %1468 = vmatpush.msra.mxu0 0.0
    %1469 = vmatpush.msra.mxu0 0.0
    %1470 = vmatpush.msra.mxu0 0.0
    %1471 = vmatpush.msra.mxu0 0.0
    %1472 = vmatpush.msra.mxu0 0.0
    %1473 = vmatpush.msra.mxu0 0.0
    %1474 = vmatpush.msra.mxu0 0.0
    %1475 = vmatpush.msra.mxu0 0.0
    %1476 = vmatpush.msra.mxu0 0.0
    %1477 = vmatpush.msra.mxu0 0.0
    %1478 = vmatpush.msra.mxu0 0.0
    %1479 = vmatpush.msra.mxu0 0.0
    %1480 = vmatpush.msra.mxu0 0.0
    %1481 = vmatpush.msra.mxu0 0.0
    %1482 = vmatpush.msra.mxu0 0.0
    %1483 = vmatpush.msra.mxu0 %v66
    %1484 = vmatmul.f32.gmra.mxu0 %v1161
    %v1485 = vpop.f32.mrf.mxu0
    %v1486 = vadd.f32 %v209, %v1485
    %1487 = vmatmul.f32.gmra.mxu0 %v1164
    %v1488 = vpop.f32.mrf.mxu0
    %v1489 = vadd.f32 %v209, %v1488
    %1490 = vmatmul.f32.gmra.mxu0 %v1167
    %v1491 = vpop.f32.mrf.mxu0
    %v1492 = vadd.f32 %v209, %v1491
    %1493 = vmatmul.f32.gmra.mxu0 %v1170
    %v1494 = vpop.f32.mrf.mxu0
    %v1495 = vadd.f32 %v209, %v1494
    %1496 = vmatmul.f32.gmra.mxu0 %v1173
    %v1497 = vpop.f32.mrf.mxu0
    %v1498 = vadd.f32 %v209, %v1497
    %1499 = vmatmul.f32.gmra.mxu0 %v1176
    %v1500 = vpop.f32.mrf.mxu0
    %v1501 = vadd.f32 %v209, %v1500
    %1502 = vmatmul.f32.gmra.mxu0 %v1179
    %v1503 = vpop.f32.mrf.mxu0
    %v1504 = vadd.f32 %v209, %v1503
    %1505 = vmatmul.f32.gmra.mxu0 %v1182
    %v1506 = vpop.f32.mrf.mxu0
    %v1507 = vadd.f32 %v209, %v1506
    %1508 = vmatmul.f32.gmra.mxu0 %v1185
    %v1509 = vpop.f32.mrf.mxu0
    %v1510 = vadd.f32 %v209, %v1509
    %1511 = vmatmul.f32.gmra.mxu0 %v1188
    %v1512 = vpop.f32.mrf.mxu0
    %v1513 = vadd.f32 %v209, %v1512
    %1514 = vmatmul.f32.gmra.mxu0 %v1191
    %v1515 = vpop.f32.mrf.mxu0
    %v1516 = vadd.f32 %v209, %v1515
    %1517 = vmatmul.f32.gmra.mxu0 %v1194
    %v1518 = vpop.f32.mrf.mxu0
    %v1519 = vadd.f32 %v209, %v1518
    %1520 = vmatmul.f32.gmra.mxu0 %v1197
    %v1521 = vpop.f32.mrf.mxu0
    %v1522 = vadd.f32 %v209, %v1521
    %1523 = vmatmul.f32.gmra.mxu0 %v1200
    %v1524 = vpop.f32.mrf.mxu0
    %v1525 = vadd.f32 %v209, %v1524
    %1526 = vmatmul.f32.gmra.mxu0 %v1203
    %v1527 = vpop.f32.mrf.mxu0
    %v1528 = vadd.f32 %v209, %v1527
    %1529 = vmatmul.f32.gmra.mxu0 %v1206
    %v1530 = vpop.f32.mrf.mxu0
    %v1531 = vadd.f32 %v209, %v1530
    %1532 = vdwg.mxu0
    %1533 = vmatpush.msra.mxu0 0.0
    %1534 = vmatpush.msra.mxu0 0.0
    %1535 = vmatpush.msra.mxu0 0.0
    %1536 = vmatpush.msra.mxu0 0.0
    %1537 = vmatpush.msra.mxu0 0.0
    %1538 = vmatpush.msra.mxu0 0.0
    %1539 = vmatpush.msra.mxu0 0.0
    %1540 = vmatpush.msra.mxu0 0.0
    %1541 = vmatpush.msra.mxu0 0.0
    %1542 = vmatpush.msra.mxu0 0.0
    %1543 = vmatpush.msra.mxu0 0.0
    %1544 = vmatpush.msra.mxu0 0.0
    %1545 = vmatpush.msra.mxu0 0.0
    %1546 = vmatpush.msra.mxu0 0.0
    %1547 = vmatpush.msra.mxu0 0.0
    %1548 = vmatpush.msra.mxu0 %v67
    %1549 = vmatmul.f32.gmra.mxu0 %v1161
    %v1550 = vpop.f32.mrf.mxu0
    %v1551 = vadd.f32 %v210, %v1550
    %1552 = vmatmul.f32.gmra.mxu0 %v1164
    %v1553 = vpop.f32.mrf.mxu0
    %v1554 = vadd.f32 %v210, %v1553
    %1555 = vmatmul.f32.gmra.mxu0 %v1167
    %v1556 = vpop.f32.mrf.mxu0
    %v1557 = vadd.f32 %v210, %v1556
    %1558 = vmatmul.f32.gmra.mxu0 %v1170
    %v1559 = vpop.f32.mrf.mxu0
    %v1560 = vadd.f32 %v210, %v1559
    %1561 = vmatmul.f32.gmra.mxu0 %v1173
    %v1562 = vpop.f32.mrf.mxu0
    %v1563 = vadd.f32 %v210, %v1562
    %1564 = vmatmul.f32.gmra.mxu0 %v1176
    %v1565 = vpop.f32.mrf.mxu0
    %v1566 = vadd.f32 %v210, %v1565
    %1567 = vmatmul.f32.gmra.mxu0 %v1179
    %v1568 = vpop.f32.mrf.mxu0
    %v1569 = vadd.f32 %v210, %v1568
    %1570 = vmatmul.f32.gmra.mxu0 %v1182
    %v1571 = vpop.f32.mrf.mxu0
    %v1572 = vadd.f32 %v210, %v1571
    %1573 = vmatmul.f32.gmra.mxu0 %v1185
    %v1574 = vpop.f32.mrf.mxu0
    %v1575 = vadd.f32 %v210, %v1574
    %1576 = vmatmul.f32.gmra.mxu0 %v1188
    %v1577 = vpop.f32.mrf.mxu0
    %v1578 = vadd.f32 %v210, %v1577
    %1579 = vmatmul.f32.gmra.mxu0 %v1191
    %v1580 = vpop.f32.mrf.mxu0
    %v1581 = vadd.f32 %v210, %v1580
    %1582 = vmatmul.f32.gmra.mxu0 %v1194
    %v1583 = vpop.f32.mrf.mxu0
    %v1584 = vadd.f32 %v210, %v1583
    %1585 = vmatmul.f32.gmra.mxu0 %v1197
    %v1586 = vpop.f32.mrf.mxu0
    %v1587 = vadd.f32 %v210, %v1586
    %1588 = vmatmul.f32.gmra.mxu0 %v1200
    %v1589 = vpop.f32.mrf.mxu0
    %v1590 = vadd.f32 %v210, %v1589
    %1591 = vmatmul.f32.gmra.mxu0 %v1203
    %v1592 = vpop.f32.mrf.mxu0
    %v1593 = vadd.f32 %v210, %v1592
    %1594 = vmatmul.f32.gmra.mxu0 %v1206
    %v1595 = vpop.f32.mrf.mxu0
    %v1596 = vadd.f32 %v210, %v1595
    %1597 = vdwg.mxu0
    %1598 = vmatpush.msra.mxu0 0.0
    %1599 = vmatpush.msra.mxu0 0.0
    %1600 = vmatpush.msra.mxu0 0.0
    %1601 = vmatpush.msra.mxu0 0.0
    %1602 = vmatpush.msra.mxu0 0.0
    %1603 = vmatpush.msra.mxu0 0.0
    %1604 = vmatpush.msra.mxu0 0.0
    %1605 = vmatpush.msra.mxu0 0.0
    %1606 = vmatpush.msra.mxu0 0.0
    %1607 = vmatpush.msra.mxu0 0.0
    %1608 = vmatpush.msra.mxu0 0.0
    %1609 = vmatpush.msra.mxu0 0.0
    %1610 = vmatpush.msra.mxu0 0.0
    %1611 = vmatpush.msra.mxu0 0.0
    %1612 = vmatpush.msra.mxu0 0.0
    %1613 = vmatpush.msra.mxu0 %v68
    %1614 = vmatmul.f32.gmra.mxu0 %v1161
    %v1615 = vpop.f32.mrf.mxu0
    %v1616 = vadd.f32 %v211, %v1615
    %1617 = vmatmul.f32.gmra.mxu0 %v1164
    %v1618 = vpop.f32.mrf.mxu0
    %v1619 = vadd.f32 %v211, %v1618
    %1620 = vmatmul.f32.gmra.mxu0 %v1167
    %v1621 = vpop.f32.mrf.mxu0
    %v1622 = vadd.f32 %v211, %v1621
    %1623 = vmatmul.f32.gmra.mxu0 %v1170
    %v1624 = vpop.f32.mrf.mxu0
    %v1625 = vadd.f32 %v211, %v1624
    %1626 = vmatmul.f32.gmra.mxu0 %v1173
    %v1627 = vpop.f32.mrf.mxu0
    %v1628 = vadd.f32 %v211, %v1627
    %1629 = vmatmul.f32.gmra.mxu0 %v1176
    %v1630 = vpop.f32.mrf.mxu0
    %v1631 = vadd.f32 %v211, %v1630
    %1632 = vmatmul.f32.gmra.mxu0 %v1179
    %v1633 = vpop.f32.mrf.mxu0
    %v1634 = vadd.f32 %v211, %v1633
    %1635 = vmatmul.f32.gmra.mxu0 %v1182
    %v1636 = vpop.f32.mrf.mxu0
    %v1637 = vadd.f32 %v211, %v1636
    %1638 = vmatmul.f32.gmra.mxu0 %v1185
    %v1639 = vpop.f32.mrf.mxu0
    %v1640 = vadd.f32 %v211, %v1639
    %1641 = vmatmul.f32.gmra.mxu0 %v1188
    %v1642 = vpop.f32.mrf.mxu0
    %v1643 = vadd.f32 %v211, %v1642
    %1644 = vmatmul.f32.gmra.mxu0 %v1191
    %v1645 = vpop.f32.mrf.mxu0
    %v1646 = vadd.f32 %v211, %v1645
    %1647 = vmatmul.f32.gmra.mxu0 %v1194
    %v1648 = vpop.f32.mrf.mxu0
    %v1649 = vadd.f32 %v211, %v1648
    %1650 = vmatmul.f32.gmra.mxu0 %v1197
    %v1651 = vpop.f32.mrf.mxu0
    %v1652 = vadd.f32 %v211, %v1651
    %1653 = vmatmul.f32.gmra.mxu0 %v1200
    %v1654 = vpop.f32.mrf.mxu0
    %v1655 = vadd.f32 %v211, %v1654
    %1656 = vmatmul.f32.gmra.mxu0 %v1203
    %v1657 = vpop.f32.mrf.mxu0
    %v1658 = vadd.f32 %v211, %v1657
    %1659 = vmatmul.f32.gmra.mxu0 %v1206
    %v1660 = vpop.f32.mrf.mxu0
    %v1661 = vadd.f32 %v211, %v1660
    %1662 = vdwg.mxu0
    %1663 = vmatpush.msra.mxu0 0.0
    %1664 = vmatpush.msra.mxu0 0.0
    %1665 = vmatpush.msra.mxu0 0.0
    %1666 = vmatpush.msra.mxu0 0.0
    %1667 = vmatpush.msra.mxu0 0.0
    %1668 = vmatpush.msra.mxu0 0.0
    %1669 = vmatpush.msra.mxu0 0.0
    %1670 = vmatpush.msra.mxu0 0.0
    %1671 = vmatpush.msra.mxu0 0.0
    %1672 = vmatpush.msra.mxu0 0.0
    %1673 = vmatpush.msra.mxu0 0.0
    %1674 = vmatpush.msra.mxu0 0.0
    %1675 = vmatpush.msra.mxu0 0.0
    %1676 = vmatpush.msra.mxu0 0.0
    %1677 = vmatpush.msra.mxu0 0.0
    %1678 = vmatpush.msra.mxu0 %v69
    %1679 = vmatmul.f32.gmra.mxu0 %v1161
    %v1680 = vpop.f32.mrf.mxu0
    %v1681 = vadd.f32 %v212, %v1680
    %1682 = vmatmul.f32.gmra.mxu0 %v1164
    %v1683 = vpop.f32.mrf.mxu0
    %v1684 = vadd.f32 %v212, %v1683
    %1685 = vmatmul.f32.gmra.mxu0 %v1167
    %v1686 = vpop.f32.mrf.mxu0
    %v1687 = vadd.f32 %v212, %v1686
    %1688 = vmatmul.f32.gmra.mxu0 %v1170
    %v1689 = vpop.f32.mrf.mxu0
    %v1690 = vadd.f32 %v212, %v1689
    %1691 = vmatmul.f32.gmra.mxu0 %v1173
    %v1692 = vpop.f32.mrf.mxu0
    %v1693 = vadd.f32 %v212, %v1692
    %1694 = vmatmul.f32.gmra.mxu0 %v1176
    %v1695 = vpop.f32.mrf.mxu0
    %v1696 = vadd.f32 %v212, %v1695
    %1697 = vmatmul.f32.gmra.mxu0 %v1179
    %v1698 = vpop.f32.mrf.mxu0
    %v1699 = vadd.f32 %v212, %v1698
    %1700 = vmatmul.f32.gmra.mxu0 %v1182
    %v1701 = vpop.f32.mrf.mxu0
    %v1702 = vadd.f32 %v212, %v1701
    %1703 = vmatmul.f32.gmra.mxu0 %v1185
    %v1704 = vpop.f32.mrf.mxu0
    %v1705 = vadd.f32 %v212, %v1704
    %1706 = vmatmul.f32.gmra.mxu0 %v1188
    %v1707 = vpop.f32.mrf.mxu0
    %v1708 = vadd.f32 %v212, %v1707
    %1709 = vmatmul.f32.gmra.mxu0 %v1191
    %v1710 = vpop.f32.mrf.mxu0
    %v1711 = vadd.f32 %v212, %v1710
    %1712 = vmatmul.f32.gmra.mxu0 %v1194
    %v1713 = vpop.f32.mrf.mxu0
    %v1714 = vadd.f32 %v212, %v1713
    %1715 = vmatmul.f32.gmra.mxu0 %v1197
    %v1716 = vpop.f32.mrf.mxu0
    %v1717 = vadd.f32 %v212, %v1716
    %1718 = vmatmul.f32.gmra.mxu0 %v1200
    %v1719 = vpop.f32.mrf.mxu0
    %v1720 = vadd.f32 %v212, %v1719
    %1721 = vmatmul.f32.gmra.mxu0 %v1203
    %v1722 = vpop.f32.mrf.mxu0
    %v1723 = vadd.f32 %v212, %v1722
    %1724 = vmatmul.f32.gmra.mxu0 %v1206
    %v1725 = vpop.f32.mrf.mxu0
    %v1726 = vadd.f32 %v212, %v1725
    %1727 = vdwg.mxu0
    %v1728 = vmax.f32 %v1226, 0.0
    %v1729 = vmax.f32 %v1291, 0.0
    %v1730 = vmax.f32 %v1356, 0.0
    %v1731 = vmax.f32 %v1421, 0.0
    %v1732 = vmax.f32 %v1486, 0.0
    %v1733 = vmax.f32 %v1551, 0.0
    %v1734 = vmax.f32 %v1616, 0.0
    %v1735 = vmax.f32 %v1681, 0.0
    %v1736 = vmax.f32 %v1229, 0.0
    %v1737 = vmax.f32 %v1294, 0.0
    %v1738 = vmax.f32 %v1359, 0.0
    %v1739 = vmax.f32 %v1424, 0.0
    %v1740 = vmax.f32 %v1489, 0.0
    %v1741 = vmax.f32 %v1554, 0.0
    %v1742 = vmax.f32 %v1619, 0.0
    %v1743 = vmax.f32 %v1684, 0.0
    %v1744 = vmax.f32 %v1232, 0.0
    %v1745 = vmax.f32 %v1297, 0.0
    %v1746 = vmax.f32 %v1362, 0.0
    %v1747 = vmax.f32 %v1427, 0.0
    %v1748 = vmax.f32 %v1492, 0.0
    %v1749 = vmax.f32 %v1557, 0.0
    %v1750 = vmax.f32 %v1622, 0.0
    %v1751 = vmax.f32 %v1687, 0.0
    %v1752 = vmax.f32 %v1235, 0.0
    %v1753 = vmax.f32 %v1300, 0.0
    %v1754 = vmax.f32 %v1365, 0.0
    %v1755 = vmax.f32 %v1430, 0.0
    %v1756 = vmax.f32 %v1495, 0.0
    %v1757 = vmax.f32 %v1560, 0.0
    %v1758 = vmax.f32 %v1625, 0.0
    %v1759 = vmax.f32 %v1690, 0.0
    %v1760 = vmax.f32 %v1238, 0.0
    %v1761 = vmax.f32 %v1303, 0.0
    %v1762 = vmax.f32 %v1368, 0.0
    %v1763 = vmax.f32 %v1433, 0.0
    %v1764 = vmax.f32 %v1498, 0.0
    %v1765 = vmax.f32 %v1563, 0.0
    %v1766 = vmax.f32 %v1628, 0.0
    %v1767 = vmax.f32 %v1693, 0.0
    %v1768 = vmax.f32 %v1241, 0.0
    %v1769 = vmax.f32 %v1306, 0.0
    %v1770 = vmax.f32 %v1371, 0.0
    %v1771 = vmax.f32 %v1436, 0.0
    %v1772 = vmax.f32 %v1501, 0.0
    %v1773 = vmax.f32 %v1566, 0.0
    %v1774 = vmax.f32 %v1631, 0.0
    %v1775 = vmax.f32 %v1696, 0.0
    %v1776 = vmax.f32 %v1244, 0.0
    %v1777 = vmax.f32 %v1309, 0.0
    %v1778 = vmax.f32 %v1374, 0.0
    %v1779 = vmax.f32 %v1439, 0.0
    %v1780 = vmax.f32 %v1504, 0.0
    %v1781 = vmax.f32 %v1569, 0.0
    %v1782 = vmax.f32 %v1634, 0.0
    %v1783 = vmax.f32 %v1699, 0.0
    %v1784 = vmax.f32 %v1247, 0.0
    %v1785 = vmax.f32 %v1312, 0.0
    %v1786 = vmax.f32 %v1377, 0.0
    %v1787 = vmax.f32 %v1442, 0.0
    %v1788 = vmax.f32 %v1507, 0.0
    %v1789 = vmax.f32 %v1572, 0.0
    %v1790 = vmax.f32 %v1637, 0.0
    %v1791 = vmax.f32 %v1702, 0.0
    %v1792 = vmax.f32 %v1250, 0.0
    %v1793 = vmax.f32 %v1315, 0.0
    %v1794 = vmax.f32 %v1380, 0.0
    %v1795 = vmax.f32 %v1445, 0.0
    %v1796 = vmax.f32 %v1510, 0.0
    %v1797 = vmax.f32 %v1575, 0.0
    %v1798 = vmax.f32 %v1640, 0.0
    %v1799 = vmax.f32 %v1705, 0.0
    %v1800 = vmax.f32 %v1253, 0.0
    %v1801 = vmax.f32 %v1318, 0.0
    %v1802 = vmax.f32 %v1383, 0.0
    %v1803 = vmax.f32 %v1448, 0.0
    %v1804 = vmax.f32 %v1513, 0.0
    %v1805 = vmax.f32 %v1578, 0.0
    %v1806 = vmax.f32 %v1643, 0.0
    %v1807 = vmax.f32 %v1708, 0.0
    %v1808 = vmax.f32 %v1256, 0.0
    %v1809 = vmax.f32 %v1321, 0.0
    %v1810 = vmax.f32 %v1386, 0.0
    %v1811 = vmax.f32 %v1451, 0.0
    %v1812 = vmax.f32 %v1516, 0.0
    %v1813 = vmax.f32 %v1581, 0.0
    %v1814 = vmax.f32 %v1646, 0.0
    %v1815 = vmax.f32 %v1711, 0.0
    %v1816 = vmax.f32 %v1259, 0.0
    %v1817 = vmax.f32 %v1324, 0.0
    %v1818 = vmax.f32 %v1389, 0.0
    %v1819 = vmax.f32 %v1454, 0.0
    %v1820 = vmax.f32 %v1519, 0.0
    %v1821 = vmax.f32 %v1584, 0.0
    %v1822 = vmax.f32 %v1649, 0.0
    %v1823 = vmax.f32 %v1714, 0.0
    %v1824 = vmax.f32 %v1262, 0.0
    %v1825 = vmax.f32 %v1327, 0.0
    %v1826 = vmax.f32 %v1392, 0.0
    %v1827 = vmax.f32 %v1457, 0.0
    %v1828 = vmax.f32 %v1522, 0.0
    %v1829 = vmax.f32 %v1587, 0.0
    %v1830 = vmax.f32 %v1652, 0.0
    %v1831 = vmax.f32 %v1717, 0.0
    %v1832 = vmax.f32 %v1265, 0.0
    %v1833 = vmax.f32 %v1330, 0.0
    %v1834 = vmax.f32 %v1395, 0.0
    %v1835 = vmax.f32 %v1460, 0.0
    %v1836 = vmax.f32 %v1525, 0.0
    %v1837 = vmax.f32 %v1590, 0.0
    %v1838 = vmax.f32 %v1655, 0.0
    %v1839 = vmax.f32 %v1720, 0.0
    %v1840 = vmax.f32 %v1268, 0.0
    %v1841 = vmax.f32 %v1333, 0.0
    %v1842 = vmax.f32 %v1398, 0.0
    %v1843 = vmax.f32 %v1463, 0.0
    %v1844 = vmax.f32 %v1528, 0.0
    %v1845 = vmax.f32 %v1593, 0.0
    %v1846 = vmax.f32 %v1658, 0.0
    %v1847 = vmax.f32 %v1723, 0.0
    %v1848 = vmax.f32 %v1271, 0.0
    %v1849 = vmax.f32 %v1336, 0.0
    %v1850 = vmax.f32 %v1401, 0.0
    %v1851 = vmax.f32 %v1466, 0.0
    %v1852 = vmax.f32 %v1531, 0.0
    %v1853 = vmax.f32 %v1596, 0.0
    %v1854 = vmax.f32 %v1661, 0.0
    %v1855 = vmax.f32 %v1726, 0.0
    %v1856 = vadd.f32 %v1728, %v1736
    %v1857 = vadd.f32 %v1856, %v1744
    %v1858 = vadd.f32 %v1857, %v1752
    %v1859 = vadd.f32 %v1858, %v1760
    %v1860 = vadd.f32 %v1859, %v1768
    %v1861 = vadd.f32 %v1860, %v1776
    %v1862 = vadd.f32 %v1861, %v1784
    %v1863 = vadd.f32 %v1862, %v1792
    %v1864 = vadd.f32 %v1863, %v1800
    %v1865 = vadd.f32 %v1864, %v1808
    %v1866 = vadd.f32 %v1865, %v1816
    %v1867 = vadd.f32 %v1866, %v1824
    %v1868 = vadd.f32 %v1867, %v1832
    %v1869 = vadd.f32 %v1868, %v1840
    %v1870 = vadd.f32 %v1869, %v1848
    %v1871 = vrot.slane %v1870, 4
    %v1872 = vadd.f32 %v1870, %v1871
    %v1873 = vrot.slane %v1872, 2
    %v1874 = vadd.f32 %v1872, %v1873
    %v1875 = vrot.slane %v1874, 1
    %v1876 = vadd.f32 %v1874, %v1875
    %v1877 = vadd.f32 %v1729, %v1737
    %v1878 = vadd.f32 %v1877, %v1745
    %v1879 = vadd.f32 %v1878, %v1753
    %v1880 = vadd.f32 %v1879, %v1761
    %v1881 = vadd.f32 %v1880, %v1769
    %v1882 = vadd.f32 %v1881, %v1777
    %v1883 = vadd.f32 %v1882, %v1785
    %v1884 = vadd.f32 %v1883, %v1793
    %v1885 = vadd.f32 %v1884, %v1801
    %v1886 = vadd.f32 %v1885, %v1809
    %v1887 = vadd.f32 %v1886, %v1817
    %v1888 = vadd.f32 %v1887, %v1825
    %v1889 = vadd.f32 %v1888, %v1833
    %v1890 = vadd.f32 %v1889, %v1841
    %v1891 = vadd.f32 %v1890, %v1849
    %v1892 = vrot.slane %v1891, 4
    %v1893 = vadd.f32 %v1891, %v1892
    %v1894 = vrot.slane %v1893, 2
    %v1895 = vadd.f32 %v1893, %v1894
    %v1896 = vrot.slane %v1895, 1
    %v1897 = vadd.f32 %v1895, %v1896
    %v1898 = vadd.f32 %v1730, %v1738
    %v1899 = vadd.f32 %v1898, %v1746
    %v1900 = vadd.f32 %v1899, %v1754
    %v1901 = vadd.f32 %v1900, %v1762
    %v1902 = vadd.f32 %v1901, %v1770
    %v1903 = vadd.f32 %v1902, %v1778
    %v1904 = vadd.f32 %v1903, %v1786
    %v1905 = vadd.f32 %v1904, %v1794
    %v1906 = vadd.f32 %v1905, %v1802
    %v1907 = vadd.f32 %v1906, %v1810
    %v1908 = vadd.f32 %v1907, %v1818
    %v1909 = vadd.f32 %v1908, %v1826
    %v1910 = vadd.f32 %v1909, %v1834
    %v1911 = vadd.f32 %v1910, %v1842
    %v1912 = vadd.f32 %v1911, %v1850
    %v1913 = vrot.slane %v1912, 4
    %v1914 = vadd.f32 %v1912, %v1913
    %v1915 = vrot.slane %v1914, 2
    %v1916 = vadd.f32 %v1914, %v1915
    %v1917 = vrot.slane %v1916, 1
    %v1918 = vadd.f32 %v1916, %v1917
    %v1919 = vadd.f32 %v1731, %v1739
    %v1920 = vadd.f32 %v1919, %v1747
    %v1921 = vadd.f32 %v1920, %v1755
    %v1922 = vadd.f32 %v1921, %v1763
    %v1923 = vadd.f32 %v1922, %v1771
    %v1924 = vadd.f32 %v1923, %v1779
    %v1925 = vadd.f32 %v1924, %v1787
    %v1926 = vadd.f32 %v1925, %v1795
    %v1927 = vadd.f32 %v1926, %v1803
    %v1928 = vadd.f32 %v1927, %v1811
    %v1929 = vadd.f32 %v1928, %v1819
    %v1930 = vadd.f32 %v1929, %v1827
    %v1931 = vadd.f32 %v1930, %v1835
    %v1932 = vadd.f32 %v1931, %v1843
    %v1933 = vadd.f32 %v1932, %v1851
    %v1934 = vrot.slane %v1933, 4
    %v1935 = vadd.f32 %v1933, %v1934
    %v1936 = vrot.slane %v1935, 2
    %v1937 = vadd.f32 %v1935, %v1936
    %v1938 = vrot.slane %v1937, 1
    %v1939 = vadd.f32 %v1937, %v1938
    %v1940 = vadd.f32 %v1732, %v1740
    %v1941 = vadd.f32 %v1940, %v1748
    %v1942 = vadd.f32 %v1941, %v1756
    %v1943 = vadd.f32 %v1942, %v1764
    %v1944 = vadd.f32 %v1943, %v1772
    %v1945 = vadd.f32 %v1944, %v1780
    %v1946 = vadd.f32 %v1945, %v1788
    %v1947 = vadd.f32 %v1946, %v1796
    %v1948 = vadd.f32 %v1947, %v1804
    %v1949 = vadd.f32 %v1948, %v1812
    %v1950 = vadd.f32 %v1949, %v1820
    %v1951 = vadd.f32 %v1950, %v1828
    %v1952 = vadd.f32 %v1951, %v1836
    %v1953 = vadd.f32 %v1952, %v1844
    %v1954 = vadd.f32 %v1953, %v1852
    %v1955 = vrot.slane %v1954, 4
    %v1956 = vadd.f32 %v1954, %v1955
    %v1957 = vrot.slane %v1956, 2
    %v1958 = vadd.f32 %v1956, %v1957
    %v1959 = vrot.slane %v1958, 1
    %v1960 = vadd.f32 %v1958, %v1959
    %v1961 = vadd.f32 %v1733, %v1741
    %v1962 = vadd.f32 %v1961, %v1749
    %v1963 = vadd.f32 %v1962, %v1757
    %v1964 = vadd.f32 %v1963, %v1765
    %v1965 = vadd.f32 %v1964, %v1773
    %v1966 = vadd.f32 %v1965, %v1781
    %v1967 = vadd.f32 %v1966, %v1789
    %v1968 = vadd.f32 %v1967, %v1797
    %v1969 = vadd.f32 %v1968, %v1805
    %v1970 = vadd.f32 %v1969, %v1813
    %v1971 = vadd.f32 %v1970, %v1821
    %v1972 = vadd.f32 %v1971, %v1829
    %v1973 = vadd.f32 %v1972, %v1837
    %v1974 = vadd.f32 %v1973, %v1845
    %v1975 = vadd.f32 %v1974, %v1853
    %v1976 = vrot.slane %v1975, 4
    %v1977 = vadd.f32 %v1975, %v1976
    %v1978 = vrot.slane %v1977, 2
    %v1979 = vadd.f32 %v1977, %v1978
    %v1980 = vrot.slane %v1979, 1
    %v1981 = vadd.f32 %v1979, %v1980
    %v1982 = vadd.f32 %v1734, %v1742
    %v1983 = vadd.f32 %v1982, %v1750
    %v1984 = vadd.f32 %v1983, %v1758
    %v1985 = vadd.f32 %v1984, %v1766
    %v1986 = vadd.f32 %v1985, %v1774
    %v1987 = vadd.f32 %v1986, %v1782
    %v1988 = vadd.f32 %v1987, %v1790
    %v1989 = vadd.f32 %v1988, %v1798
    %v1990 = vadd.f32 %v1989, %v1806
    %v1991 = vadd.f32 %v1990, %v1814
    %v1992 = vadd.f32 %v1991, %v1822
    %v1993 = vadd.f32 %v1992, %v1830
    %v1994 = vadd.f32 %v1993, %v1838
    %v1995 = vadd.f32 %v1994, %v1846
    %v1996 = vadd.f32 %v1995, %v1854
    %v1997 = vrot.slane %v1996, 4
    %v1998 = vadd.f32 %v1996, %v1997
    %v1999 = vrot.slane %v1998, 2
    %v2000 = vadd.f32 %v1998, %v1999
    %v2001 = vrot.slane %v2000, 1
    %v2002 = vadd.f32 %v2000, %v2001
    %v2003 = vadd.f32 %v1735, %v1743
    %v2004 = vadd.f32 %v2003, %v1751
    %v2005 = vadd.f32 %v2004, %v1759
    %v2006 = vadd.f32 %v2005, %v1767
    %v2007 = vadd.f32 %v2006, %v1775
    %v2008 = vadd.f32 %v2007, %v1783
    %v2009 = vadd.f32 %v2008, %v1791
    %v2010 = vadd.f32 %v2009, %v1799
    %v2011 = vadd.f32 %v2010, %v1807
    %v2012 = vadd.f32 %v2011, %v1815
    %v2013 = vadd.f32 %v2012, %v1823
    %v2014 = vadd.f32 %v2013, %v1831
    %v2015 = vadd.f32 %v2014, %v1839
    %v2016 = vadd.f32 %v2015, %v1847
    %v2017 = vadd.f32 %v2016, %v1855
    %v2018 = vrot.slane %v2017, 4
    %v2019 = vadd.f32 %v2017, %v2018
    %v2020 = vrot.slane %v2019, 2
    %v2021 = vadd.f32 %v2019, %v2020
    %v2022 = vrot.slane %v2021, 1
    %v2023 = vadd.f32 %v2021, %v2022
    %v2024 = vadd.f32 %v1086, %v1876
    %v2025 = vadd.f32 %v1087, %v1897
    %v2026 = vadd.f32 %v1088, %v1918
    %v2027 = vadd.f32 %v1089, %v1939
    %v2028 = vadd.f32 %v1090, %v1960
    %v2029 = vadd.f32 %v1091, %v1981
    %v2030 = vadd.f32 %v1092, %v2002
    %v2031 = vadd.f32 %v1093, %v2023
    %vm2032 = vcmp.eq.s32.totalorder %v72, 0
    %v2033 = vsel %vm2032, 1.0, 0.0
    %v2034 = vmul.f32 %v2033, %v2024
    %v2035 = vmul.f32 %v2033, %v2025
    %v2036 = vmul.f32 %v2033, %v2026
    %v2037 = vmul.f32 %v2033, %v2027
    %v2038 = vmul.f32 %v2033, %v2028
    %v2039 = vmul.f32 %v2033, %v2029
    %v2040 = vmul.f32 %v2033, %v2030
    %v2041 = vmul.f32 %v2033, %v2031
    %v2042 = vadd.f32 %v2034, 0.0
    %v2043 = vadd.f32 %v2035, 0.0
    %v2044 = vadd.f32 %v2036, 0.0
    %v2045 = vadd.f32 %v2037, 0.0
    %v2046 = vadd.f32 %v2038, 0.0
    %v2047 = vadd.f32 %v2039, 0.0
    %v2048 = vadd.f32 %v2040, 0.0
    %v2049 = vadd.f32 %v2041, 0.0
    %s2050 = scalar_lea.vmem %s0, 16
    %v2051 = vld [vmem:[%s2050] sm:$0xff]
    %2052 = vmatpush.xpose.msra.mxu0 0.0
    %2053 = vmatpush.xpose.msra.mxu0 0.0
    %2054 = vmatpush.xpose.msra.mxu0 0.0
    %2055 = vmatpush.xpose.msra.mxu0 0.0
    %2056 = vmatpush.xpose.msra.mxu0 0.0
    %2057 = vmatpush.xpose.msra.mxu0 0.0
    %2058 = vmatpush.xpose.msra.mxu0 0.0
    %2059 = vmatpush.xpose.msra.mxu0 0.0
    %2060 = vmatpush.xpose.msra.mxu0 0.0
    %2061 = vmatpush.xpose.msra.mxu0 0.0
    %2062 = vmatpush.xpose.msra.mxu0 0.0
    %2063 = vmatpush.xpose.msra.mxu0 0.0
    %2064 = vmatpush.xpose.msra.mxu0 0.0
    %2065 = vmatpush.xpose.msra.mxu0 0.0
    %2066 = vmatpush.xpose.msra.mxu0 0.0
    %2067 = vmatpush.xpose.msra.mxu0 %v2051
    %2068 = vmatmul.f32.gmra.mxu0 %v122
    %v2069 = vpop.f32.mrf.mxu0
    %v2070 = vadd.f32 0.0, %v2069
    %2071 = vmatmul.f32.gmra.mxu0 %v123
    %v2072 = vpop.f32.mrf.mxu0
    %v2073 = vadd.f32 0.0, %v2072
    %2074 = vmatmul.f32.gmra.mxu0 %v124
    %v2075 = vpop.f32.mrf.mxu0
    %v2076 = vadd.f32 0.0, %v2075
    %2077 = vmatmul.f32.gmra.mxu0 %v125
    %v2078 = vpop.f32.mrf.mxu0
    %v2079 = vadd.f32 0.0, %v2078
    %2080 = vmatmul.f32.gmra.mxu0 %v126
    %v2081 = vpop.f32.mrf.mxu0
    %v2082 = vadd.f32 0.0, %v2081
    %2083 = vmatmul.f32.gmra.mxu0 %v127
    %v2084 = vpop.f32.mrf.mxu0
    %v2085 = vadd.f32 0.0, %v2084
    %2086 = vmatmul.f32.gmra.mxu0 %v128
    %v2087 = vpop.f32.mrf.mxu0
    %v2088 = vadd.f32 0.0, %v2087
    %2089 = vmatmul.f32.gmra.mxu0 %v129
    %v2090 = vpop.f32.mrf.mxu0
    %v2091 = vadd.f32 0.0, %v2090
    %2092 = vmatmul.f32.gmra.mxu0 %v130
    %v2093 = vpop.f32.mrf.mxu0
    %v2094 = vadd.f32 0.0, %v2093
    %2095 = vmatmul.f32.gmra.mxu0 %v131
    %v2096 = vpop.f32.mrf.mxu0
    %v2097 = vadd.f32 0.0, %v2096
    %2098 = vmatmul.f32.gmra.mxu0 %v132
    %v2099 = vpop.f32.mrf.mxu0
    %v2100 = vadd.f32 0.0, %v2099
    %2101 = vmatmul.f32.gmra.mxu0 %v133
    %v2102 = vpop.f32.mrf.mxu0
    %v2103 = vadd.f32 0.0, %v2102
    %2104 = vmatmul.f32.gmra.mxu0 %v134
    %v2105 = vpop.f32.mrf.mxu0
    %v2106 = vadd.f32 0.0, %v2105
    %2107 = vmatmul.f32.gmra.mxu0 %v135
    %v2108 = vpop.f32.mrf.mxu0
    %v2109 = vadd.f32 0.0, %v2108
    %2110 = vmatmul.f32.gmra.mxu0 %v136
    %v2111 = vpop.f32.mrf.mxu0
    %v2112 = vadd.f32 0.0, %v2111
    %2113 = vmatmul.f32.gmra.mxu0 %v137
    %v2114 = vpop.f32.mrf.mxu0
    %v2115 = vadd.f32 0.0, %v2114
    %2116 = vdwg.mxu0
    %v2118 = vsel %vm221, %v2070, 0
    %v2121 = vsel %vm221, %v2073, 0
    %v2124 = vsel %vm221, %v2076, 0
    %v2127 = vsel %vm221, %v2079, 0
    %v2130 = vsel %vm221, %v2082, 0
    %v2133 = vsel %vm221, %v2085, 0
    %v2136 = vsel %vm221, %v2088, 0
    %v2139 = vsel %vm221, %v2091, 0
    %v2142 = vsel %vm221, %v2094, 0
    %v2145 = vsel %vm221, %v2097, 0
    %v2148 = vsel %vm221, %v2100, 0
    %v2151 = vsel %vm221, %v2103, 0
    %v2154 = vsel %vm221, %v2106, 0
    %v2157 = vsel %vm221, %v2109, 0
    %v2160 = vsel %vm221, %v2112, 0
    %v2163 = vsel %vm221, %v2115, 0
    %2165 = vmatpush.msra.mxu0 0.0
    %2166 = vmatpush.msra.mxu0 0.0
    %2167 = vmatpush.msra.mxu0 0.0
    %2168 = vmatpush.msra.mxu0 0.0
    %2169 = vmatpush.msra.mxu0 0.0
    %2170 = vmatpush.msra.mxu0 0.0
    %2171 = vmatpush.msra.mxu0 0.0
    %2172 = vmatpush.msra.mxu0 0.0
    %2173 = vmatpush.msra.mxu0 0.0
    %2174 = vmatpush.msra.mxu0 0.0
    %2175 = vmatpush.msra.mxu0 0.0
    %2176 = vmatpush.msra.mxu0 0.0
    %2177 = vmatpush.msra.mxu0 0.0
    %2178 = vmatpush.msra.mxu0 0.0
    %2179 = vmatpush.msra.mxu0 0.0
    %2180 = vmatpush.msra.mxu0 %v62
    %2181 = vmatmul.f32.gmra.mxu0 %v2118
    %v2182 = vpop.f32.mrf.mxu0
    %v2183 = vadd.f32 %v205, %v2182
    %2184 = vmatmul.f32.gmra.mxu0 %v2121
    %v2185 = vpop.f32.mrf.mxu0
    %v2186 = vadd.f32 %v205, %v2185
    %2187 = vmatmul.f32.gmra.mxu0 %v2124
    %v2188 = vpop.f32.mrf.mxu0
    %v2189 = vadd.f32 %v205, %v2188
    %2190 = vmatmul.f32.gmra.mxu0 %v2127
    %v2191 = vpop.f32.mrf.mxu0
    %v2192 = vadd.f32 %v205, %v2191
    %2193 = vmatmul.f32.gmra.mxu0 %v2130
    %v2194 = vpop.f32.mrf.mxu0
    %v2195 = vadd.f32 %v205, %v2194
    %2196 = vmatmul.f32.gmra.mxu0 %v2133
    %v2197 = vpop.f32.mrf.mxu0
    %v2198 = vadd.f32 %v205, %v2197
    %2199 = vmatmul.f32.gmra.mxu0 %v2136
    %v2200 = vpop.f32.mrf.mxu0
    %v2201 = vadd.f32 %v205, %v2200
    %2202 = vmatmul.f32.gmra.mxu0 %v2139
    %v2203 = vpop.f32.mrf.mxu0
    %v2204 = vadd.f32 %v205, %v2203
    %2205 = vmatmul.f32.gmra.mxu0 %v2142
    %v2206 = vpop.f32.mrf.mxu0
    %v2207 = vadd.f32 %v205, %v2206
    %2208 = vmatmul.f32.gmra.mxu0 %v2145
    %v2209 = vpop.f32.mrf.mxu0
    %v2210 = vadd.f32 %v205, %v2209
    %2211 = vmatmul.f32.gmra.mxu0 %v2148
    %v2212 = vpop.f32.mrf.mxu0
    %v2213 = vadd.f32 %v205, %v2212
    %2214 = vmatmul.f32.gmra.mxu0 %v2151
    %v2215 = vpop.f32.mrf.mxu0
    %v2216 = vadd.f32 %v205, %v2215
    %2217 = vmatmul.f32.gmra.mxu0 %v2154
    %v2218 = vpop.f32.mrf.mxu0
    %v2219 = vadd.f32 %v205, %v2218
    %2220 = vmatmul.f32.gmra.mxu0 %v2157
    %v2221 = vpop.f32.mrf.mxu0
    %v2222 = vadd.f32 %v205, %v2221
    %2223 = vmatmul.f32.gmra.mxu0 %v2160
    %v2224 = vpop.f32.mrf.mxu0
    %v2225 = vadd.f32 %v205, %v2224
    %2226 = vmatmul.f32.gmra.mxu0 %v2163
    %v2227 = vpop.f32.mrf.mxu0
    %v2228 = vadd.f32 %v205, %v2227
    %2229 = vdwg.mxu0
    %2230 = vmatpush.msra.mxu0 0.0
    %2231 = vmatpush.msra.mxu0 0.0
    %2232 = vmatpush.msra.mxu0 0.0
    %2233 = vmatpush.msra.mxu0 0.0
    %2234 = vmatpush.msra.mxu0 0.0
    %2235 = vmatpush.msra.mxu0 0.0
    %2236 = vmatpush.msra.mxu0 0.0
    %2237 = vmatpush.msra.mxu0 0.0
    %2238 = vmatpush.msra.mxu0 0.0
    %2239 = vmatpush.msra.mxu0 0.0
    %2240 = vmatpush.msra.mxu0 0.0
    %2241 = vmatpush.msra.mxu0 0.0
    %2242 = vmatpush.msra.mxu0 0.0
    %2243 = vmatpush.msra.mxu0 0.0
    %2244 = vmatpush.msra.mxu0 0.0
    %2245 = vmatpush.msra.mxu0 %v63
    %2246 = vmatmul.f32.gmra.mxu0 %v2118
    %v2247 = vpop.f32.mrf.mxu0
    %v2248 = vadd.f32 %v206, %v2247
    %2249 = vmatmul.f32.gmra.mxu0 %v2121
    %v2250 = vpop.f32.mrf.mxu0
    %v2251 = vadd.f32 %v206, %v2250
    %2252 = vmatmul.f32.gmra.mxu0 %v2124
    %v2253 = vpop.f32.mrf.mxu0
    %v2254 = vadd.f32 %v206, %v2253
    %2255 = vmatmul.f32.gmra.mxu0 %v2127
    %v2256 = vpop.f32.mrf.mxu0
    %v2257 = vadd.f32 %v206, %v2256
    %2258 = vmatmul.f32.gmra.mxu0 %v2130
    %v2259 = vpop.f32.mrf.mxu0
    %v2260 = vadd.f32 %v206, %v2259
    %2261 = vmatmul.f32.gmra.mxu0 %v2133
    %v2262 = vpop.f32.mrf.mxu0
    %v2263 = vadd.f32 %v206, %v2262
    %2264 = vmatmul.f32.gmra.mxu0 %v2136
    %v2265 = vpop.f32.mrf.mxu0
    %v2266 = vadd.f32 %v206, %v2265
    %2267 = vmatmul.f32.gmra.mxu0 %v2139
    %v2268 = vpop.f32.mrf.mxu0
    %v2269 = vadd.f32 %v206, %v2268
    %2270 = vmatmul.f32.gmra.mxu0 %v2142
    %v2271 = vpop.f32.mrf.mxu0
    %v2272 = vadd.f32 %v206, %v2271
    %2273 = vmatmul.f32.gmra.mxu0 %v2145
    %v2274 = vpop.f32.mrf.mxu0
    %v2275 = vadd.f32 %v206, %v2274
    %2276 = vmatmul.f32.gmra.mxu0 %v2148
    %v2277 = vpop.f32.mrf.mxu0
    %v2278 = vadd.f32 %v206, %v2277
    %2279 = vmatmul.f32.gmra.mxu0 %v2151
    %v2280 = vpop.f32.mrf.mxu0
    %v2281 = vadd.f32 %v206, %v2280
    %2282 = vmatmul.f32.gmra.mxu0 %v2154
    %v2283 = vpop.f32.mrf.mxu0
    %v2284 = vadd.f32 %v206, %v2283
    %2285 = vmatmul.f32.gmra.mxu0 %v2157
    %v2286 = vpop.f32.mrf.mxu0
    %v2287 = vadd.f32 %v206, %v2286
    %2288 = vmatmul.f32.gmra.mxu0 %v2160
    %v2289 = vpop.f32.mrf.mxu0
    %v2290 = vadd.f32 %v206, %v2289
    %2291 = vmatmul.f32.gmra.mxu0 %v2163
    %v2292 = vpop.f32.mrf.mxu0
    %v2293 = vadd.f32 %v206, %v2292
    %2294 = vdwg.mxu0
    %2295 = vmatpush.msra.mxu0 0.0
    %2296 = vmatpush.msra.mxu0 0.0
    %2297 = vmatpush.msra.mxu0 0.0
    %2298 = vmatpush.msra.mxu0 0.0
    %2299 = vmatpush.msra.mxu0 0.0
    %2300 = vmatpush.msra.mxu0 0.0
    %2301 = vmatpush.msra.mxu0 0.0
    %2302 = vmatpush.msra.mxu0 0.0
    %2303 = vmatpush.msra.mxu0 0.0
    %2304 = vmatpush.msra.mxu0 0.0
    %2305 = vmatpush.msra.mxu0 0.0
    %2306 = vmatpush.msra.mxu0 0.0
    %2307 = vmatpush.msra.mxu0 0.0
    %2308 = vmatpush.msra.mxu0 0.0
    %2309 = vmatpush.msra.mxu0 0.0
    %2310 = vmatpush.msra.mxu0 %v64
    %2311 = vmatmul.f32.gmra.mxu0 %v2118
    %v2312 = vpop.f32.mrf.mxu0
    %v2313 = vadd.f32 %v207, %v2312
    %2314 = vmatmul.f32.gmra.mxu0 %v2121
    %v2315 = vpop.f32.mrf.mxu0
    %v2316 = vadd.f32 %v207, %v2315
    %2317 = vmatmul.f32.gmra.mxu0 %v2124
    %v2318 = vpop.f32.mrf.mxu0
    %v2319 = vadd.f32 %v207, %v2318
    %2320 = vmatmul.f32.gmra.mxu0 %v2127
    %v2321 = vpop.f32.mrf.mxu0
    %v2322 = vadd.f32 %v207, %v2321
    %2323 = vmatmul.f32.gmra.mxu0 %v2130
    %v2324 = vpop.f32.mrf.mxu0
    %v2325 = vadd.f32 %v207, %v2324
    %2326 = vmatmul.f32.gmra.mxu0 %v2133
    %v2327 = vpop.f32.mrf.mxu0
    %v2328 = vadd.f32 %v207, %v2327
    %2329 = vmatmul.f32.gmra.mxu0 %v2136
    %v2330 = vpop.f32.mrf.mxu0
    %v2331 = vadd.f32 %v207, %v2330
    %2332 = vmatmul.f32.gmra.mxu0 %v2139
    %v2333 = vpop.f32.mrf.mxu0
    %v2334 = vadd.f32 %v207, %v2333
    %2335 = vmatmul.f32.gmra.mxu0 %v2142
    %v2336 = vpop.f32.mrf.mxu0
    %v2337 = vadd.f32 %v207, %v2336
    %2338 = vmatmul.f32.gmra.mxu0 %v2145
    %v2339 = vpop.f32.mrf.mxu0
    %v2340 = vadd.f32 %v207, %v2339
    %2341 = vmatmul.f32.gmra.mxu0 %v2148
    %v2342 = vpop.f32.mrf.mxu0
    %v2343 = vadd.f32 %v207, %v2342
    %2344 = vmatmul.f32.gmra.mxu0 %v2151
    %v2345 = vpop.f32.mrf.mxu0
    %v2346 = vadd.f32 %v207, %v2345
    %2347 = vmatmul.f32.gmra.mxu0 %v2154
    %v2348 = vpop.f32.mrf.mxu0
    %v2349 = vadd.f32 %v207, %v2348
    %2350 = vmatmul.f32.gmra.mxu0 %v2157
    %v2351 = vpop.f32.mrf.mxu0
    %v2352 = vadd.f32 %v207, %v2351
    %2353 = vmatmul.f32.gmra.mxu0 %v2160
    %v2354 = vpop.f32.mrf.mxu0
    %v2355 = vadd.f32 %v207, %v2354
    %2356 = vmatmul.f32.gmra.mxu0 %v2163
    %v2357 = vpop.f32.mrf.mxu0
    %v2358 = vadd.f32 %v207, %v2357
    %2359 = vdwg.mxu0
    %2360 = vmatpush.msra.mxu0 0.0
    %2361 = vmatpush.msra.mxu0 0.0
    %2362 = vmatpush.msra.mxu0 0.0
    %2363 = vmatpush.msra.mxu0 0.0
    %2364 = vmatpush.msra.mxu0 0.0
    %2365 = vmatpush.msra.mxu0 0.0
    %2366 = vmatpush.msra.mxu0 0.0
    %2367 = vmatpush.msra.mxu0 0.0
    %2368 = vmatpush.msra.mxu0 0.0
    %2369 = vmatpush.msra.mxu0 0.0
    %2370 = vmatpush.msra.mxu0 0.0
    %2371 = vmatpush.msra.mxu0 0.0
    %2372 = vmatpush.msra.mxu0 0.0
    %2373 = vmatpush.msra.mxu0 0.0
    %2374 = vmatpush.msra.mxu0 0.0
    %2375 = vmatpush.msra.mxu0 %v65
    %2376 = vmatmul.f32.gmra.mxu0 %v2118
    %v2377 = vpop.f32.mrf.mxu0
    %v2378 = vadd.f32 %v208, %v2377
    %2379 = vmatmul.f32.gmra.mxu0 %v2121
    %v2380 = vpop.f32.mrf.mxu0
    %v2381 = vadd.f32 %v208, %v2380
    %2382 = vmatmul.f32.gmra.mxu0 %v2124
    %v2383 = vpop.f32.mrf.mxu0
    %v2384 = vadd.f32 %v208, %v2383
    %2385 = vmatmul.f32.gmra.mxu0 %v2127
    %v2386 = vpop.f32.mrf.mxu0
    %v2387 = vadd.f32 %v208, %v2386
    %2388 = vmatmul.f32.gmra.mxu0 %v2130
    %v2389 = vpop.f32.mrf.mxu0
    %v2390 = vadd.f32 %v208, %v2389
    %2391 = vmatmul.f32.gmra.mxu0 %v2133
    %v2392 = vpop.f32.mrf.mxu0
    %v2393 = vadd.f32 %v208, %v2392
    %2394 = vmatmul.f32.gmra.mxu0 %v2136
    %v2395 = vpop.f32.mrf.mxu0
    %v2396 = vadd.f32 %v208, %v2395
    %2397 = vmatmul.f32.gmra.mxu0 %v2139
    %v2398 = vpop.f32.mrf.mxu0
    %v2399 = vadd.f32 %v208, %v2398
    %2400 = vmatmul.f32.gmra.mxu0 %v2142
    %v2401 = vpop.f32.mrf.mxu0
    %v2402 = vadd.f32 %v208, %v2401
    %2403 = vmatmul.f32.gmra.mxu0 %v2145
    %v2404 = vpop.f32.mrf.mxu0
    %v2405 = vadd.f32 %v208, %v2404
    %2406 = vmatmul.f32.gmra.mxu0 %v2148
    %v2407 = vpop.f32.mrf.mxu0
    %v2408 = vadd.f32 %v208, %v2407
    %2409 = vmatmul.f32.gmra.mxu0 %v2151
    %v2410 = vpop.f32.mrf.mxu0
    %v2411 = vadd.f32 %v208, %v2410
    %2412 = vmatmul.f32.gmra.mxu0 %v2154
    %v2413 = vpop.f32.mrf.mxu0
    %v2414 = vadd.f32 %v208, %v2413
    %2415 = vmatmul.f32.gmra.mxu0 %v2157
    %v2416 = vpop.f32.mrf.mxu0
    %v2417 = vadd.f32 %v208, %v2416
    %2418 = vmatmul.f32.gmra.mxu0 %v2160
    %v2419 = vpop.f32.mrf.mxu0
    %v2420 = vadd.f32 %v208, %v2419
    %2421 = vmatmul.f32.gmra.mxu0 %v2163
    %v2422 = vpop.f32.mrf.mxu0
    %v2423 = vadd.f32 %v208, %v2422
    %2424 = vdwg.mxu0
    %2425 = vmatpush.msra.mxu0 0.0
    %2426 = vmatpush.msra.mxu0 0.0
    %2427 = vmatpush.msra.mxu0 0.0
    %2428 = vmatpush.msra.mxu0 0.0
    %2429 = vmatpush.msra.mxu0 0.0
    %2430 = vmatpush.msra.mxu0 0.0
    %2431 = vmatpush.msra.mxu0 0.0
    %2432 = vmatpush.msra.mxu0 0.0
    %2433 = vmatpush.msra.mxu0 0.0
    %2434 = vmatpush.msra.mxu0 0.0
    %2435 = vmatpush.msra.mxu0 0.0
    %2436 = vmatpush.msra.mxu0 0.0
    %2437 = vmatpush.msra.mxu0 0.0
    %2438 = vmatpush.msra.mxu0 0.0
    %2439 = vmatpush.msra.mxu0 0.0
    %2440 = vmatpush.msra.mxu0 %v66
    %2441 = vmatmul.f32.gmra.mxu0 %v2118
    %v2442 = vpop.f32.mrf.mxu0
    %v2443 = vadd.f32 %v209, %v2442
    %2444 = vmatmul.f32.gmra.mxu0 %v2121
    %v2445 = vpop.f32.mrf.mxu0
    %v2446 = vadd.f32 %v209, %v2445
    %2447 = vmatmul.f32.gmra.mxu0 %v2124
    %v2448 = vpop.f32.mrf.mxu0
    %v2449 = vadd.f32 %v209, %v2448
    %2450 = vmatmul.f32.gmra.mxu0 %v2127
    %v2451 = vpop.f32.mrf.mxu0
    %v2452 = vadd.f32 %v209, %v2451
    %2453 = vmatmul.f32.gmra.mxu0 %v2130
    %v2454 = vpop.f32.mrf.mxu0
    %v2455 = vadd.f32 %v209, %v2454
    %2456 = vmatmul.f32.gmra.mxu0 %v2133
    %v2457 = vpop.f32.mrf.mxu0
    %v2458 = vadd.f32 %v209, %v2457
    %2459 = vmatmul.f32.gmra.mxu0 %v2136
    %v2460 = vpop.f32.mrf.mxu0
    %v2461 = vadd.f32 %v209, %v2460
    %2462 = vmatmul.f32.gmra.mxu0 %v2139
    %v2463 = vpop.f32.mrf.mxu0
    %v2464 = vadd.f32 %v209, %v2463
    %2465 = vmatmul.f32.gmra.mxu0 %v2142
    %v2466 = vpop.f32.mrf.mxu0
    %v2467 = vadd.f32 %v209, %v2466
    %2468 = vmatmul.f32.gmra.mxu0 %v2145
    %v2469 = vpop.f32.mrf.mxu0
    %v2470 = vadd.f32 %v209, %v2469
    %2471 = vmatmul.f32.gmra.mxu0 %v2148
    %v2472 = vpop.f32.mrf.mxu0
    %v2473 = vadd.f32 %v209, %v2472
    %2474 = vmatmul.f32.gmra.mxu0 %v2151
    %v2475 = vpop.f32.mrf.mxu0
    %v2476 = vadd.f32 %v209, %v2475
    %2477 = vmatmul.f32.gmra.mxu0 %v2154
    %v2478 = vpop.f32.mrf.mxu0
    %v2479 = vadd.f32 %v209, %v2478
    %2480 = vmatmul.f32.gmra.mxu0 %v2157
    %v2481 = vpop.f32.mrf.mxu0
    %v2482 = vadd.f32 %v209, %v2481
    %2483 = vmatmul.f32.gmra.mxu0 %v2160
    %v2484 = vpop.f32.mrf.mxu0
    %v2485 = vadd.f32 %v209, %v2484
    %2486 = vmatmul.f32.gmra.mxu0 %v2163
    %v2487 = vpop.f32.mrf.mxu0
    %v2488 = vadd.f32 %v209, %v2487
    %2489 = vdwg.mxu0
    %2490 = vmatpush.msra.mxu0 0.0
    %2491 = vmatpush.msra.mxu0 0.0
    %2492 = vmatpush.msra.mxu0 0.0
    %2493 = vmatpush.msra.mxu0 0.0
    %2494 = vmatpush.msra.mxu0 0.0
    %2495 = vmatpush.msra.mxu0 0.0
    %2496 = vmatpush.msra.mxu0 0.0
    %2497 = vmatpush.msra.mxu0 0.0
    %2498 = vmatpush.msra.mxu0 0.0
    %2499 = vmatpush.msra.mxu0 0.0
    %2500 = vmatpush.msra.mxu0 0.0
    %2501 = vmatpush.msra.mxu0 0.0
    %2502 = vmatpush.msra.mxu0 0.0
    %2503 = vmatpush.msra.mxu0 0.0
    %2504 = vmatpush.msra.mxu0 0.0
    %2505 = vmatpush.msra.mxu0 %v67
    %2506 = vmatmul.f32.gmra.mxu0 %v2118
    %v2507 = vpop.f32.mrf.mxu0
    %v2508 = vadd.f32 %v210, %v2507
    %2509 = vmatmul.f32.gmra.mxu0 %v2121
    %v2510 = vpop.f32.mrf.mxu0
    %v2511 = vadd.f32 %v210, %v2510
    %2512 = vmatmul.f32.gmra.mxu0 %v2124
    %v2513 = vpop.f32.mrf.mxu0
    %v2514 = vadd.f32 %v210, %v2513
    %2515 = vmatmul.f32.gmra.mxu0 %v2127
    %v2516 = vpop.f32.mrf.mxu0
    %v2517 = vadd.f32 %v210, %v2516
    %2518 = vmatmul.f32.gmra.mxu0 %v2130
    %v2519 = vpop.f32.mrf.mxu0
    %v2520 = vadd.f32 %v210, %v2519
    %2521 = vmatmul.f32.gmra.mxu0 %v2133
    %v2522 = vpop.f32.mrf.mxu0
    %v2523 = vadd.f32 %v210, %v2522
    %2524 = vmatmul.f32.gmra.mxu0 %v2136
    %v2525 = vpop.f32.mrf.mxu0
    %v2526 = vadd.f32 %v210, %v2525
    %2527 = vmatmul.f32.gmra.mxu0 %v2139
    %v2528 = vpop.f32.mrf.mxu0
    %v2529 = vadd.f32 %v210, %v2528
    %2530 = vmatmul.f32.gmra.mxu0 %v2142
    %v2531 = vpop.f32.mrf.mxu0
    %v2532 = vadd.f32 %v210, %v2531
    %2533 = vmatmul.f32.gmra.mxu0 %v2145
    %v2534 = vpop.f32.mrf.mxu0
    %v2535 = vadd.f32 %v210, %v2534
    %2536 = vmatmul.f32.gmra.mxu0 %v2148
    %v2537 = vpop.f32.mrf.mxu0
    %v2538 = vadd.f32 %v210, %v2537
    %2539 = vmatmul.f32.gmra.mxu0 %v2151
    %v2540 = vpop.f32.mrf.mxu0
    %v2541 = vadd.f32 %v210, %v2540
    %2542 = vmatmul.f32.gmra.mxu0 %v2154
    %v2543 = vpop.f32.mrf.mxu0
    %v2544 = vadd.f32 %v210, %v2543
    %2545 = vmatmul.f32.gmra.mxu0 %v2157
    %v2546 = vpop.f32.mrf.mxu0
    %v2547 = vadd.f32 %v210, %v2546
    %2548 = vmatmul.f32.gmra.mxu0 %v2160
    %v2549 = vpop.f32.mrf.mxu0
    %v2550 = vadd.f32 %v210, %v2549
    %2551 = vmatmul.f32.gmra.mxu0 %v2163
    %v2552 = vpop.f32.mrf.mxu0
    %v2553 = vadd.f32 %v210, %v2552
    %2554 = vdwg.mxu0
    %2555 = vmatpush.msra.mxu0 0.0
    %2556 = vmatpush.msra.mxu0 0.0
    %2557 = vmatpush.msra.mxu0 0.0
    %2558 = vmatpush.msra.mxu0 0.0
    %2559 = vmatpush.msra.mxu0 0.0
    %2560 = vmatpush.msra.mxu0 0.0
    %2561 = vmatpush.msra.mxu0 0.0
    %2562 = vmatpush.msra.mxu0 0.0
    %2563 = vmatpush.msra.mxu0 0.0
    %2564 = vmatpush.msra.mxu0 0.0
    %2565 = vmatpush.msra.mxu0 0.0
    %2566 = vmatpush.msra.mxu0 0.0
    %2567 = vmatpush.msra.mxu0 0.0
    %2568 = vmatpush.msra.mxu0 0.0
    %2569 = vmatpush.msra.mxu0 0.0
    %2570 = vmatpush.msra.mxu0 %v68
    %2571 = vmatmul.f32.gmra.mxu0 %v2118
    %v2572 = vpop.f32.mrf.mxu0
    %v2573 = vadd.f32 %v211, %v2572
    %2574 = vmatmul.f32.gmra.mxu0 %v2121
    %v2575 = vpop.f32.mrf.mxu0
    %v2576 = vadd.f32 %v211, %v2575
    %2577 = vmatmul.f32.gmra.mxu0 %v2124
    %v2578 = vpop.f32.mrf.mxu0
    %v2579 = vadd.f32 %v211, %v2578
    %2580 = vmatmul.f32.gmra.mxu0 %v2127
    %v2581 = vpop.f32.mrf.mxu0
    %v2582 = vadd.f32 %v211, %v2581
    %2583 = vmatmul.f32.gmra.mxu0 %v2130
    %v2584 = vpop.f32.mrf.mxu0
    %v2585 = vadd.f32 %v211, %v2584
    %2586 = vmatmul.f32.gmra.mxu0 %v2133
    %v2587 = vpop.f32.mrf.mxu0
    %v2588 = vadd.f32 %v211, %v2587
    %2589 = vmatmul.f32.gmra.mxu0 %v2136
    %v2590 = vpop.f32.mrf.mxu0
    %v2591 = vadd.f32 %v211, %v2590
    %2592 = vmatmul.f32.gmra.mxu0 %v2139
    %v2593 = vpop.f32.mrf.mxu0
    %v2594 = vadd.f32 %v211, %v2593
    %2595 = vmatmul.f32.gmra.mxu0 %v2142
    %v2596 = vpop.f32.mrf.mxu0
    %v2597 = vadd.f32 %v211, %v2596
    %2598 = vmatmul.f32.gmra.mxu0 %v2145
    %v2599 = vpop.f32.mrf.mxu0
    %v2600 = vadd.f32 %v211, %v2599
    %2601 = vmatmul.f32.gmra.mxu0 %v2148
    %v2602 = vpop.f32.mrf.mxu0
    %v2603 = vadd.f32 %v211, %v2602
    %2604 = vmatmul.f32.gmra.mxu0 %v2151
    %v2605 = vpop.f32.mrf.mxu0
    %v2606 = vadd.f32 %v211, %v2605
    %2607 = vmatmul.f32.gmra.mxu0 %v2154
    %v2608 = vpop.f32.mrf.mxu0
    %v2609 = vadd.f32 %v211, %v2608
    %2610 = vmatmul.f32.gmra.mxu0 %v2157
    %v2611 = vpop.f32.mrf.mxu0
    %v2612 = vadd.f32 %v211, %v2611
    %2613 = vmatmul.f32.gmra.mxu0 %v2160
    %v2614 = vpop.f32.mrf.mxu0
    %v2615 = vadd.f32 %v211, %v2614
    %2616 = vmatmul.f32.gmra.mxu0 %v2163
    %v2617 = vpop.f32.mrf.mxu0
    %v2618 = vadd.f32 %v211, %v2617
    %2619 = vdwg.mxu0
    %2620 = vmatpush.msra.mxu0 0.0
    %2621 = vmatpush.msra.mxu0 0.0
    %2622 = vmatpush.msra.mxu0 0.0
    %2623 = vmatpush.msra.mxu0 0.0
    %2624 = vmatpush.msra.mxu0 0.0
    %2625 = vmatpush.msra.mxu0 0.0
    %2626 = vmatpush.msra.mxu0 0.0
    %2627 = vmatpush.msra.mxu0 0.0
    %2628 = vmatpush.msra.mxu0 0.0
    %2629 = vmatpush.msra.mxu0 0.0
    %2630 = vmatpush.msra.mxu0 0.0
    %2631 = vmatpush.msra.mxu0 0.0
    %2632 = vmatpush.msra.mxu0 0.0
    %2633 = vmatpush.msra.mxu0 0.0
    %2634 = vmatpush.msra.mxu0 0.0
    %2635 = vmatpush.msra.mxu0 %v69
    %2636 = vmatmul.f32.gmra.mxu0 %v2118
    %v2637 = vpop.f32.mrf.mxu0
    %v2638 = vadd.f32 %v212, %v2637
    %2639 = vmatmul.f32.gmra.mxu0 %v2121
    %v2640 = vpop.f32.mrf.mxu0
    %v2641 = vadd.f32 %v212, %v2640
    %2642 = vmatmul.f32.gmra.mxu0 %v2124
    %v2643 = vpop.f32.mrf.mxu0
    %v2644 = vadd.f32 %v212, %v2643
    %2645 = vmatmul.f32.gmra.mxu0 %v2127
    %v2646 = vpop.f32.mrf.mxu0
    %v2647 = vadd.f32 %v212, %v2646
    %2648 = vmatmul.f32.gmra.mxu0 %v2130
    %v2649 = vpop.f32.mrf.mxu0
    %v2650 = vadd.f32 %v212, %v2649
    %2651 = vmatmul.f32.gmra.mxu0 %v2133
    %v2652 = vpop.f32.mrf.mxu0
    %v2653 = vadd.f32 %v212, %v2652
    %2654 = vmatmul.f32.gmra.mxu0 %v2136
    %v2655 = vpop.f32.mrf.mxu0
    %v2656 = vadd.f32 %v212, %v2655
    %2657 = vmatmul.f32.gmra.mxu0 %v2139
    %v2658 = vpop.f32.mrf.mxu0
    %v2659 = vadd.f32 %v212, %v2658
    %2660 = vmatmul.f32.gmra.mxu0 %v2142
    %v2661 = vpop.f32.mrf.mxu0
    %v2662 = vadd.f32 %v212, %v2661
    %2663 = vmatmul.f32.gmra.mxu0 %v2145
    %v2664 = vpop.f32.mrf.mxu0
    %v2665 = vadd.f32 %v212, %v2664
    %2666 = vmatmul.f32.gmra.mxu0 %v2148
    %v2667 = vpop.f32.mrf.mxu0
    %v2668 = vadd.f32 %v212, %v2667
    %2669 = vmatmul.f32.gmra.mxu0 %v2151
    %v2670 = vpop.f32.mrf.mxu0
    %v2671 = vadd.f32 %v212, %v2670
    %2672 = vmatmul.f32.gmra.mxu0 %v2154
    %v2673 = vpop.f32.mrf.mxu0
    %v2674 = vadd.f32 %v212, %v2673
    %2675 = vmatmul.f32.gmra.mxu0 %v2157
    %v2676 = vpop.f32.mrf.mxu0
    %v2677 = vadd.f32 %v212, %v2676
    %2678 = vmatmul.f32.gmra.mxu0 %v2160
    %v2679 = vpop.f32.mrf.mxu0
    %v2680 = vadd.f32 %v212, %v2679
    %2681 = vmatmul.f32.gmra.mxu0 %v2163
    %v2682 = vpop.f32.mrf.mxu0
    %v2683 = vadd.f32 %v212, %v2682
    %2684 = vdwg.mxu0
    %v2685 = vmax.f32 %v2183, 0.0
    %v2686 = vmax.f32 %v2248, 0.0
    %v2687 = vmax.f32 %v2313, 0.0
    %v2688 = vmax.f32 %v2378, 0.0
    %v2689 = vmax.f32 %v2443, 0.0
    %v2690 = vmax.f32 %v2508, 0.0
    %v2691 = vmax.f32 %v2573, 0.0
    %v2692 = vmax.f32 %v2638, 0.0
    %v2693 = vmax.f32 %v2186, 0.0
    %v2694 = vmax.f32 %v2251, 0.0
    %v2695 = vmax.f32 %v2316, 0.0
    %v2696 = vmax.f32 %v2381, 0.0
    %v2697 = vmax.f32 %v2446, 0.0
    %v2698 = vmax.f32 %v2511, 0.0
    %v2699 = vmax.f32 %v2576, 0.0
    %v2700 = vmax.f32 %v2641, 0.0
    %v2701 = vmax.f32 %v2189, 0.0
    %v2702 = vmax.f32 %v2254, 0.0
    %v2703 = vmax.f32 %v2319, 0.0
    %v2704 = vmax.f32 %v2384, 0.0
    %v2705 = vmax.f32 %v2449, 0.0
    %v2706 = vmax.f32 %v2514, 0.0
    %v2707 = vmax.f32 %v2579, 0.0
    %v2708 = vmax.f32 %v2644, 0.0
    %v2709 = vmax.f32 %v2192, 0.0
    %v2710 = vmax.f32 %v2257, 0.0
    %v2711 = vmax.f32 %v2322, 0.0
    %v2712 = vmax.f32 %v2387, 0.0
    %v2713 = vmax.f32 %v2452, 0.0
    %v2714 = vmax.f32 %v2517, 0.0
    %v2715 = vmax.f32 %v2582, 0.0
    %v2716 = vmax.f32 %v2647, 0.0
    %v2717 = vmax.f32 %v2195, 0.0
    %v2718 = vmax.f32 %v2260, 0.0
    %v2719 = vmax.f32 %v2325, 0.0
    %v2720 = vmax.f32 %v2390, 0.0
    %v2721 = vmax.f32 %v2455, 0.0
    %v2722 = vmax.f32 %v2520, 0.0
    %v2723 = vmax.f32 %v2585, 0.0
    %v2724 = vmax.f32 %v2650, 0.0
    %v2725 = vmax.f32 %v2198, 0.0
    %v2726 = vmax.f32 %v2263, 0.0
    %v2727 = vmax.f32 %v2328, 0.0
    %v2728 = vmax.f32 %v2393, 0.0
    %v2729 = vmax.f32 %v2458, 0.0
    %v2730 = vmax.f32 %v2523, 0.0
    %v2731 = vmax.f32 %v2588, 0.0
    %v2732 = vmax.f32 %v2653, 0.0
    %v2733 = vmax.f32 %v2201, 0.0
    %v2734 = vmax.f32 %v2266, 0.0
    %v2735 = vmax.f32 %v2331, 0.0
    %v2736 = vmax.f32 %v2396, 0.0
    %v2737 = vmax.f32 %v2461, 0.0
    %v2738 = vmax.f32 %v2526, 0.0
    %v2739 = vmax.f32 %v2591, 0.0
    %v2740 = vmax.f32 %v2656, 0.0
    %v2741 = vmax.f32 %v2204, 0.0
    %v2742 = vmax.f32 %v2269, 0.0
    %v2743 = vmax.f32 %v2334, 0.0
    %v2744 = vmax.f32 %v2399, 0.0
    %v2745 = vmax.f32 %v2464, 0.0
    %v2746 = vmax.f32 %v2529, 0.0
    %v2747 = vmax.f32 %v2594, 0.0
    %v2748 = vmax.f32 %v2659, 0.0
    %v2749 = vmax.f32 %v2207, 0.0
    %v2750 = vmax.f32 %v2272, 0.0
    %v2751 = vmax.f32 %v2337, 0.0
    %v2752 = vmax.f32 %v2402, 0.0
    %v2753 = vmax.f32 %v2467, 0.0
    %v2754 = vmax.f32 %v2532, 0.0
    %v2755 = vmax.f32 %v2597, 0.0
    %v2756 = vmax.f32 %v2662, 0.0
    %v2757 = vmax.f32 %v2210, 0.0
    %v2758 = vmax.f32 %v2275, 0.0
    %v2759 = vmax.f32 %v2340, 0.0
    %v2760 = vmax.f32 %v2405, 0.0
    %v2761 = vmax.f32 %v2470, 0.0
    %v2762 = vmax.f32 %v2535, 0.0
    %v2763 = vmax.f32 %v2600, 0.0
    %v2764 = vmax.f32 %v2665, 0.0
    %v2765 = vmax.f32 %v2213, 0.0
    %v2766 = vmax.f32 %v2278, 0.0
    %v2767 = vmax.f32 %v2343, 0.0
    %v2768 = vmax.f32 %v2408, 0.0
    %v2769 = vmax.f32 %v2473, 0.0
    %v2770 = vmax.f32 %v2538, 0.0
    %v2771 = vmax.f32 %v2603, 0.0
    %v2772 = vmax.f32 %v2668, 0.0
    %v2773 = vmax.f32 %v2216, 0.0
    %v2774 = vmax.f32 %v2281, 0.0
    %v2775 = vmax.f32 %v2346, 0.0
    %v2776 = vmax.f32 %v2411, 0.0
    %v2777 = vmax.f32 %v2476, 0.0
    %v2778 = vmax.f32 %v2541, 0.0
    %v2779 = vmax.f32 %v2606, 0.0
    %v2780 = vmax.f32 %v2671, 0.0
    %v2781 = vmax.f32 %v2219, 0.0
    %v2782 = vmax.f32 %v2284, 0.0
    %v2783 = vmax.f32 %v2349, 0.0
    %v2784 = vmax.f32 %v2414, 0.0
    %v2785 = vmax.f32 %v2479, 0.0
    %v2786 = vmax.f32 %v2544, 0.0
    %v2787 = vmax.f32 %v2609, 0.0
    %v2788 = vmax.f32 %v2674, 0.0
    %v2789 = vmax.f32 %v2222, 0.0
    %v2790 = vmax.f32 %v2287, 0.0
    %v2791 = vmax.f32 %v2352, 0.0
    %v2792 = vmax.f32 %v2417, 0.0
    %v2793 = vmax.f32 %v2482, 0.0
    %v2794 = vmax.f32 %v2547, 0.0
    %v2795 = vmax.f32 %v2612, 0.0
    %v2796 = vmax.f32 %v2677, 0.0
    %v2797 = vmax.f32 %v2225, 0.0
    %v2798 = vmax.f32 %v2290, 0.0
    %v2799 = vmax.f32 %v2355, 0.0
    %v2800 = vmax.f32 %v2420, 0.0
    %v2801 = vmax.f32 %v2485, 0.0
    %v2802 = vmax.f32 %v2550, 0.0
    %v2803 = vmax.f32 %v2615, 0.0
    %v2804 = vmax.f32 %v2680, 0.0
    %v2805 = vmax.f32 %v2228, 0.0
    %v2806 = vmax.f32 %v2293, 0.0
    %v2807 = vmax.f32 %v2358, 0.0
    %v2808 = vmax.f32 %v2423, 0.0
    %v2809 = vmax.f32 %v2488, 0.0
    %v2810 = vmax.f32 %v2553, 0.0
    %v2811 = vmax.f32 %v2618, 0.0
    %v2812 = vmax.f32 %v2683, 0.0
    %v2813 = vadd.f32 %v2685, %v2693
    %v2814 = vadd.f32 %v2813, %v2701
    %v2815 = vadd.f32 %v2814, %v2709
    %v2816 = vadd.f32 %v2815, %v2717
    %v2817 = vadd.f32 %v2816, %v2725
    %v2818 = vadd.f32 %v2817, %v2733
    %v2819 = vadd.f32 %v2818, %v2741
    %v2820 = vadd.f32 %v2819, %v2749
    %v2821 = vadd.f32 %v2820, %v2757
    %v2822 = vadd.f32 %v2821, %v2765
    %v2823 = vadd.f32 %v2822, %v2773
    %v2824 = vadd.f32 %v2823, %v2781
    %v2825 = vadd.f32 %v2824, %v2789
    %v2826 = vadd.f32 %v2825, %v2797
    %v2827 = vadd.f32 %v2826, %v2805
    %v2828 = vrot.slane %v2827, 4
    %v2829 = vadd.f32 %v2827, %v2828
    %v2830 = vrot.slane %v2829, 2
    %v2831 = vadd.f32 %v2829, %v2830
    %v2832 = vrot.slane %v2831, 1
    %v2833 = vadd.f32 %v2831, %v2832
    %v2834 = vadd.f32 %v2686, %v2694
    %v2835 = vadd.f32 %v2834, %v2702
    %v2836 = vadd.f32 %v2835, %v2710
    %v2837 = vadd.f32 %v2836, %v2718
    %v2838 = vadd.f32 %v2837, %v2726
    %v2839 = vadd.f32 %v2838, %v2734
    %v2840 = vadd.f32 %v2839, %v2742
    %v2841 = vadd.f32 %v2840, %v2750
    %v2842 = vadd.f32 %v2841, %v2758
    %v2843 = vadd.f32 %v2842, %v2766
    %v2844 = vadd.f32 %v2843, %v2774
    %v2845 = vadd.f32 %v2844, %v2782
    %v2846 = vadd.f32 %v2845, %v2790
    %v2847 = vadd.f32 %v2846, %v2798
    %v2848 = vadd.f32 %v2847, %v2806
    %v2849 = vrot.slane %v2848, 4
    %v2850 = vadd.f32 %v2848, %v2849
    %v2851 = vrot.slane %v2850, 2
    %v2852 = vadd.f32 %v2850, %v2851
    %v2853 = vrot.slane %v2852, 1
    %v2854 = vadd.f32 %v2852, %v2853
    %v2855 = vadd.f32 %v2687, %v2695
    %v2856 = vadd.f32 %v2855, %v2703
    %v2857 = vadd.f32 %v2856, %v2711
    %v2858 = vadd.f32 %v2857, %v2719
    %v2859 = vadd.f32 %v2858, %v2727
    %v2860 = vadd.f32 %v2859, %v2735
    %v2861 = vadd.f32 %v2860, %v2743
    %v2862 = vadd.f32 %v2861, %v2751
    %v2863 = vadd.f32 %v2862, %v2759
    %v2864 = vadd.f32 %v2863, %v2767
    %v2865 = vadd.f32 %v2864, %v2775
    %v2866 = vadd.f32 %v2865, %v2783
    %v2867 = vadd.f32 %v2866, %v2791
    %v2868 = vadd.f32 %v2867, %v2799
    %v2869 = vadd.f32 %v2868, %v2807
    %v2870 = vrot.slane %v2869, 4
    %v2871 = vadd.f32 %v2869, %v2870
    %v2872 = vrot.slane %v2871, 2
    %v2873 = vadd.f32 %v2871, %v2872
    %v2874 = vrot.slane %v2873, 1
    %v2875 = vadd.f32 %v2873, %v2874
    %v2876 = vadd.f32 %v2688, %v2696
    %v2877 = vadd.f32 %v2876, %v2704
    %v2878 = vadd.f32 %v2877, %v2712
    %v2879 = vadd.f32 %v2878, %v2720
    %v2880 = vadd.f32 %v2879, %v2728
    %v2881 = vadd.f32 %v2880, %v2736
    %v2882 = vadd.f32 %v2881, %v2744
    %v2883 = vadd.f32 %v2882, %v2752
    %v2884 = vadd.f32 %v2883, %v2760
    %v2885 = vadd.f32 %v2884, %v2768
    %v2886 = vadd.f32 %v2885, %v2776
    %v2887 = vadd.f32 %v2886, %v2784
    %v2888 = vadd.f32 %v2887, %v2792
    %v2889 = vadd.f32 %v2888, %v2800
    %v2890 = vadd.f32 %v2889, %v2808
    %v2891 = vrot.slane %v2890, 4
    %v2892 = vadd.f32 %v2890, %v2891
    %v2893 = vrot.slane %v2892, 2
    %v2894 = vadd.f32 %v2892, %v2893
    %v2895 = vrot.slane %v2894, 1
    %v2896 = vadd.f32 %v2894, %v2895
    %v2897 = vadd.f32 %v2689, %v2697
    %v2898 = vadd.f32 %v2897, %v2705
    %v2899 = vadd.f32 %v2898, %v2713
    %v2900 = vadd.f32 %v2899, %v2721
    %v2901 = vadd.f32 %v2900, %v2729
    %v2902 = vadd.f32 %v2901, %v2737
    %v2903 = vadd.f32 %v2902, %v2745
    %v2904 = vadd.f32 %v2903, %v2753
    %v2905 = vadd.f32 %v2904, %v2761
    %v2906 = vadd.f32 %v2905, %v2769
    %v2907 = vadd.f32 %v2906, %v2777
    %v2908 = vadd.f32 %v2907, %v2785
    %v2909 = vadd.f32 %v2908, %v2793
    %v2910 = vadd.f32 %v2909, %v2801
    %v2911 = vadd.f32 %v2910, %v2809
    %v2912 = vrot.slane %v2911, 4
    %v2913 = vadd.f32 %v2911, %v2912
    %v2914 = vrot.slane %v2913, 2
    %v2915 = vadd.f32 %v2913, %v2914
    %v2916 = vrot.slane %v2915, 1
    %v2917 = vadd.f32 %v2915, %v2916
    %v2918 = vadd.f32 %v2690, %v2698
    %v2919 = vadd.f32 %v2918, %v2706
    %v2920 = vadd.f32 %v2919, %v2714
    %v2921 = vadd.f32 %v2920, %v2722
    %v2922 = vadd.f32 %v2921, %v2730
    %v2923 = vadd.f32 %v2922, %v2738
    %v2924 = vadd.f32 %v2923, %v2746
    %v2925 = vadd.f32 %v2924, %v2754
    %v2926 = vadd.f32 %v2925, %v2762
    %v2927 = vadd.f32 %v2926, %v2770
    %v2928 = vadd.f32 %v2927, %v2778
    %v2929 = vadd.f32 %v2928, %v2786
    %v2930 = vadd.f32 %v2929, %v2794
    %v2931 = vadd.f32 %v2930, %v2802
    %v2932 = vadd.f32 %v2931, %v2810
    %v2933 = vrot.slane %v2932, 4
    %v2934 = vadd.f32 %v2932, %v2933
    %v2935 = vrot.slane %v2934, 2
    %v2936 = vadd.f32 %v2934, %v2935
    %v2937 = vrot.slane %v2936, 1
    %v2938 = vadd.f32 %v2936, %v2937
    %v2939 = vadd.f32 %v2691, %v2699
    %v2940 = vadd.f32 %v2939, %v2707
    %v2941 = vadd.f32 %v2940, %v2715
    %v2942 = vadd.f32 %v2941, %v2723
    %v2943 = vadd.f32 %v2942, %v2731
    %v2944 = vadd.f32 %v2943, %v2739
    %v2945 = vadd.f32 %v2944, %v2747
    %v2946 = vadd.f32 %v2945, %v2755
    %v2947 = vadd.f32 %v2946, %v2763
    %v2948 = vadd.f32 %v2947, %v2771
    %v2949 = vadd.f32 %v2948, %v2779
    %v2950 = vadd.f32 %v2949, %v2787
    %v2951 = vadd.f32 %v2950, %v2795
    %v2952 = vadd.f32 %v2951, %v2803
    %v2953 = vadd.f32 %v2952, %v2811
    %v2954 = vrot.slane %v2953, 4
    %v2955 = vadd.f32 %v2953, %v2954
    %v2956 = vrot.slane %v2955, 2
    %v2957 = vadd.f32 %v2955, %v2956
    %v2958 = vrot.slane %v2957, 1
    %v2959 = vadd.f32 %v2957, %v2958
    %v2960 = vadd.f32 %v2692, %v2700
    %v2961 = vadd.f32 %v2960, %v2708
    %v2962 = vadd.f32 %v2961, %v2716
    %v2963 = vadd.f32 %v2962, %v2724
    %v2964 = vadd.f32 %v2963, %v2732
    %v2965 = vadd.f32 %v2964, %v2740
    %v2966 = vadd.f32 %v2965, %v2748
    %v2967 = vadd.f32 %v2966, %v2756
    %v2968 = vadd.f32 %v2967, %v2764
    %v2969 = vadd.f32 %v2968, %v2772
    %v2970 = vadd.f32 %v2969, %v2780
    %v2971 = vadd.f32 %v2970, %v2788
    %v2972 = vadd.f32 %v2971, %v2796
    %v2973 = vadd.f32 %v2972, %v2804
    %v2974 = vadd.f32 %v2973, %v2812
    %v2975 = vrot.slane %v2974, 4
    %v2976 = vadd.f32 %v2974, %v2975
    %v2977 = vrot.slane %v2976, 2
    %v2978 = vadd.f32 %v2976, %v2977
    %v2979 = vrot.slane %v2978, 1
    %v2980 = vadd.f32 %v2978, %v2979
    %v2981 = vadd.f32 %v2833, 0.0
    %v2982 = vadd.f32 %v2854, 0.0
    %v2983 = vadd.f32 %v2875, 0.0
    %v2984 = vadd.f32 %v2896, 0.0
    %v2985 = vadd.f32 %v2917, 0.0
    %v2986 = vadd.f32 %v2938, 0.0
    %v2987 = vadd.f32 %v2959, 0.0
    %v2988 = vadd.f32 %v2980, 0.0
    %v2989 = vld [vmem:[%s2050 + $0x8] sm:$0xff]
    %2990 = vmatpush.xpose.msra.mxu0 0.0
    %2991 = vmatpush.xpose.msra.mxu0 0.0
    %2992 = vmatpush.xpose.msra.mxu0 0.0
    %2993 = vmatpush.xpose.msra.mxu0 0.0
    %2994 = vmatpush.xpose.msra.mxu0 0.0
    %2995 = vmatpush.xpose.msra.mxu0 0.0
    %2996 = vmatpush.xpose.msra.mxu0 0.0
    %2997 = vmatpush.xpose.msra.mxu0 0.0
    %2998 = vmatpush.xpose.msra.mxu0 0.0
    %2999 = vmatpush.xpose.msra.mxu0 0.0
    %3000 = vmatpush.xpose.msra.mxu0 0.0
    %3001 = vmatpush.xpose.msra.mxu0 0.0
    %3002 = vmatpush.xpose.msra.mxu0 0.0
    %3003 = vmatpush.xpose.msra.mxu0 0.0
    %3004 = vmatpush.xpose.msra.mxu0 0.0
    %3005 = vmatpush.xpose.msra.mxu0 %v2989
    %3006 = vmatmul.f32.gmra.mxu0 %v122
    %v3007 = vpop.f32.mrf.mxu0
    %v3008 = vadd.f32 0.0, %v3007
    %3009 = vmatmul.f32.gmra.mxu0 %v123
    %v3010 = vpop.f32.mrf.mxu0
    %v3011 = vadd.f32 0.0, %v3010
    %3012 = vmatmul.f32.gmra.mxu0 %v124
    %v3013 = vpop.f32.mrf.mxu0
    %v3014 = vadd.f32 0.0, %v3013
    %3015 = vmatmul.f32.gmra.mxu0 %v125
    %v3016 = vpop.f32.mrf.mxu0
    %v3017 = vadd.f32 0.0, %v3016
    %3018 = vmatmul.f32.gmra.mxu0 %v126
    %v3019 = vpop.f32.mrf.mxu0
    %v3020 = vadd.f32 0.0, %v3019
    %3021 = vmatmul.f32.gmra.mxu0 %v127
    %v3022 = vpop.f32.mrf.mxu0
    %v3023 = vadd.f32 0.0, %v3022
    %3024 = vmatmul.f32.gmra.mxu0 %v128
    %v3025 = vpop.f32.mrf.mxu0
    %v3026 = vadd.f32 0.0, %v3025
    %3027 = vmatmul.f32.gmra.mxu0 %v129
    %v3028 = vpop.f32.mrf.mxu0
    %v3029 = vadd.f32 0.0, %v3028
    %3030 = vmatmul.f32.gmra.mxu0 %v130
    %v3031 = vpop.f32.mrf.mxu0
    %v3032 = vadd.f32 0.0, %v3031
    %3033 = vmatmul.f32.gmra.mxu0 %v131
    %v3034 = vpop.f32.mrf.mxu0
    %v3035 = vadd.f32 0.0, %v3034
    %3036 = vmatmul.f32.gmra.mxu0 %v132
    %v3037 = vpop.f32.mrf.mxu0
    %v3038 = vadd.f32 0.0, %v3037
    %3039 = vmatmul.f32.gmra.mxu0 %v133
    %v3040 = vpop.f32.mrf.mxu0
    %v3041 = vadd.f32 0.0, %v3040
    %3042 = vmatmul.f32.gmra.mxu0 %v134
    %v3043 = vpop.f32.mrf.mxu0
    %v3044 = vadd.f32 0.0, %v3043
    %3045 = vmatmul.f32.gmra.mxu0 %v135
    %v3046 = vpop.f32.mrf.mxu0
    %v3047 = vadd.f32 0.0, %v3046
    %3048 = vmatmul.f32.gmra.mxu0 %v136
    %v3049 = vpop.f32.mrf.mxu0
    %v3050 = vadd.f32 0.0, %v3049
    %3051 = vmatmul.f32.gmra.mxu0 %v137
    %v3052 = vpop.f32.mrf.mxu0
    %v3053 = vadd.f32 0.0, %v3052
    %3054 = vdwg.mxu0
    %v3056 = vsel %vm221, %v3008, 0
    %v3059 = vsel %vm221, %v3011, 0
    %v3062 = vsel %vm221, %v3014, 0
    %v3065 = vsel %vm221, %v3017, 0
    %v3068 = vsel %vm221, %v3020, 0
    %v3071 = vsel %vm221, %v3023, 0
    %v3074 = vsel %vm221, %v3026, 0
    %v3077 = vsel %vm221, %v3029, 0
    %v3080 = vsel %vm221, %v3032, 0
    %v3083 = vsel %vm221, %v3035, 0
    %v3086 = vsel %vm221, %v3038, 0
    %v3089 = vsel %vm221, %v3041, 0
    %v3092 = vsel %vm221, %v3044, 0
    %v3095 = vsel %vm221, %v3047, 0
    %v3098 = vsel %vm221, %v3050, 0
    %v3101 = vsel %vm221, %v3053, 0
    %3103 = vmatpush.msra.mxu0 0.0
    %3104 = vmatpush.msra.mxu0 0.0
    %3105 = vmatpush.msra.mxu0 0.0
    %3106 = vmatpush.msra.mxu0 0.0
    %3107 = vmatpush.msra.mxu0 0.0
    %3108 = vmatpush.msra.mxu0 0.0
    %3109 = vmatpush.msra.mxu0 0.0
    %3110 = vmatpush.msra.mxu0 0.0
    %3111 = vmatpush.msra.mxu0 0.0
    %3112 = vmatpush.msra.mxu0 0.0
    %3113 = vmatpush.msra.mxu0 0.0
    %3114 = vmatpush.msra.mxu0 0.0
    %3115 = vmatpush.msra.mxu0 0.0
    %3116 = vmatpush.msra.mxu0 0.0
    %3117 = vmatpush.msra.mxu0 0.0
    %3118 = vmatpush.msra.mxu0 %v62
    %3119 = vmatmul.f32.gmra.mxu0 %v3056
    %v3120 = vpop.f32.mrf.mxu0
    %v3121 = vadd.f32 %v205, %v3120
    %3122 = vmatmul.f32.gmra.mxu0 %v3059
    %v3123 = vpop.f32.mrf.mxu0
    %v3124 = vadd.f32 %v205, %v3123
    %3125 = vmatmul.f32.gmra.mxu0 %v3062
    %v3126 = vpop.f32.mrf.mxu0
    %v3127 = vadd.f32 %v205, %v3126
    %3128 = vmatmul.f32.gmra.mxu0 %v3065
    %v3129 = vpop.f32.mrf.mxu0
    %v3130 = vadd.f32 %v205, %v3129
    %3131 = vmatmul.f32.gmra.mxu0 %v3068
    %v3132 = vpop.f32.mrf.mxu0
    %v3133 = vadd.f32 %v205, %v3132
    %3134 = vmatmul.f32.gmra.mxu0 %v3071
    %v3135 = vpop.f32.mrf.mxu0
    %v3136 = vadd.f32 %v205, %v3135
    %3137 = vmatmul.f32.gmra.mxu0 %v3074
    %v3138 = vpop.f32.mrf.mxu0
    %v3139 = vadd.f32 %v205, %v3138
    %3140 = vmatmul.f32.gmra.mxu0 %v3077
    %v3141 = vpop.f32.mrf.mxu0
    %v3142 = vadd.f32 %v205, %v3141
    %3143 = vmatmul.f32.gmra.mxu0 %v3080
    %v3144 = vpop.f32.mrf.mxu0
    %v3145 = vadd.f32 %v205, %v3144
    %3146 = vmatmul.f32.gmra.mxu0 %v3083
    %v3147 = vpop.f32.mrf.mxu0
    %v3148 = vadd.f32 %v205, %v3147
    %3149 = vmatmul.f32.gmra.mxu0 %v3086
    %v3150 = vpop.f32.mrf.mxu0
    %v3151 = vadd.f32 %v205, %v3150
    %3152 = vmatmul.f32.gmra.mxu0 %v3089
    %v3153 = vpop.f32.mrf.mxu0
    %v3154 = vadd.f32 %v205, %v3153
    %3155 = vmatmul.f32.gmra.mxu0 %v3092
    %v3156 = vpop.f32.mrf.mxu0
    %v3157 = vadd.f32 %v205, %v3156
    %3158 = vmatmul.f32.gmra.mxu0 %v3095
    %v3159 = vpop.f32.mrf.mxu0
    %v3160 = vadd.f32 %v205, %v3159
    %3161 = vmatmul.f32.gmra.mxu0 %v3098
    %v3162 = vpop.f32.mrf.mxu0
    %v3163 = vadd.f32 %v205, %v3162
    %3164 = vmatmul.f32.gmra.mxu0 %v3101
    %v3165 = vpop.f32.mrf.mxu0
    %v3166 = vadd.f32 %v205, %v3165
    %3167 = vdwg.mxu0
    %3168 = vmatpush.msra.mxu0 0.0
    %3169 = vmatpush.msra.mxu0 0.0
    %3170 = vmatpush.msra.mxu0 0.0
    %3171 = vmatpush.msra.mxu0 0.0
    %3172 = vmatpush.msra.mxu0 0.0
    %3173 = vmatpush.msra.mxu0 0.0
    %3174 = vmatpush.msra.mxu0 0.0
    %3175 = vmatpush.msra.mxu0 0.0
    %3176 = vmatpush.msra.mxu0 0.0
    %3177 = vmatpush.msra.mxu0 0.0
    %3178 = vmatpush.msra.mxu0 0.0
    %3179 = vmatpush.msra.mxu0 0.0
    %3180 = vmatpush.msra.mxu0 0.0
    %3181 = vmatpush.msra.mxu0 0.0
    %3182 = vmatpush.msra.mxu0 0.0
    %3183 = vmatpush.msra.mxu0 %v63
    %3184 = vmatmul.f32.gmra.mxu0 %v3056
    %v3185 = vpop.f32.mrf.mxu0
    %v3186 = vadd.f32 %v206, %v3185
    %3187 = vmatmul.f32.gmra.mxu0 %v3059
    %v3188 = vpop.f32.mrf.mxu0
    %v3189 = vadd.f32 %v206, %v3188
    %3190 = vmatmul.f32.gmra.mxu0 %v3062
    %v3191 = vpop.f32.mrf.mxu0
    %v3192 = vadd.f32 %v206, %v3191
    %3193 = vmatmul.f32.gmra.mxu0 %v3065
    %v3194 = vpop.f32.mrf.mxu0
    %v3195 = vadd.f32 %v206, %v3194
    %3196 = vmatmul.f32.gmra.mxu0 %v3068
    %v3197 = vpop.f32.mrf.mxu0
    %v3198 = vadd.f32 %v206, %v3197
    %3199 = vmatmul.f32.gmra.mxu0 %v3071
    %v3200 = vpop.f32.mrf.mxu0
    %v3201 = vadd.f32 %v206, %v3200
    %3202 = vmatmul.f32.gmra.mxu0 %v3074
    %v3203 = vpop.f32.mrf.mxu0
    %v3204 = vadd.f32 %v206, %v3203
    %3205 = vmatmul.f32.gmra.mxu0 %v3077
    %v3206 = vpop.f32.mrf.mxu0
    %v3207 = vadd.f32 %v206, %v3206
    %3208 = vmatmul.f32.gmra.mxu0 %v3080
    %v3209 = vpop.f32.mrf.mxu0
    %v3210 = vadd.f32 %v206, %v3209
    %3211 = vmatmul.f32.gmra.mxu0 %v3083
    %v3212 = vpop.f32.mrf.mxu0
    %v3213 = vadd.f32 %v206, %v3212
    %3214 = vmatmul.f32.gmra.mxu0 %v3086
    %v3215 = vpop.f32.mrf.mxu0
    %v3216 = vadd.f32 %v206, %v3215
    %3217 = vmatmul.f32.gmra.mxu0 %v3089
    %v3218 = vpop.f32.mrf.mxu0
    %v3219 = vadd.f32 %v206, %v3218
    %3220 = vmatmul.f32.gmra.mxu0 %v3092
    %v3221 = vpop.f32.mrf.mxu0
    %v3222 = vadd.f32 %v206, %v3221
    %3223 = vmatmul.f32.gmra.mxu0 %v3095
    %v3224 = vpop.f32.mrf.mxu0
    %v3225 = vadd.f32 %v206, %v3224
    %3226 = vmatmul.f32.gmra.mxu0 %v3098
    %v3227 = vpop.f32.mrf.mxu0
    %v3228 = vadd.f32 %v206, %v3227
    %3229 = vmatmul.f32.gmra.mxu0 %v3101
    %v3230 = vpop.f32.mrf.mxu0
    %v3231 = vadd.f32 %v206, %v3230
    %3232 = vdwg.mxu0
    %3233 = vmatpush.msra.mxu0 0.0
    %3234 = vmatpush.msra.mxu0 0.0
    %3235 = vmatpush.msra.mxu0 0.0
    %3236 = vmatpush.msra.mxu0 0.0
    %3237 = vmatpush.msra.mxu0 0.0
    %3238 = vmatpush.msra.mxu0 0.0
    %3239 = vmatpush.msra.mxu0 0.0
    %3240 = vmatpush.msra.mxu0 0.0
    %3241 = vmatpush.msra.mxu0 0.0
    %3242 = vmatpush.msra.mxu0 0.0
    %3243 = vmatpush.msra.mxu0 0.0
    %3244 = vmatpush.msra.mxu0 0.0
    %3245 = vmatpush.msra.mxu0 0.0
    %3246 = vmatpush.msra.mxu0 0.0
    %3247 = vmatpush.msra.mxu0 0.0
    %3248 = vmatpush.msra.mxu0 %v64
    %3249 = vmatmul.f32.gmra.mxu0 %v3056
    %v3250 = vpop.f32.mrf.mxu0
    %v3251 = vadd.f32 %v207, %v3250
    %3252 = vmatmul.f32.gmra.mxu0 %v3059
    %v3253 = vpop.f32.mrf.mxu0
    %v3254 = vadd.f32 %v207, %v3253
    %3255 = vmatmul.f32.gmra.mxu0 %v3062
    %v3256 = vpop.f32.mrf.mxu0
    %v3257 = vadd.f32 %v207, %v3256
    %3258 = vmatmul.f32.gmra.mxu0 %v3065
    %v3259 = vpop.f32.mrf.mxu0
    %v3260 = vadd.f32 %v207, %v3259
    %3261 = vmatmul.f32.gmra.mxu0 %v3068
    %v3262 = vpop.f32.mrf.mxu0
    %v3263 = vadd.f32 %v207, %v3262
    %3264 = vmatmul.f32.gmra.mxu0 %v3071
    %v3265 = vpop.f32.mrf.mxu0
    %v3266 = vadd.f32 %v207, %v3265
    %3267 = vmatmul.f32.gmra.mxu0 %v3074
    %v3268 = vpop.f32.mrf.mxu0
    %v3269 = vadd.f32 %v207, %v3268
    %3270 = vmatmul.f32.gmra.mxu0 %v3077
    %v3271 = vpop.f32.mrf.mxu0
    %v3272 = vadd.f32 %v207, %v3271
    %3273 = vmatmul.f32.gmra.mxu0 %v3080
    %v3274 = vpop.f32.mrf.mxu0
    %v3275 = vadd.f32 %v207, %v3274
    %3276 = vmatmul.f32.gmra.mxu0 %v3083
    %v3277 = vpop.f32.mrf.mxu0
    %v3278 = vadd.f32 %v207, %v3277
    %3279 = vmatmul.f32.gmra.mxu0 %v3086
    %v3280 = vpop.f32.mrf.mxu0
    %v3281 = vadd.f32 %v207, %v3280
    %3282 = vmatmul.f32.gmra.mxu0 %v3089
    %v3283 = vpop.f32.mrf.mxu0
    %v3284 = vadd.f32 %v207, %v3283
    %3285 = vmatmul.f32.gmra.mxu0 %v3092
    %v3286 = vpop.f32.mrf.mxu0
    %v3287 = vadd.f32 %v207, %v3286
    %3288 = vmatmul.f32.gmra.mxu0 %v3095
    %v3289 = vpop.f32.mrf.mxu0
    %v3290 = vadd.f32 %v207, %v3289
    %3291 = vmatmul.f32.gmra.mxu0 %v3098
    %v3292 = vpop.f32.mrf.mxu0
    %v3293 = vadd.f32 %v207, %v3292
    %3294 = vmatmul.f32.gmra.mxu0 %v3101
    %v3295 = vpop.f32.mrf.mxu0
    %v3296 = vadd.f32 %v207, %v3295
    %3297 = vdwg.mxu0
    %3298 = vmatpush.msra.mxu0 0.0
    %3299 = vmatpush.msra.mxu0 0.0
    %3300 = vmatpush.msra.mxu0 0.0
    %3301 = vmatpush.msra.mxu0 0.0
    %3302 = vmatpush.msra.mxu0 0.0
    %3303 = vmatpush.msra.mxu0 0.0
    %3304 = vmatpush.msra.mxu0 0.0
    %3305 = vmatpush.msra.mxu0 0.0
    %3306 = vmatpush.msra.mxu0 0.0
    %3307 = vmatpush.msra.mxu0 0.0
    %3308 = vmatpush.msra.mxu0 0.0
    %3309 = vmatpush.msra.mxu0 0.0
    %3310 = vmatpush.msra.mxu0 0.0
    %3311 = vmatpush.msra.mxu0 0.0
    %3312 = vmatpush.msra.mxu0 0.0
    %3313 = vmatpush.msra.mxu0 %v65
    %3314 = vmatmul.f32.gmra.mxu0 %v3056
    %v3315 = vpop.f32.mrf.mxu0
    %v3316 = vadd.f32 %v208, %v3315
    %3317 = vmatmul.f32.gmra.mxu0 %v3059
    %v3318 = vpop.f32.mrf.mxu0
    %v3319 = vadd.f32 %v208, %v3318
    %3320 = vmatmul.f32.gmra.mxu0 %v3062
    %v3321 = vpop.f32.mrf.mxu0
    %v3322 = vadd.f32 %v208, %v3321
    %3323 = vmatmul.f32.gmra.mxu0 %v3065
    %v3324 = vpop.f32.mrf.mxu0
    %v3325 = vadd.f32 %v208, %v3324
    %3326 = vmatmul.f32.gmra.mxu0 %v3068
    %v3327 = vpop.f32.mrf.mxu0
    %v3328 = vadd.f32 %v208, %v3327
    %3329 = vmatmul.f32.gmra.mxu0 %v3071
    %v3330 = vpop.f32.mrf.mxu0
    %v3331 = vadd.f32 %v208, %v3330
    %3332 = vmatmul.f32.gmra.mxu0 %v3074
    %v3333 = vpop.f32.mrf.mxu0
    %v3334 = vadd.f32 %v208, %v3333
    %3335 = vmatmul.f32.gmra.mxu0 %v3077
    %v3336 = vpop.f32.mrf.mxu0
    %v3337 = vadd.f32 %v208, %v3336
    %3338 = vmatmul.f32.gmra.mxu0 %v3080
    %v3339 = vpop.f32.mrf.mxu0
    %v3340 = vadd.f32 %v208, %v3339
    %3341 = vmatmul.f32.gmra.mxu0 %v3083
    %v3342 = vpop.f32.mrf.mxu0
    %v3343 = vadd.f32 %v208, %v3342
    %3344 = vmatmul.f32.gmra.mxu0 %v3086
    %v3345 = vpop.f32.mrf.mxu0
    %v3346 = vadd.f32 %v208, %v3345
    %3347 = vmatmul.f32.gmra.mxu0 %v3089
    %v3348 = vpop.f32.mrf.mxu0
    %v3349 = vadd.f32 %v208, %v3348
    %3350 = vmatmul.f32.gmra.mxu0 %v3092
    %v3351 = vpop.f32.mrf.mxu0
    %v3352 = vadd.f32 %v208, %v3351
    %3353 = vmatmul.f32.gmra.mxu0 %v3095
    %v3354 = vpop.f32.mrf.mxu0
    %v3355 = vadd.f32 %v208, %v3354
    %3356 = vmatmul.f32.gmra.mxu0 %v3098
    %v3357 = vpop.f32.mrf.mxu0
    %v3358 = vadd.f32 %v208, %v3357
    %3359 = vmatmul.f32.gmra.mxu0 %v3101
    %v3360 = vpop.f32.mrf.mxu0
    %v3361 = vadd.f32 %v208, %v3360
    %3362 = vdwg.mxu0
    %3363 = vmatpush.msra.mxu0 0.0
    %3364 = vmatpush.msra.mxu0 0.0
    %3365 = vmatpush.msra.mxu0 0.0
    %3366 = vmatpush.msra.mxu0 0.0
    %3367 = vmatpush.msra.mxu0 0.0
    %3368 = vmatpush.msra.mxu0 0.0
    %3369 = vmatpush.msra.mxu0 0.0
    %3370 = vmatpush.msra.mxu0 0.0
    %3371 = vmatpush.msra.mxu0 0.0
    %3372 = vmatpush.msra.mxu0 0.0
    %3373 = vmatpush.msra.mxu0 0.0
    %3374 = vmatpush.msra.mxu0 0.0
    %3375 = vmatpush.msra.mxu0 0.0
    %3376 = vmatpush.msra.mxu0 0.0
    %3377 = vmatpush.msra.mxu0 0.0
    %3378 = vmatpush.msra.mxu0 %v66
    %3379 = vmatmul.f32.gmra.mxu0 %v3056
    %v3380 = vpop.f32.mrf.mxu0
    %v3381 = vadd.f32 %v209, %v3380
    %3382 = vmatmul.f32.gmra.mxu0 %v3059
    %v3383 = vpop.f32.mrf.mxu0
    %v3384 = vadd.f32 %v209, %v3383
    %3385 = vmatmul.f32.gmra.mxu0 %v3062
    %v3386 = vpop.f32.mrf.mxu0
    %v3387 = vadd.f32 %v209, %v3386
    %3388 = vmatmul.f32.gmra.mxu0 %v3065
    %v3389 = vpop.f32.mrf.mxu0
    %v3390 = vadd.f32 %v209, %v3389
    %3391 = vmatmul.f32.gmra.mxu0 %v3068
    %v3392 = vpop.f32.mrf.mxu0
    %v3393 = vadd.f32 %v209, %v3392
    %3394 = vmatmul.f32.gmra.mxu0 %v3071
    %v3395 = vpop.f32.mrf.mxu0
    %v3396 = vadd.f32 %v209, %v3395
    %3397 = vmatmul.f32.gmra.mxu0 %v3074
    %v3398 = vpop.f32.mrf.mxu0
    %v3399 = vadd.f32 %v209, %v3398
    %3400 = vmatmul.f32.gmra.mxu0 %v3077
    %v3401 = vpop.f32.mrf.mxu0
    %v3402 = vadd.f32 %v209, %v3401
    %3403 = vmatmul.f32.gmra.mxu0 %v3080
    %v3404 = vpop.f32.mrf.mxu0
    %v3405 = vadd.f32 %v209, %v3404
    %3406 = vmatmul.f32.gmra.mxu0 %v3083
    %v3407 = vpop.f32.mrf.mxu0
    %v3408 = vadd.f32 %v209, %v3407
    %3409 = vmatmul.f32.gmra.mxu0 %v3086
    %v3410 = vpop.f32.mrf.mxu0
    %v3411 = vadd.f32 %v209, %v3410
    %3412 = vmatmul.f32.gmra.mxu0 %v3089
    %v3413 = vpop.f32.mrf.mxu0
    %v3414 = vadd.f32 %v209, %v3413
    %3415 = vmatmul.f32.gmra.mxu0 %v3092
    %v3416 = vpop.f32.mrf.mxu0
    %v3417 = vadd.f32 %v209, %v3416
    %3418 = vmatmul.f32.gmra.mxu0 %v3095
    %v3419 = vpop.f32.mrf.mxu0
    %v3420 = vadd.f32 %v209, %v3419
    %3421 = vmatmul.f32.gmra.mxu0 %v3098
    %v3422 = vpop.f32.mrf.mxu0
    %v3423 = vadd.f32 %v209, %v3422
    %3424 = vmatmul.f32.gmra.mxu0 %v3101
    %v3425 = vpop.f32.mrf.mxu0
    %v3426 = vadd.f32 %v209, %v3425
    %3427 = vdwg.mxu0
    %3428 = vmatpush.msra.mxu0 0.0
    %3429 = vmatpush.msra.mxu0 0.0
    %3430 = vmatpush.msra.mxu0 0.0
    %3431 = vmatpush.msra.mxu0 0.0
    %3432 = vmatpush.msra.mxu0 0.0
    %3433 = vmatpush.msra.mxu0 0.0
    %3434 = vmatpush.msra.mxu0 0.0
    %3435 = vmatpush.msra.mxu0 0.0
    %3436 = vmatpush.msra.mxu0 0.0
    %3437 = vmatpush.msra.mxu0 0.0
    %3438 = vmatpush.msra.mxu0 0.0
    %3439 = vmatpush.msra.mxu0 0.0
    %3440 = vmatpush.msra.mxu0 0.0
    %3441 = vmatpush.msra.mxu0 0.0
    %3442 = vmatpush.msra.mxu0 0.0
    %3443 = vmatpush.msra.mxu0 %v67
    %3444 = vmatmul.f32.gmra.mxu0 %v3056
    %v3445 = vpop.f32.mrf.mxu0
    %v3446 = vadd.f32 %v210, %v3445
    %3447 = vmatmul.f32.gmra.mxu0 %v3059
    %v3448 = vpop.f32.mrf.mxu0
    %v3449 = vadd.f32 %v210, %v3448
    %3450 = vmatmul.f32.gmra.mxu0 %v3062
    %v3451 = vpop.f32.mrf.mxu0
    %v3452 = vadd.f32 %v210, %v3451
    %3453 = vmatmul.f32.gmra.mxu0 %v3065
    %v3454 = vpop.f32.mrf.mxu0
    %v3455 = vadd.f32 %v210, %v3454
    %3456 = vmatmul.f32.gmra.mxu0 %v3068
    %v3457 = vpop.f32.mrf.mxu0
    %v3458 = vadd.f32 %v210, %v3457
    %3459 = vmatmul.f32.gmra.mxu0 %v3071
    %v3460 = vpop.f32.mrf.mxu0
    %v3461 = vadd.f32 %v210, %v3460
    %3462 = vmatmul.f32.gmra.mxu0 %v3074
    %v3463 = vpop.f32.mrf.mxu0
    %v3464 = vadd.f32 %v210, %v3463
    %3465 = vmatmul.f32.gmra.mxu0 %v3077
    %v3466 = vpop.f32.mrf.mxu0
    %v3467 = vadd.f32 %v210, %v3466
    %3468 = vmatmul.f32.gmra.mxu0 %v3080
    %v3469 = vpop.f32.mrf.mxu0
    %v3470 = vadd.f32 %v210, %v3469
    %3471 = vmatmul.f32.gmra.mxu0 %v3083
    %v3472 = vpop.f32.mrf.mxu0
    %v3473 = vadd.f32 %v210, %v3472
    %3474 = vmatmul.f32.gmra.mxu0 %v3086
    %v3475 = vpop.f32.mrf.mxu0
    %v3476 = vadd.f32 %v210, %v3475
    %3477 = vmatmul.f32.gmra.mxu0 %v3089
    %v3478 = vpop.f32.mrf.mxu0
    %v3479 = vadd.f32 %v210, %v3478
    %3480 = vmatmul.f32.gmra.mxu0 %v3092
    %v3481 = vpop.f32.mrf.mxu0
    %v3482 = vadd.f32 %v210, %v3481
    %3483 = vmatmul.f32.gmra.mxu0 %v3095
    %v3484 = vpop.f32.mrf.mxu0
    %v3485 = vadd.f32 %v210, %v3484
    %3486 = vmatmul.f32.gmra.mxu0 %v3098
    %v3487 = vpop.f32.mrf.mxu0
    %v3488 = vadd.f32 %v210, %v3487
    %3489 = vmatmul.f32.gmra.mxu0 %v3101
    %v3490 = vpop.f32.mrf.mxu0
    %v3491 = vadd.f32 %v210, %v3490
    %3492 = vdwg.mxu0
    %3493 = vmatpush.msra.mxu0 0.0
    %3494 = vmatpush.msra.mxu0 0.0
    %3495 = vmatpush.msra.mxu0 0.0
    %3496 = vmatpush.msra.mxu0 0.0
    %3497 = vmatpush.msra.mxu0 0.0
    %3498 = vmatpush.msra.mxu0 0.0
    %3499 = vmatpush.msra.mxu0 0.0
    %3500 = vmatpush.msra.mxu0 0.0
    %3501 = vmatpush.msra.mxu0 0.0
    %3502 = vmatpush.msra.mxu0 0.0
    %3503 = vmatpush.msra.mxu0 0.0
    %3504 = vmatpush.msra.mxu0 0.0
    %3505 = vmatpush.msra.mxu0 0.0
    %3506 = vmatpush.msra.mxu0 0.0
    %3507 = vmatpush.msra.mxu0 0.0
    %3508 = vmatpush.msra.mxu0 %v68
    %3509 = vmatmul.f32.gmra.mxu0 %v3056
    %v3510 = vpop.f32.mrf.mxu0
    %v3511 = vadd.f32 %v211, %v3510
    %3512 = vmatmul.f32.gmra.mxu0 %v3059
    %v3513 = vpop.f32.mrf.mxu0
    %v3514 = vadd.f32 %v211, %v3513
    %3515 = vmatmul.f32.gmra.mxu0 %v3062
    %v3516 = vpop.f32.mrf.mxu0
    %v3517 = vadd.f32 %v211, %v3516
    %3518 = vmatmul.f32.gmra.mxu0 %v3065
    %v3519 = vpop.f32.mrf.mxu0
    %v3520 = vadd.f32 %v211, %v3519
    %3521 = vmatmul.f32.gmra.mxu0 %v3068
    %v3522 = vpop.f32.mrf.mxu0
    %v3523 = vadd.f32 %v211, %v3522
    %3524 = vmatmul.f32.gmra.mxu0 %v3071
    %v3525 = vpop.f32.mrf.mxu0
    %v3526 = vadd.f32 %v211, %v3525
    %3527 = vmatmul.f32.gmra.mxu0 %v3074
    %v3528 = vpop.f32.mrf.mxu0
    %v3529 = vadd.f32 %v211, %v3528
    %3530 = vmatmul.f32.gmra.mxu0 %v3077
    %v3531 = vpop.f32.mrf.mxu0
    %v3532 = vadd.f32 %v211, %v3531
    %3533 = vmatmul.f32.gmra.mxu0 %v3080
    %v3534 = vpop.f32.mrf.mxu0
    %v3535 = vadd.f32 %v211, %v3534
    %3536 = vmatmul.f32.gmra.mxu0 %v3083
    %v3537 = vpop.f32.mrf.mxu0
    %v3538 = vadd.f32 %v211, %v3537
    %3539 = vmatmul.f32.gmra.mxu0 %v3086
    %v3540 = vpop.f32.mrf.mxu0
    %v3541 = vadd.f32 %v211, %v3540
    %3542 = vmatmul.f32.gmra.mxu0 %v3089
    %v3543 = vpop.f32.mrf.mxu0
    %v3544 = vadd.f32 %v211, %v3543
    %3545 = vmatmul.f32.gmra.mxu0 %v3092
    %v3546 = vpop.f32.mrf.mxu0
    %v3547 = vadd.f32 %v211, %v3546
    %3548 = vmatmul.f32.gmra.mxu0 %v3095
    %v3549 = vpop.f32.mrf.mxu0
    %v3550 = vadd.f32 %v211, %v3549
    %3551 = vmatmul.f32.gmra.mxu0 %v3098
    %v3552 = vpop.f32.mrf.mxu0
    %v3553 = vadd.f32 %v211, %v3552
    %3554 = vmatmul.f32.gmra.mxu0 %v3101
    %v3555 = vpop.f32.mrf.mxu0
    %v3556 = vadd.f32 %v211, %v3555
    %3557 = vdwg.mxu0
    %3558 = vmatpush.msra.mxu0 0.0
    %3559 = vmatpush.msra.mxu0 0.0
    %3560 = vmatpush.msra.mxu0 0.0
    %3561 = vmatpush.msra.mxu0 0.0
    %3562 = vmatpush.msra.mxu0 0.0
    %3563 = vmatpush.msra.mxu0 0.0
    %3564 = vmatpush.msra.mxu0 0.0
    %3565 = vmatpush.msra.mxu0 0.0
    %3566 = vmatpush.msra.mxu0 0.0
    %3567 = vmatpush.msra.mxu0 0.0
    %3568 = vmatpush.msra.mxu0 0.0
    %3569 = vmatpush.msra.mxu0 0.0
    %3570 = vmatpush.msra.mxu0 0.0
    %3571 = vmatpush.msra.mxu0 0.0
    %3572 = vmatpush.msra.mxu0 0.0
    %3573 = vmatpush.msra.mxu0 %v69
    %3574 = vmatmul.f32.gmra.mxu0 %v3056
    %v3575 = vpop.f32.mrf.mxu0
    %v3576 = vadd.f32 %v212, %v3575
    %3577 = vmatmul.f32.gmra.mxu0 %v3059
    %v3578 = vpop.f32.mrf.mxu0
    %v3579 = vadd.f32 %v212, %v3578
    %3580 = vmatmul.f32.gmra.mxu0 %v3062
    %v3581 = vpop.f32.mrf.mxu0
    %v3582 = vadd.f32 %v212, %v3581
    %3583 = vmatmul.f32.gmra.mxu0 %v3065
    %v3584 = vpop.f32.mrf.mxu0
    %v3585 = vadd.f32 %v212, %v3584
    %3586 = vmatmul.f32.gmra.mxu0 %v3068
    %v3587 = vpop.f32.mrf.mxu0
    %v3588 = vadd.f32 %v212, %v3587
    %3589 = vmatmul.f32.gmra.mxu0 %v3071
    %v3590 = vpop.f32.mrf.mxu0
    %v3591 = vadd.f32 %v212, %v3590
    %3592 = vmatmul.f32.gmra.mxu0 %v3074
    %v3593 = vpop.f32.mrf.mxu0
    %v3594 = vadd.f32 %v212, %v3593
    %3595 = vmatmul.f32.gmra.mxu0 %v3077
    %v3596 = vpop.f32.mrf.mxu0
    %v3597 = vadd.f32 %v212, %v3596
    %3598 = vmatmul.f32.gmra.mxu0 %v3080
    %v3599 = vpop.f32.mrf.mxu0
    %v3600 = vadd.f32 %v212, %v3599
    %3601 = vmatmul.f32.gmra.mxu0 %v3083
    %v3602 = vpop.f32.mrf.mxu0
    %v3603 = vadd.f32 %v212, %v3602
    %3604 = vmatmul.f32.gmra.mxu0 %v3086
    %v3605 = vpop.f32.mrf.mxu0
    %v3606 = vadd.f32 %v212, %v3605
    %3607 = vmatmul.f32.gmra.mxu0 %v3089
    %v3608 = vpop.f32.mrf.mxu0
    %v3609 = vadd.f32 %v212, %v3608
    %3610 = vmatmul.f32.gmra.mxu0 %v3092
    %v3611 = vpop.f32.mrf.mxu0
    %v3612 = vadd.f32 %v212, %v3611
    %3613 = vmatmul.f32.gmra.mxu0 %v3095
    %v3614 = vpop.f32.mrf.mxu0
    %v3615 = vadd.f32 %v212, %v3614
    %3616 = vmatmul.f32.gmra.mxu0 %v3098
    %v3617 = vpop.f32.mrf.mxu0
    %v3618 = vadd.f32 %v212, %v3617
    %3619 = vmatmul.f32.gmra.mxu0 %v3101
    %v3620 = vpop.f32.mrf.mxu0
    %v3621 = vadd.f32 %v212, %v3620
    %3622 = vdwg.mxu0
    %v3623 = vmax.f32 %v3121, 0.0
    %v3624 = vmax.f32 %v3186, 0.0
    %v3625 = vmax.f32 %v3251, 0.0
    %v3626 = vmax.f32 %v3316, 0.0
    %v3627 = vmax.f32 %v3381, 0.0
    %v3628 = vmax.f32 %v3446, 0.0
    %v3629 = vmax.f32 %v3511, 0.0
    %v3630 = vmax.f32 %v3576, 0.0
    %v3631 = vmax.f32 %v3124, 0.0
    %v3632 = vmax.f32 %v3189, 0.0
    %v3633 = vmax.f32 %v3254, 0.0
    %v3634 = vmax.f32 %v3319, 0.0
    %v3635 = vmax.f32 %v3384, 0.0
    %v3636 = vmax.f32 %v3449, 0.0
    %v3637 = vmax.f32 %v3514, 0.0
    %v3638 = vmax.f32 %v3579, 0.0
    %v3639 = vmax.f32 %v3127, 0.0
    %v3640 = vmax.f32 %v3192, 0.0
    %v3641 = vmax.f32 %v3257, 0.0
    %v3642 = vmax.f32 %v3322, 0.0
    %v3643 = vmax.f32 %v3387, 0.0
    %v3644 = vmax.f32 %v3452, 0.0
    %v3645 = vmax.f32 %v3517, 0.0
    %v3646 = vmax.f32 %v3582, 0.0
    %v3647 = vmax.f32 %v3130, 0.0
    %v3648 = vmax.f32 %v3195, 0.0
    %v3649 = vmax.f32 %v3260, 0.0
    %v3650 = vmax.f32 %v3325, 0.0
    %v3651 = vmax.f32 %v3390, 0.0
    %v3652 = vmax.f32 %v3455, 0.0
    %v3653 = vmax.f32 %v3520, 0.0
    %v3654 = vmax.f32 %v3585, 0.0
    %v3655 = vmax.f32 %v3133, 0.0
    %v3656 = vmax.f32 %v3198, 0.0
    %v3657 = vmax.f32 %v3263, 0.0
    %v3658 = vmax.f32 %v3328, 0.0
    %v3659 = vmax.f32 %v3393, 0.0
    %v3660 = vmax.f32 %v3458, 0.0
    %v3661 = vmax.f32 %v3523, 0.0
    %v3662 = vmax.f32 %v3588, 0.0
    %v3663 = vmax.f32 %v3136, 0.0
    %v3664 = vmax.f32 %v3201, 0.0
    %v3665 = vmax.f32 %v3266, 0.0
    %v3666 = vmax.f32 %v3331, 0.0
    %v3667 = vmax.f32 %v3396, 0.0
    %v3668 = vmax.f32 %v3461, 0.0
    %v3669 = vmax.f32 %v3526, 0.0
    %v3670 = vmax.f32 %v3591, 0.0
    %v3671 = vmax.f32 %v3139, 0.0
    %v3672 = vmax.f32 %v3204, 0.0
    %v3673 = vmax.f32 %v3269, 0.0
    %v3674 = vmax.f32 %v3334, 0.0
    %v3675 = vmax.f32 %v3399, 0.0
    %v3676 = vmax.f32 %v3464, 0.0
    %v3677 = vmax.f32 %v3529, 0.0
    %v3678 = vmax.f32 %v3594, 0.0
    %v3679 = vmax.f32 %v3142, 0.0
    %v3680 = vmax.f32 %v3207, 0.0
    %v3681 = vmax.f32 %v3272, 0.0
    %v3682 = vmax.f32 %v3337, 0.0
    %v3683 = vmax.f32 %v3402, 0.0
    %v3684 = vmax.f32 %v3467, 0.0
    %v3685 = vmax.f32 %v3532, 0.0
    %v3686 = vmax.f32 %v3597, 0.0
    %v3687 = vmax.f32 %v3145, 0.0
    %v3688 = vmax.f32 %v3210, 0.0
    %v3689 = vmax.f32 %v3275, 0.0
    %v3690 = vmax.f32 %v3340, 0.0
    %v3691 = vmax.f32 %v3405, 0.0
    %v3692 = vmax.f32 %v3470, 0.0
    %v3693 = vmax.f32 %v3535, 0.0
    %v3694 = vmax.f32 %v3600, 0.0
    %v3695 = vmax.f32 %v3148, 0.0
    %v3696 = vmax.f32 %v3213, 0.0
    %v3697 = vmax.f32 %v3278, 0.0
    %v3698 = vmax.f32 %v3343, 0.0
    %v3699 = vmax.f32 %v3408, 0.0
    %v3700 = vmax.f32 %v3473, 0.0
    %v3701 = vmax.f32 %v3538, 0.0
    %v3702 = vmax.f32 %v3603, 0.0
    %v3703 = vmax.f32 %v3151, 0.0
    %v3704 = vmax.f32 %v3216, 0.0
    %v3705 = vmax.f32 %v3281, 0.0
    %v3706 = vmax.f32 %v3346, 0.0
    %v3707 = vmax.f32 %v3411, 0.0
    %v3708 = vmax.f32 %v3476, 0.0
    %v3709 = vmax.f32 %v3541, 0.0
    %v3710 = vmax.f32 %v3606, 0.0
    %v3711 = vmax.f32 %v3154, 0.0
    %v3712 = vmax.f32 %v3219, 0.0
    %v3713 = vmax.f32 %v3284, 0.0
    %v3714 = vmax.f32 %v3349, 0.0
    %v3715 = vmax.f32 %v3414, 0.0
    %v3716 = vmax.f32 %v3479, 0.0
    %v3717 = vmax.f32 %v3544, 0.0
    %v3718 = vmax.f32 %v3609, 0.0
    %v3719 = vmax.f32 %v3157, 0.0
    %v3720 = vmax.f32 %v3222, 0.0
    %v3721 = vmax.f32 %v3287, 0.0
    %v3722 = vmax.f32 %v3352, 0.0
    %v3723 = vmax.f32 %v3417, 0.0
    %v3724 = vmax.f32 %v3482, 0.0
    %v3725 = vmax.f32 %v3547, 0.0
    %v3726 = vmax.f32 %v3612, 0.0
    %v3727 = vmax.f32 %v3160, 0.0
    %v3728 = vmax.f32 %v3225, 0.0
    %v3729 = vmax.f32 %v3290, 0.0
    %v3730 = vmax.f32 %v3355, 0.0
    %v3731 = vmax.f32 %v3420, 0.0
    %v3732 = vmax.f32 %v3485, 0.0
    %v3733 = vmax.f32 %v3550, 0.0
    %v3734 = vmax.f32 %v3615, 0.0
    %v3735 = vmax.f32 %v3163, 0.0
    %v3736 = vmax.f32 %v3228, 0.0
    %v3737 = vmax.f32 %v3293, 0.0
    %v3738 = vmax.f32 %v3358, 0.0
    %v3739 = vmax.f32 %v3423, 0.0
    %v3740 = vmax.f32 %v3488, 0.0
    %v3741 = vmax.f32 %v3553, 0.0
    %v3742 = vmax.f32 %v3618, 0.0
    %v3743 = vmax.f32 %v3166, 0.0
    %v3744 = vmax.f32 %v3231, 0.0
    %v3745 = vmax.f32 %v3296, 0.0
    %v3746 = vmax.f32 %v3361, 0.0
    %v3747 = vmax.f32 %v3426, 0.0
    %v3748 = vmax.f32 %v3491, 0.0
    %v3749 = vmax.f32 %v3556, 0.0
    %v3750 = vmax.f32 %v3621, 0.0
    %v3751 = vadd.f32 %v3623, %v3631
    %v3752 = vadd.f32 %v3751, %v3639
    %v3753 = vadd.f32 %v3752, %v3647
    %v3754 = vadd.f32 %v3753, %v3655
    %v3755 = vadd.f32 %v3754, %v3663
    %v3756 = vadd.f32 %v3755, %v3671
    %v3757 = vadd.f32 %v3756, %v3679
    %v3758 = vadd.f32 %v3757, %v3687
    %v3759 = vadd.f32 %v3758, %v3695
    %v3760 = vadd.f32 %v3759, %v3703
    %v3761 = vadd.f32 %v3760, %v3711
    %v3762 = vadd.f32 %v3761, %v3719
    %v3763 = vadd.f32 %v3762, %v3727
    %v3764 = vadd.f32 %v3763, %v3735
    %v3765 = vadd.f32 %v3764, %v3743
    %v3766 = vrot.slane %v3765, 4
    %v3767 = vadd.f32 %v3765, %v3766
    %v3768 = vrot.slane %v3767, 2
    %v3769 = vadd.f32 %v3767, %v3768
    %v3770 = vrot.slane %v3769, 1
    %v3771 = vadd.f32 %v3769, %v3770
    %v3772 = vadd.f32 %v3624, %v3632
    %v3773 = vadd.f32 %v3772, %v3640
    %v3774 = vadd.f32 %v3773, %v3648
    %v3775 = vadd.f32 %v3774, %v3656
    %v3776 = vadd.f32 %v3775, %v3664
    %v3777 = vadd.f32 %v3776, %v3672
    %v3778 = vadd.f32 %v3777, %v3680
    %v3779 = vadd.f32 %v3778, %v3688
    %v3780 = vadd.f32 %v3779, %v3696
    %v3781 = vadd.f32 %v3780, %v3704
    %v3782 = vadd.f32 %v3781, %v3712
    %v3783 = vadd.f32 %v3782, %v3720
    %v3784 = vadd.f32 %v3783, %v3728
    %v3785 = vadd.f32 %v3784, %v3736
    %v3786 = vadd.f32 %v3785, %v3744
    %v3787 = vrot.slane %v3786, 4
    %v3788 = vadd.f32 %v3786, %v3787
    %v3789 = vrot.slane %v3788, 2
    %v3790 = vadd.f32 %v3788, %v3789
    %v3791 = vrot.slane %v3790, 1
    %v3792 = vadd.f32 %v3790, %v3791
    %v3793 = vadd.f32 %v3625, %v3633
    %v3794 = vadd.f32 %v3793, %v3641
    %v3795 = vadd.f32 %v3794, %v3649
    %v3796 = vadd.f32 %v3795, %v3657
    %v3797 = vadd.f32 %v3796, %v3665
    %v3798 = vadd.f32 %v3797, %v3673
    %v3799 = vadd.f32 %v3798, %v3681
    %v3800 = vadd.f32 %v3799, %v3689
    %v3801 = vadd.f32 %v3800, %v3697
    %v3802 = vadd.f32 %v3801, %v3705
    %v3803 = vadd.f32 %v3802, %v3713
    %v3804 = vadd.f32 %v3803, %v3721
    %v3805 = vadd.f32 %v3804, %v3729
    %v3806 = vadd.f32 %v3805, %v3737
    %v3807 = vadd.f32 %v3806, %v3745
    %v3808 = vrot.slane %v3807, 4
    %v3809 = vadd.f32 %v3807, %v3808
    %v3810 = vrot.slane %v3809, 2
    %v3811 = vadd.f32 %v3809, %v3810
    %v3812 = vrot.slane %v3811, 1
    %v3813 = vadd.f32 %v3811, %v3812
    %v3814 = vadd.f32 %v3626, %v3634
    %v3815 = vadd.f32 %v3814, %v3642
    %v3816 = vadd.f32 %v3815, %v3650
    %v3817 = vadd.f32 %v3816, %v3658
    %v3818 = vadd.f32 %v3817, %v3666
    %v3819 = vadd.f32 %v3818, %v3674
    %v3820 = vadd.f32 %v3819, %v3682
    %v3821 = vadd.f32 %v3820, %v3690
    %v3822 = vadd.f32 %v3821, %v3698
    %v3823 = vadd.f32 %v3822, %v3706
    %v3824 = vadd.f32 %v3823, %v3714
    %v3825 = vadd.f32 %v3824, %v3722
    %v3826 = vadd.f32 %v3825, %v3730
    %v3827 = vadd.f32 %v3826, %v3738
    %v3828 = vadd.f32 %v3827, %v3746
    %v3829 = vrot.slane %v3828, 4
    %v3830 = vadd.f32 %v3828, %v3829
    %v3831 = vrot.slane %v3830, 2
    %v3832 = vadd.f32 %v3830, %v3831
    %v3833 = vrot.slane %v3832, 1
    %v3834 = vadd.f32 %v3832, %v3833
    %v3835 = vadd.f32 %v3627, %v3635
    %v3836 = vadd.f32 %v3835, %v3643
    %v3837 = vadd.f32 %v3836, %v3651
    %v3838 = vadd.f32 %v3837, %v3659
    %v3839 = vadd.f32 %v3838, %v3667
    %v3840 = vadd.f32 %v3839, %v3675
    %v3841 = vadd.f32 %v3840, %v3683
    %v3842 = vadd.f32 %v3841, %v3691
    %v3843 = vadd.f32 %v3842, %v3699
    %v3844 = vadd.f32 %v3843, %v3707
    %v3845 = vadd.f32 %v3844, %v3715
    %v3846 = vadd.f32 %v3845, %v3723
    %v3847 = vadd.f32 %v3846, %v3731
    %v3848 = vadd.f32 %v3847, %v3739
    %v3849 = vadd.f32 %v3848, %v3747
    %v3850 = vrot.slane %v3849, 4
    %v3851 = vadd.f32 %v3849, %v3850
    %v3852 = vrot.slane %v3851, 2
    %v3853 = vadd.f32 %v3851, %v3852
    %v3854 = vrot.slane %v3853, 1
    %v3855 = vadd.f32 %v3853, %v3854
    %v3856 = vadd.f32 %v3628, %v3636
    %v3857 = vadd.f32 %v3856, %v3644
    %v3858 = vadd.f32 %v3857, %v3652
    %v3859 = vadd.f32 %v3858, %v3660
    %v3860 = vadd.f32 %v3859, %v3668
    %v3861 = vadd.f32 %v3860, %v3676
    %v3862 = vadd.f32 %v3861, %v3684
    %v3863 = vadd.f32 %v3862, %v3692
    %v3864 = vadd.f32 %v3863, %v3700
    %v3865 = vadd.f32 %v3864, %v3708
    %v3866 = vadd.f32 %v3865, %v3716
    %v3867 = vadd.f32 %v3866, %v3724
    %v3868 = vadd.f32 %v3867, %v3732
    %v3869 = vadd.f32 %v3868, %v3740
    %v3870 = vadd.f32 %v3869, %v3748
    %v3871 = vrot.slane %v3870, 4
    %v3872 = vadd.f32 %v3870, %v3871
    %v3873 = vrot.slane %v3872, 2
    %v3874 = vadd.f32 %v3872, %v3873
    %v3875 = vrot.slane %v3874, 1
    %v3876 = vadd.f32 %v3874, %v3875
    %v3877 = vadd.f32 %v3629, %v3637
    %v3878 = vadd.f32 %v3877, %v3645
    %v3879 = vadd.f32 %v3878, %v3653
    %v3880 = vadd.f32 %v3879, %v3661
    %v3881 = vadd.f32 %v3880, %v3669
    %v3882 = vadd.f32 %v3881, %v3677
    %v3883 = vadd.f32 %v3882, %v3685
    %v3884 = vadd.f32 %v3883, %v3693
    %v3885 = vadd.f32 %v3884, %v3701
    %v3886 = vadd.f32 %v3885, %v3709
    %v3887 = vadd.f32 %v3886, %v3717
    %v3888 = vadd.f32 %v3887, %v3725
    %v3889 = vadd.f32 %v3888, %v3733
    %v3890 = vadd.f32 %v3889, %v3741
    %v3891 = vadd.f32 %v3890, %v3749
    %v3892 = vrot.slane %v3891, 4
    %v3893 = vadd.f32 %v3891, %v3892
    %v3894 = vrot.slane %v3893, 2
    %v3895 = vadd.f32 %v3893, %v3894
    %v3896 = vrot.slane %v3895, 1
    %v3897 = vadd.f32 %v3895, %v3896
    %v3898 = vadd.f32 %v3630, %v3638
    %v3899 = vadd.f32 %v3898, %v3646
    %v3900 = vadd.f32 %v3899, %v3654
    %v3901 = vadd.f32 %v3900, %v3662
    %v3902 = vadd.f32 %v3901, %v3670
    %v3903 = vadd.f32 %v3902, %v3678
    %v3904 = vadd.f32 %v3903, %v3686
    %v3905 = vadd.f32 %v3904, %v3694
    %v3906 = vadd.f32 %v3905, %v3702
    %v3907 = vadd.f32 %v3906, %v3710
    %v3908 = vadd.f32 %v3907, %v3718
    %v3909 = vadd.f32 %v3908, %v3726
    %v3910 = vadd.f32 %v3909, %v3734
    %v3911 = vadd.f32 %v3910, %v3742
    %v3912 = vadd.f32 %v3911, %v3750
    %v3913 = vrot.slane %v3912, 4
    %v3914 = vadd.f32 %v3912, %v3913
    %v3915 = vrot.slane %v3914, 2
    %v3916 = vadd.f32 %v3914, %v3915
    %v3917 = vrot.slane %v3916, 1
    %v3918 = vadd.f32 %v3916, %v3917
    %v3919 = vadd.f32 %v2981, %v3771
    %v3920 = vadd.f32 %v2982, %v3792
    %v3921 = vadd.f32 %v2983, %v3813
    %v3922 = vadd.f32 %v2984, %v3834
    %v3923 = vadd.f32 %v2985, %v3855
    %v3924 = vadd.f32 %v2986, %v3876
    %v3925 = vadd.f32 %v2987, %v3897
    %v3926 = vadd.f32 %v2988, %v3918
    %vm3927 = vcmp.eq.s32.totalorder %v72, 1
    %v3928 = vsel %vm3927, 1.0, 0.0
    %v3929 = vmul.f32 %v3928, %v3919
    %v3930 = vmul.f32 %v3928, %v3920
    %v3931 = vmul.f32 %v3928, %v3921
    %v3932 = vmul.f32 %v3928, %v3922
    %v3933 = vmul.f32 %v3928, %v3923
    %v3934 = vmul.f32 %v3928, %v3924
    %v3935 = vmul.f32 %v3928, %v3925
    %v3936 = vmul.f32 %v3928, %v3926
    %v3937 = vadd.f32 %v2042, %v3929
    %v3938 = vadd.f32 %v2043, %v3930
    %v3939 = vadd.f32 %v2044, %v3931
    %v3940 = vadd.f32 %v2045, %v3932
    %v3941 = vadd.f32 %v2046, %v3933
    %v3942 = vadd.f32 %v2047, %v3934
    %v3943 = vadd.f32 %v2048, %v3935
    %v3944 = vadd.f32 %v2049, %v3936
    %v3945 = vmul.f32 %v3937, 0.00390625
    %v3946 = vmul.f32 %v3938, 0.00390625
    %v3947 = vmul.f32 %v3939, 0.00390625
    %v3948 = vmul.f32 %v3940, 0.00390625
    %v3949 = vmul.f32 %v3941, 0.00390625
    %v3950 = vmul.f32 %v3942, 0.00390625
    %v3951 = vmul.f32 %v3943, 0.00390625
    %v3952 = vmul.f32 %v3944, 0.00390625
    %v3953 = vpack.c.bf16 %v3949, %v3949
    %v3954 = vpack.c.bf16 %v3950, %v3950
    %v3955 = vpack.c.bf16 %v3951, %v3951
    %v3956 = vpack.c.bf16 %v3952, %v3952
    %v3957 = vld [vmem:[#allocation2] sm:$0xff]
    %v3958 = vld [vmem:[#allocation2 + $0x8] sm:$0xff]
    %v3959 = vld [vmem:[#allocation2 + $0x10] sm:$0xff]
    %v3960 = vld [vmem:[#allocation2 + $0x18] sm:$0xff]
    %v3961 = vld [vmem:[#allocation2 + $0x20] sm:$0xff]
    %v3962 = vld [vmem:[#allocation2 + $0x28] sm:$0xff]
    %v3963 = vld [vmem:[#allocation2 + $0x30] sm:$0xff]
    %v3964 = vld [vmem:[#allocation2 + $0x38] sm:$0xff]
    %v3965 = vld [vmem:[#allocation2 + $0x40] sm:$0xff]
    %v3966 = vld [vmem:[#allocation2 + $0x48] sm:$0xff]
    %v3967 = vld [vmem:[#allocation2 + $0x50] sm:$0xff]
    %v3968 = vld [vmem:[#allocation2 + $0x58] sm:$0xff]
    %v3969 = vld [vmem:[#allocation2 + $0x60] sm:$0xff]
    %v3970 = vld [vmem:[#allocation2 + $0x68] sm:$0xff]
    %v3971 = vld [vmem:[#allocation2 + $0x70] sm:$0xff]
    %v3972 = vld [vmem:[#allocation2 + $0x78] sm:$0xff]
    %v3973 = vld [vmem:[#allocation2 + $0x80] sm:$0xff]
    %v3974 = vld [vmem:[#allocation2 + $0x88] sm:$0xff]
    %v3975 = vld [vmem:[#allocation2 + $0x90] sm:$0xff]
    %v3976 = vld [vmem:[#allocation2 + $0x98] sm:$0xff]
    %v3977 = vld [vmem:[#allocation2 + $0xa0] sm:$0xff]
    %v3978 = vld [vmem:[#allocation2 + $0xa8] sm:$0xff]
    %v3979 = vld [vmem:[#allocation2 + $0xb0] sm:$0xff]
    %v3980 = vld [vmem:[#allocation2 + $0xb8] sm:$0xff]
    %v3981 = vld [vmem:[#allocation2 + $0xc0] sm:$0xff]
    %v3982 = vld [vmem:[#allocation2 + $0xc8] sm:$0xff]
    %v3983 = vld [vmem:[#allocation2 + $0xd0] sm:$0xff]
    %v3984 = vld [vmem:[#allocation2 + $0xd8] sm:$0xff]
    %v3985 = vld [vmem:[#allocation2 + $0xe0] sm:$0xff]
    %v3986 = vld [vmem:[#allocation2 + $0xe8] sm:$0xff]
    %v3987 = vld [vmem:[#allocation2 + $0xf0] sm:$0xff]
    %v3988 = vld [vmem:[#allocation2 + $0xf8] sm:$0xff]
    %v3989 = vld [vmem:[#allocation2 + $0x100] sm:$0xff]
    %v3990 = vld [vmem:[#allocation2 + $0x108] sm:$0xff]
    %v3991 = vld [vmem:[#allocation2 + $0x110] sm:$0xff]
    %v3992 = vld [vmem:[#allocation2 + $0x118] sm:$0xff]
    %v3993 = vld [vmem:[#allocation2 + $0x120] sm:$0xff]
    %v3994 = vld [vmem:[#allocation2 + $0x128] sm:$0xff]
    %v3995 = vld [vmem:[#allocation2 + $0x130] sm:$0xff]
    %v3996 = vld [vmem:[#allocation2 + $0x138] sm:$0xff]
    %v3997 = vld [vmem:[#allocation2 + $0x140] sm:$0xff]
    %v3998 = vld [vmem:[#allocation2 + $0x148] sm:$0xff]
    %v3999 = vld [vmem:[#allocation2 + $0x150] sm:$0xff]
    %v4000 = vld [vmem:[#allocation2 + $0x158] sm:$0xff]
    %v4001 = vld [vmem:[#allocation2 + $0x160] sm:$0xff]
    %v4002 = vld [vmem:[#allocation2 + $0x168] sm:$0xff]
    %v4003 = vld [vmem:[#allocation2 + $0x170] sm:$0xff]
    %v4004 = vld [vmem:[#allocation2 + $0x178] sm:$0xff]
    %v4005 = vld [vmem:[#allocation2 + $0x180] sm:$0xff]
    %v4006 = vld [vmem:[#allocation2 + $0x188] sm:$0xff]
    %v4007 = vld [vmem:[#allocation2 + $0x190] sm:$0xff]
    %v4008 = vld [vmem:[#allocation2 + $0x198] sm:$0xff]
    %v4009 = vld [vmem:[#allocation2 + $0x1a0] sm:$0xff]
    %v4010 = vld [vmem:[#allocation2 + $0x1a8] sm:$0xff]
    %v4011 = vld [vmem:[#allocation2 + $0x1b0] sm:$0xff]
    %v4012 = vld [vmem:[#allocation2 + $0x1b8] sm:$0xff]
    %v4013 = vld [vmem:[#allocation2 + $0x1c0] sm:$0xff]
    %v4014 = vld [vmem:[#allocation2 + $0x1c8] sm:$0xff]
    %v4015 = vld [vmem:[#allocation2 + $0x1d0] sm:$0xff]
    %v4016 = vld [vmem:[#allocation2 + $0x1d8] sm:$0xff]
    %v4017 = vld [vmem:[#allocation2 + $0x1e0] sm:$0xff]
    %v4018 = vld [vmem:[#allocation2 + $0x1e8] sm:$0xff]
    %v4019 = vld [vmem:[#allocation2 + $0x1f0] sm:$0xff]
    %v4020 = vld [vmem:[#allocation2 + $0x1f8] sm:$0xff]
    %v4021 = vld [vmem:[#allocation2 + $0x200] sm:$0xff]
    %v4022 = vld [vmem:[#allocation2 + $0x208] sm:$0xff]
    %v4023 = vld [vmem:[#allocation2 + $0x210] sm:$0xff]
    %v4024 = vld [vmem:[#allocation2 + $0x218] sm:$0xff]
    %v4025 = vld [vmem:[#allocation2 + $0x220] sm:$0xff]
    %v4026 = vld [vmem:[#allocation2 + $0x228] sm:$0xff]
    %v4027 = vld [vmem:[#allocation2 + $0x230] sm:$0xff]
    %v4028 = vld [vmem:[#allocation2 + $0x238] sm:$0xff]
    %v4029 = vld [vmem:[#allocation2 + $0x240] sm:$0xff]
    %v4030 = vld [vmem:[#allocation2 + $0x248] sm:$0xff]
    %v4031 = vld [vmem:[#allocation2 + $0x250] sm:$0xff]
    %v4032 = vld [vmem:[#allocation2 + $0x258] sm:$0xff]
    %v4033 = vld [vmem:[#allocation2 + $0x260] sm:$0xff]
    %v4034 = vld [vmem:[#allocation2 + $0x268] sm:$0xff]
    %v4035 = vld [vmem:[#allocation2 + $0x270] sm:$0xff]
    %v4036 = vld [vmem:[#allocation2 + $0x278] sm:$0xff]
    %v4037 = vld [vmem:[#allocation2 + $0x280] sm:$0xff]
    %v4038 = vld [vmem:[#allocation2 + $0x288] sm:$0xff]
    %v4039 = vld [vmem:[#allocation2 + $0x290] sm:$0xff]
    %v4040 = vld [vmem:[#allocation2 + $0x298] sm:$0xff]
    %v4041 = vld [vmem:[#allocation2 + $0x2a0] sm:$0xff]
    %v4042 = vld [vmem:[#allocation2 + $0x2a8] sm:$0xff]
    %v4043 = vld [vmem:[#allocation2 + $0x2b0] sm:$0xff]
    %v4044 = vld [vmem:[#allocation2 + $0x2b8] sm:$0xff]
    %v4045 = vld [vmem:[#allocation2 + $0x2c0] sm:$0xff]
    %v4046 = vld [vmem:[#allocation2 + $0x2c8] sm:$0xff]
    %v4047 = vld [vmem:[#allocation2 + $0x2d0] sm:$0xff]
    %v4048 = vld [vmem:[#allocation2 + $0x2d8] sm:$0xff]
    %v4049 = vld [vmem:[#allocation2 + $0x2e0] sm:$0xff]
    %v4050 = vld [vmem:[#allocation2 + $0x2e8] sm:$0xff]
    %v4051 = vld [vmem:[#allocation2 + $0x2f0] sm:$0xff]
    %v4052 = vld [vmem:[#allocation2 + $0x2f8] sm:$0xff]
    %v4053 = vld [vmem:[#allocation2 + $0x300] sm:$0xff]
    %v4054 = vld [vmem:[#allocation2 + $0x308] sm:$0xff]
    %v4055 = vld [vmem:[#allocation2 + $0x310] sm:$0xff]
    %v4056 = vld [vmem:[#allocation2 + $0x318] sm:$0xff]
    %v4057 = vld [vmem:[#allocation2 + $0x320] sm:$0xff]
    %v4058 = vld [vmem:[#allocation2 + $0x328] sm:$0xff]
    %v4059 = vld [vmem:[#allocation2 + $0x330] sm:$0xff]
    %v4060 = vld [vmem:[#allocation2 + $0x338] sm:$0xff]
    %v4061 = vld [vmem:[#allocation2 + $0x340] sm:$0xff]
    %v4062 = vld [vmem:[#allocation2 + $0x348] sm:$0xff]
    %v4063 = vld [vmem:[#allocation2 + $0x350] sm:$0xff]
    %v4064 = vld [vmem:[#allocation2 + $0x358] sm:$0xff]
    %v4065 = vld [vmem:[#allocation2 + $0x360] sm:$0xff]
    %v4066 = vld [vmem:[#allocation2 + $0x368] sm:$0xff]
    %v4067 = vld [vmem:[#allocation2 + $0x370] sm:$0xff]
    %v4068 = vld [vmem:[#allocation2 + $0x378] sm:$0xff]
    %v4069 = vld [vmem:[#allocation2 + $0x380] sm:$0xff]
    %v4070 = vld [vmem:[#allocation2 + $0x388] sm:$0xff]
    %v4071 = vld [vmem:[#allocation2 + $0x390] sm:$0xff]
    %v4072 = vld [vmem:[#allocation2 + $0x398] sm:$0xff]
    %v4073 = vld [vmem:[#allocation2 + $0x3a0] sm:$0xff]
    %v4074 = vld [vmem:[#allocation2 + $0x3a8] sm:$0xff]
    %v4075 = vld [vmem:[#allocation2 + $0x3b0] sm:$0xff]
    %v4076 = vld [vmem:[#allocation2 + $0x3b8] sm:$0xff]
    %v4077 = vld [vmem:[#allocation2 + $0x3c0] sm:$0xff]
    %v4078 = vld [vmem:[#allocation2 + $0x3c8] sm:$0xff]
    %v4079 = vld [vmem:[#allocation2 + $0x3d0] sm:$0xff]
    %v4080 = vld [vmem:[#allocation2 + $0x3d8] sm:$0xff]
    %v4081 = vld [vmem:[#allocation2 + $0x3e0] sm:$0xff]
    %v4082 = vld [vmem:[#allocation2 + $0x3e8] sm:$0xff]
    %v4083 = vld [vmem:[#allocation2 + $0x3f0] sm:$0xff]
    %v4084 = vld [vmem:[#allocation2 + $0x3f8] sm:$0xff]
    %v4213 = vunpack.c.l.b16 %v3957
    %v4214 = vunpack.c.h.b16 %v3957
    %v4215 = vunpack.c.l.b16 %v3958
    %v4216 = vunpack.c.h.b16 %v3958
    %v4217 = vunpack.c.l.b16 %v3959
    %v4218 = vunpack.c.h.b16 %v3959
    %v4219 = vunpack.c.l.b16 %v3960
    %v4220 = vunpack.c.h.b16 %v3960
    %v4221 = vunpack.c.l.b16 %v3961
    %v4222 = vunpack.c.h.b16 %v3961
    %v4223 = vunpack.c.l.b16 %v3962
    %v4224 = vunpack.c.h.b16 %v3962
    %v4225 = vunpack.c.l.b16 %v3963
    %v4226 = vunpack.c.h.b16 %v3963
    %v4227 = vunpack.c.l.b16 %v3964
    %v4228 = vunpack.c.h.b16 %v3964
    %v4229 = vunpack.c.l.b16 %v3965
    %v4230 = vunpack.c.h.b16 %v3965
    %v4231 = vunpack.c.l.b16 %v3966
    %v4232 = vunpack.c.h.b16 %v3966
    %v4233 = vunpack.c.l.b16 %v3967
    %v4234 = vunpack.c.h.b16 %v3967
    %v4235 = vunpack.c.l.b16 %v3968
    %v4236 = vunpack.c.h.b16 %v3968
    %v4237 = vunpack.c.l.b16 %v3969
    %v4238 = vunpack.c.h.b16 %v3969
    %v4239 = vunpack.c.l.b16 %v3970
    %v4240 = vunpack.c.h.b16 %v3970
    %v4241 = vunpack.c.l.b16 %v3971
    %v4242 = vunpack.c.h.b16 %v3971
    %v4243 = vunpack.c.l.b16 %v3972
    %v4244 = vunpack.c.h.b16 %v3972
    %v4245 = vunpack.c.l.b16 %v3973
    %v4246 = vunpack.c.h.b16 %v3973
    %v4247 = vunpack.c.l.b16 %v3974
    %v4248 = vunpack.c.h.b16 %v3974
    %v4249 = vunpack.c.l.b16 %v3975
    %v4250 = vunpack.c.h.b16 %v3975
    %v4251 = vunpack.c.l.b16 %v3976
    %v4252 = vunpack.c.h.b16 %v3976
    %v4253 = vunpack.c.l.b16 %v3977
    %v4254 = vunpack.c.h.b16 %v3977
    %v4255 = vunpack.c.l.b16 %v3978
    %v4256 = vunpack.c.h.b16 %v3978
    %v4257 = vunpack.c.l.b16 %v3979
    %v4258 = vunpack.c.h.b16 %v3979
    %v4259 = vunpack.c.l.b16 %v3980
    %v4260 = vunpack.c.h.b16 %v3980
    %v4261 = vunpack.c.l.b16 %v3981
    %v4262 = vunpack.c.h.b16 %v3981
    %v4263 = vunpack.c.l.b16 %v3982
    %v4264 = vunpack.c.h.b16 %v3982
    %v4265 = vunpack.c.l.b16 %v3983
    %v4266 = vunpack.c.h.b16 %v3983
    %v4267 = vunpack.c.l.b16 %v3984
    %v4268 = vunpack.c.h.b16 %v3984
    %v4269 = vunpack.c.l.b16 %v3985
    %v4270 = vunpack.c.h.b16 %v3985
    %v4271 = vunpack.c.l.b16 %v3986
    %v4272 = vunpack.c.h.b16 %v3986
    %v4273 = vunpack.c.l.b16 %v3987
    %v4274 = vunpack.c.h.b16 %v3987
    %v4275 = vunpack.c.l.b16 %v3988
    %v4276 = vunpack.c.h.b16 %v3988
    %v4277 = vunpack.c.l.b16 %v3989
    %v4278 = vunpack.c.h.b16 %v3989
    %v4279 = vunpack.c.l.b16 %v3990
    %v4280 = vunpack.c.h.b16 %v3990
    %v4281 = vunpack.c.l.b16 %v3991
    %v4282 = vunpack.c.h.b16 %v3991
    %v4283 = vunpack.c.l.b16 %v3992
    %v4284 = vunpack.c.h.b16 %v3992
    %v4285 = vunpack.c.l.b16 %v3993
    %v4286 = vunpack.c.h.b16 %v3993
    %v4287 = vunpack.c.l.b16 %v3994
    %v4288 = vunpack.c.h.b16 %v3994
    %v4289 = vunpack.c.l.b16 %v3995
    %v4290 = vunpack.c.h.b16 %v3995
    %v4291 = vunpack.c.l.b16 %v3996
    %v4292 = vunpack.c.h.b16 %v3996
    %v4293 = vunpack.c.l.b16 %v3997
    %v4294 = vunpack.c.h.b16 %v3997
    %v4295 = vunpack.c.l.b16 %v3998
    %v4296 = vunpack.c.h.b16 %v3998
    %v4297 = vunpack.c.l.b16 %v3999
    %v4298 = vunpack.c.h.b16 %v3999
    %v4299 = vunpack.c.l.b16 %v4000
    %v4300 = vunpack.c.h.b16 %v4000
    %v4301 = vunpack.c.l.b16 %v4001
    %v4302 = vunpack.c.h.b16 %v4001
    %v4303 = vunpack.c.l.b16 %v4002
    %v4304 = vunpack.c.h.b16 %v4002
    %v4305 = vunpack.c.l.b16 %v4003
    %v4306 = vunpack.c.h.b16 %v4003
    %v4307 = vunpack.c.l.b16 %v4004
    %v4308 = vunpack.c.h.b16 %v4004
    %v4309 = vunpack.c.l.b16 %v4005
    %v4310 = vunpack.c.h.b16 %v4005
    %v4311 = vunpack.c.l.b16 %v4006
    %v4312 = vunpack.c.h.b16 %v4006
    %v4313 = vunpack.c.l.b16 %v4007
    %v4314 = vunpack.c.h.b16 %v4007
    %v4315 = vunpack.c.l.b16 %v4008
    %v4316 = vunpack.c.h.b16 %v4008
    %v4317 = vunpack.c.l.b16 %v4009
    %v4318 = vunpack.c.h.b16 %v4009
    %v4319 = vunpack.c.l.b16 %v4010
    %v4320 = vunpack.c.h.b16 %v4010
    %v4321 = vunpack.c.l.b16 %v4011
    %v4322 = vunpack.c.h.b16 %v4011
    %v4323 = vunpack.c.l.b16 %v4012
    %v4324 = vunpack.c.h.b16 %v4012
    %v4325 = vunpack.c.l.b16 %v4013
    %v4326 = vunpack.c.h.b16 %v4013
    %v4327 = vunpack.c.l.b16 %v4014
    %v4328 = vunpack.c.h.b16 %v4014
    %v4329 = vunpack.c.l.b16 %v4015
    %v4330 = vunpack.c.h.b16 %v4015
    %v4331 = vunpack.c.l.b16 %v4016
    %v4332 = vunpack.c.h.b16 %v4016
    %v4333 = vunpack.c.l.b16 %v4017
    %v4334 = vunpack.c.h.b16 %v4017
    %v4335 = vunpack.c.l.b16 %v4018
    %v4336 = vunpack.c.h.b16 %v4018
    %v4337 = vunpack.c.l.b16 %v4019
    %v4338 = vunpack.c.h.b16 %v4019
    %v4339 = vunpack.c.l.b16 %v4020
    %v4340 = vunpack.c.h.b16 %v4020
    %v4341 = vunpack.c.l.b16 %v4021
    %v4342 = vunpack.c.h.b16 %v4021
    %v4343 = vunpack.c.l.b16 %v4022
    %v4344 = vunpack.c.h.b16 %v4022
    %v4345 = vunpack.c.l.b16 %v4023
    %v4346 = vunpack.c.h.b16 %v4023
    %v4347 = vunpack.c.l.b16 %v4024
    %v4348 = vunpack.c.h.b16 %v4024
    %v4349 = vunpack.c.l.b16 %v4025
    %v4350 = vunpack.c.h.b16 %v4025
    %v4351 = vunpack.c.l.b16 %v4026
    %v4352 = vunpack.c.h.b16 %v4026
    %v4353 = vunpack.c.l.b16 %v4027
    %v4354 = vunpack.c.h.b16 %v4027
    %v4355 = vunpack.c.l.b16 %v4028
    %v4356 = vunpack.c.h.b16 %v4028
    %v4357 = vunpack.c.l.b16 %v4029
    %v4358 = vunpack.c.h.b16 %v4029
    %v4359 = vunpack.c.l.b16 %v4030
    %v4360 = vunpack.c.h.b16 %v4030
    %v4361 = vunpack.c.l.b16 %v4031
    %v4362 = vunpack.c.h.b16 %v4031
    %v4363 = vunpack.c.l.b16 %v4032
    %v4364 = vunpack.c.h.b16 %v4032
    %v4365 = vunpack.c.l.b16 %v4033
    %v4366 = vunpack.c.h.b16 %v4033
    %v4367 = vunpack.c.l.b16 %v4034
    %v4368 = vunpack.c.h.b16 %v4034
    %v4369 = vunpack.c.l.b16 %v4035
    %v4370 = vunpack.c.h.b16 %v4035
    %v4371 = vunpack.c.l.b16 %v4036
    %v4372 = vunpack.c.h.b16 %v4036
    %v4373 = vunpack.c.l.b16 %v4037
    %v4374 = vunpack.c.h.b16 %v4037
    %v4375 = vunpack.c.l.b16 %v4038
    %v4376 = vunpack.c.h.b16 %v4038
    %v4377 = vunpack.c.l.b16 %v4039
    %v4378 = vunpack.c.h.b16 %v4039
    %v4379 = vunpack.c.l.b16 %v4040
    %v4380 = vunpack.c.h.b16 %v4040
    %v4381 = vunpack.c.l.b16 %v4041
    %v4382 = vunpack.c.h.b16 %v4041
    %v4383 = vunpack.c.l.b16 %v4042
    %v4384 = vunpack.c.h.b16 %v4042
    %v4385 = vunpack.c.l.b16 %v4043
    %v4386 = vunpack.c.h.b16 %v4043
    %v4387 = vunpack.c.l.b16 %v4044
    %v4388 = vunpack.c.h.b16 %v4044
    %v4389 = vunpack.c.l.b16 %v4045
    %v4390 = vunpack.c.h.b16 %v4045
    %v4391 = vunpack.c.l.b16 %v4046
    %v4392 = vunpack.c.h.b16 %v4046
    %v4393 = vunpack.c.l.b16 %v4047
    %v4394 = vunpack.c.h.b16 %v4047
    %v4395 = vunpack.c.l.b16 %v4048
    %v4396 = vunpack.c.h.b16 %v4048
    %v4397 = vunpack.c.l.b16 %v4049
    %v4398 = vunpack.c.h.b16 %v4049
    %v4399 = vunpack.c.l.b16 %v4050
    %v4400 = vunpack.c.h.b16 %v4050
    %v4401 = vunpack.c.l.b16 %v4051
    %v4402 = vunpack.c.h.b16 %v4051
    %v4403 = vunpack.c.l.b16 %v4052
    %v4404 = vunpack.c.h.b16 %v4052
    %v4405 = vunpack.c.l.b16 %v4053
    %v4406 = vunpack.c.h.b16 %v4053
    %v4407 = vunpack.c.l.b16 %v4054
    %v4408 = vunpack.c.h.b16 %v4054
    %v4409 = vunpack.c.l.b16 %v4055
    %v4410 = vunpack.c.h.b16 %v4055
    %v4411 = vunpack.c.l.b16 %v4056
    %v4412 = vunpack.c.h.b16 %v4056
    %v4413 = vunpack.c.l.b16 %v4057
    %v4414 = vunpack.c.h.b16 %v4057
    %v4415 = vunpack.c.l.b16 %v4058
    %v4416 = vunpack.c.h.b16 %v4058
    %v4417 = vunpack.c.l.b16 %v4059
    %v4418 = vunpack.c.h.b16 %v4059
    %v4419 = vunpack.c.l.b16 %v4060
    %v4420 = vunpack.c.h.b16 %v4060
    %v4421 = vunpack.c.l.b16 %v4061
    %v4422 = vunpack.c.h.b16 %v4061
    %v4423 = vunpack.c.l.b16 %v4062
    %v4424 = vunpack.c.h.b16 %v4062
    %v4425 = vunpack.c.l.b16 %v4063
    %v4426 = vunpack.c.h.b16 %v4063
    %v4427 = vunpack.c.l.b16 %v4064
    %v4428 = vunpack.c.h.b16 %v4064
    %v4429 = vunpack.c.l.b16 %v4065
    %v4430 = vunpack.c.h.b16 %v4065
    %v4431 = vunpack.c.l.b16 %v4066
    %v4432 = vunpack.c.h.b16 %v4066
    %v4433 = vunpack.c.l.b16 %v4067
    %v4434 = vunpack.c.h.b16 %v4067
    %v4435 = vunpack.c.l.b16 %v4068
    %v4436 = vunpack.c.h.b16 %v4068
    %v4437 = vunpack.c.l.b16 %v4069
    %v4438 = vunpack.c.h.b16 %v4069
    %v4439 = vunpack.c.l.b16 %v4070
    %v4440 = vunpack.c.h.b16 %v4070
    %v4441 = vunpack.c.l.b16 %v4071
    %v4442 = vunpack.c.h.b16 %v4071
    %v4443 = vunpack.c.l.b16 %v4072
    %v4444 = vunpack.c.h.b16 %v4072
    %v4445 = vunpack.c.l.b16 %v4073
    %v4446 = vunpack.c.h.b16 %v4073
    %v4447 = vunpack.c.l.b16 %v4074
    %v4448 = vunpack.c.h.b16 %v4074
    %v4449 = vunpack.c.l.b16 %v4075
    %v4450 = vunpack.c.h.b16 %v4075
    %v4451 = vunpack.c.l.b16 %v4076
    %v4452 = vunpack.c.h.b16 %v4076
    %v4453 = vunpack.c.l.b16 %v4077
    %v4454 = vunpack.c.h.b16 %v4077
    %v4455 = vunpack.c.l.b16 %v4078
    %v4456 = vunpack.c.h.b16 %v4078
    %v4457 = vunpack.c.l.b16 %v4079
    %v4458 = vunpack.c.h.b16 %v4079
    %v4459 = vunpack.c.l.b16 %v4080
    %v4460 = vunpack.c.h.b16 %v4080
    %v4461 = vunpack.c.l.b16 %v4081
    %v4462 = vunpack.c.h.b16 %v4081
    %v4463 = vunpack.c.l.b16 %v4082
    %v4464 = vunpack.c.h.b16 %v4082
    %v4465 = vunpack.c.l.b16 %v4083
    %v4466 = vunpack.c.h.b16 %v4083
    %v4467 = vunpack.c.l.b16 %v4084
    %v4468 = vunpack.c.h.b16 %v4084
    %v4469 = vpack.c.b16 %v4217, %v4213
    %v4470 = vpack.c.b16 %v4218, %v4214
    %v4471 = vpack.c.b16 %v4219, %v4215
    %v4472 = vpack.c.b16 %v4220, %v4216
    %v4473 = vpack.c.b16 %v4225, %v4221
    %v4474 = vpack.c.b16 %v4226, %v4222
    %v4475 = vpack.c.b16 %v4227, %v4223
    %v4476 = vpack.c.b16 %v4228, %v4224
    %v4477 = vpack.c.b16 %v4233, %v4229
    %v4478 = vpack.c.b16 %v4234, %v4230
    %v4479 = vpack.c.b16 %v4235, %v4231
    %v4480 = vpack.c.b16 %v4236, %v4232
    %v4481 = vpack.c.b16 %v4241, %v4237
    %v4482 = vpack.c.b16 %v4242, %v4238
    %v4483 = vpack.c.b16 %v4243, %v4239
    %v4484 = vpack.c.b16 %v4244, %v4240
    %v4485 = vpack.c.b16 %v4249, %v4245
    %v4486 = vpack.c.b16 %v4250, %v4246
    %v4487 = vpack.c.b16 %v4251, %v4247
    %v4488 = vpack.c.b16 %v4252, %v4248
    %v4489 = vpack.c.b16 %v4257, %v4253
    %v4490 = vpack.c.b16 %v4258, %v4254
    %v4491 = vpack.c.b16 %v4259, %v4255
    %v4492 = vpack.c.b16 %v4260, %v4256
    %v4493 = vpack.c.b16 %v4265, %v4261
    %v4494 = vpack.c.b16 %v4266, %v4262
    %v4495 = vpack.c.b16 %v4267, %v4263
    %v4496 = vpack.c.b16 %v4268, %v4264
    %v4497 = vpack.c.b16 %v4273, %v4269
    %v4498 = vpack.c.b16 %v4274, %v4270
    %v4499 = vpack.c.b16 %v4275, %v4271
    %v4500 = vpack.c.b16 %v4276, %v4272
    %v4501 = vpack.c.b16 %v4281, %v4277
    %v4502 = vpack.c.b16 %v4282, %v4278
    %v4503 = vpack.c.b16 %v4283, %v4279
    %v4504 = vpack.c.b16 %v4284, %v4280
    %v4505 = vpack.c.b16 %v4289, %v4285
    %v4506 = vpack.c.b16 %v4290, %v4286
    %v4507 = vpack.c.b16 %v4291, %v4287
    %v4508 = vpack.c.b16 %v4292, %v4288
    %v4509 = vpack.c.b16 %v4297, %v4293
    %v4510 = vpack.c.b16 %v4298, %v4294
    %v4511 = vpack.c.b16 %v4299, %v4295
    %v4512 = vpack.c.b16 %v4300, %v4296
    %v4513 = vpack.c.b16 %v4305, %v4301
    %v4514 = vpack.c.b16 %v4306, %v4302
    %v4515 = vpack.c.b16 %v4307, %v4303
    %v4516 = vpack.c.b16 %v4308, %v4304
    %v4517 = vpack.c.b16 %v4313, %v4309
    %v4518 = vpack.c.b16 %v4314, %v4310
    %v4519 = vpack.c.b16 %v4315, %v4311
    %v4520 = vpack.c.b16 %v4316, %v4312
    %v4521 = vpack.c.b16 %v4321, %v4317
    %v4522 = vpack.c.b16 %v4322, %v4318
    %v4523 = vpack.c.b16 %v4323, %v4319
    %v4524 = vpack.c.b16 %v4324, %v4320
    %v4525 = vpack.c.b16 %v4329, %v4325
    %v4526 = vpack.c.b16 %v4330, %v4326
    %v4527 = vpack.c.b16 %v4331, %v4327
    %v4528 = vpack.c.b16 %v4332, %v4328
    %v4529 = vpack.c.b16 %v4337, %v4333
    %v4530 = vpack.c.b16 %v4338, %v4334
    %v4531 = vpack.c.b16 %v4339, %v4335
    %v4532 = vpack.c.b16 %v4340, %v4336
    %v4533 = vpack.c.b16 %v4345, %v4341
    %v4534 = vpack.c.b16 %v4346, %v4342
    %v4535 = vpack.c.b16 %v4347, %v4343
    %v4536 = vpack.c.b16 %v4348, %v4344
    %v4537 = vpack.c.b16 %v4353, %v4349
    %v4538 = vpack.c.b16 %v4354, %v4350
    %v4539 = vpack.c.b16 %v4355, %v4351
    %v4540 = vpack.c.b16 %v4356, %v4352
    %v4541 = vpack.c.b16 %v4361, %v4357
    %v4542 = vpack.c.b16 %v4362, %v4358
    %v4543 = vpack.c.b16 %v4363, %v4359
    %v4544 = vpack.c.b16 %v4364, %v4360
    %v4545 = vpack.c.b16 %v4369, %v4365
    %v4546 = vpack.c.b16 %v4370, %v4366
    %v4547 = vpack.c.b16 %v4371, %v4367
    %v4548 = vpack.c.b16 %v4372, %v4368
    %v4549 = vpack.c.b16 %v4377, %v4373
    %v4550 = vpack.c.b16 %v4378, %v4374
    %v4551 = vpack.c.b16 %v4379, %v4375
    %v4552 = vpack.c.b16 %v4380, %v4376
    %v4553 = vpack.c.b16 %v4385, %v4381
    %v4554 = vpack.c.b16 %v4386, %v4382
    %v4555 = vpack.c.b16 %v4387, %v4383
    %v4556 = vpack.c.b16 %v4388, %v4384
    %v4557 = vpack.c.b16 %v4393, %v4389
    %v4558 = vpack.c.b16 %v4394, %v4390
    %v4559 = vpack.c.b16 %v4395, %v4391
    %v4560 = vpack.c.b16 %v4396, %v4392
    %v4561 = vpack.c.b16 %v4401, %v4397
    %v4562 = vpack.c.b16 %v4402, %v4398
    %v4563 = vpack.c.b16 %v4403, %v4399
    %v4564 = vpack.c.b16 %v4404, %v4400
    %v4565 = vpack.c.b16 %v4409, %v4405
    %v4566 = vpack.c.b16 %v4410, %v4406
    %v4567 = vpack.c.b16 %v4411, %v4407
    %v4568 = vpack.c.b16 %v4412, %v4408
    %v4569 = vpack.c.b16 %v4417, %v4413
    %v4570 = vpack.c.b16 %v4418, %v4414
    %v4571 = vpack.c.b16 %v4419, %v4415
    %v4572 = vpack.c.b16 %v4420, %v4416
    %v4573 = vpack.c.b16 %v4425, %v4421
    %v4574 = vpack.c.b16 %v4426, %v4422
    %v4575 = vpack.c.b16 %v4427, %v4423
    %v4576 = vpack.c.b16 %v4428, %v4424
    %v4577 = vpack.c.b16 %v4433, %v4429
    %v4578 = vpack.c.b16 %v4434, %v4430
    %v4579 = vpack.c.b16 %v4435, %v4431
    %v4580 = vpack.c.b16 %v4436, %v4432
    %v4581 = vpack.c.b16 %v4441, %v4437
    %v4582 = vpack.c.b16 %v4442, %v4438
    %v4583 = vpack.c.b16 %v4443, %v4439
    %v4584 = vpack.c.b16 %v4444, %v4440
    %v4585 = vpack.c.b16 %v4449, %v4445
    %v4586 = vpack.c.b16 %v4450, %v4446
    %v4587 = vpack.c.b16 %v4451, %v4447
    %v4588 = vpack.c.b16 %v4452, %v4448
    %v4589 = vpack.c.b16 %v4457, %v4453
    %v4590 = vpack.c.b16 %v4458, %v4454
    %v4591 = vpack.c.b16 %v4459, %v4455
    %v4592 = vpack.c.b16 %v4460, %v4456
    %v4593 = vpack.c.b16 %v4465, %v4461
    %v4594 = vpack.c.b16 %v4466, %v4462
    %v4595 = vpack.c.b16 %v4467, %v4463
    %v4596 = vpack.c.b16 %v4468, %v4464
    %4725 = vmatpush.bf16.msra.mxu0 %v4497
    %4726 = vmatpush.bf16.msra.mxu0 %v4493
    %4727 = vmatpush.bf16.msra.mxu0 %v4489
    %4728 = vmatpush.bf16.msra.mxu0 %v4485
    %4729 = vmatpush.bf16.msra.mxu0 %v4481
    %4730 = vmatpush.bf16.msra.mxu0 %v4477
    %4731 = vmatpush.bf16.msra.mxu0 %v4473
    %4732 = vmatpush.bf16.msra.mxu0 %v4469
    %4733 = vmatmul.bf16.gmra.mxu0 %v3953
    %v4734 = vpop.f32.mrf.mxu0
    %v4735 = vadd.f32 0.0, %v4734
    %v4736 = vpop.f32.mrf.mxu0
    %4737 = vdwg.mxu0
    %4738 = vmatpush.bf16.msra.mxu0 %v4529
    %4739 = vmatpush.bf16.msra.mxu0 %v4525
    %4740 = vmatpush.bf16.msra.mxu0 %v4521
    %4741 = vmatpush.bf16.msra.mxu0 %v4517
    %4742 = vmatpush.bf16.msra.mxu0 %v4513
    %4743 = vmatpush.bf16.msra.mxu0 %v4509
    %4744 = vmatpush.bf16.msra.mxu0 %v4505
    %4745 = vmatpush.bf16.msra.mxu0 %v4501
    %4746 = vmatmul.bf16.gmra.mxu0 %v3954
    %v4747 = vpop.f32.mrf.mxu0
    %v4748 = vadd.f32 %v4735, %v4747
    %v4749 = vpop.f32.mrf.mxu0
    %4750 = vdwg.mxu0
    %4751 = vmatpush.bf16.msra.mxu0 %v4561
    %4752 = vmatpush.bf16.msra.mxu0 %v4557
    %4753 = vmatpush.bf16.msra.mxu0 %v4553
    %4754 = vmatpush.bf16.msra.mxu0 %v4549
    %4755 = vmatpush.bf16.msra.mxu0 %v4545
    %4756 = vmatpush.bf16.msra.mxu0 %v4541
    %4757 = vmatpush.bf16.msra.mxu0 %v4537
    %4758 = vmatpush.bf16.msra.mxu0 %v4533
    %4759 = vmatmul.bf16.gmra.mxu0 %v3955
    %v4760 = vpop.f32.mrf.mxu0
    %v4761 = vadd.f32 %v4748, %v4760
    %v4762 = vpop.f32.mrf.mxu0
    %4763 = vdwg.mxu0
    %4764 = vmatpush.bf16.msra.mxu0 %v4593
    %4765 = vmatpush.bf16.msra.mxu0 %v4589
    %4766 = vmatpush.bf16.msra.mxu0 %v4585
    %4767 = vmatpush.bf16.msra.mxu0 %v4581
    %4768 = vmatpush.bf16.msra.mxu0 %v4577
    %4769 = vmatpush.bf16.msra.mxu0 %v4573
    %4770 = vmatpush.bf16.msra.mxu0 %v4569
    %4771 = vmatpush.bf16.msra.mxu0 %v4565
    %4772 = vmatmul.bf16.gmra.mxu0 %v3956
    %v4773 = vpop.f32.mrf.mxu0
    %v4774 = vadd.f32 %v4761, %v4773
    %v4775 = vpop.f32.mrf.mxu0
    %4776 = vdwg.mxu0
    %4777 = vmatpush.bf16.msra.mxu0 %v4498
    %4778 = vmatpush.bf16.msra.mxu0 %v4494
    %4779 = vmatpush.bf16.msra.mxu0 %v4490
    %4780 = vmatpush.bf16.msra.mxu0 %v4486
    %4781 = vmatpush.bf16.msra.mxu0 %v4482
    %4782 = vmatpush.bf16.msra.mxu0 %v4478
    %4783 = vmatpush.bf16.msra.mxu0 %v4474
    %4784 = vmatpush.bf16.msra.mxu0 %v4470
    %4785 = vmatmul.bf16.gmra.mxu0 %v3953
    %v4786 = vpop.f32.mrf.mxu0
    %v4787 = vadd.f32 0.0, %v4786
    %v4788 = vpop.f32.mrf.mxu0
    %4789 = vdwg.mxu0
    %4790 = vmatpush.bf16.msra.mxu0 %v4530
    %4791 = vmatpush.bf16.msra.mxu0 %v4526
    %4792 = vmatpush.bf16.msra.mxu0 %v4522
    %4793 = vmatpush.bf16.msra.mxu0 %v4518
    %4794 = vmatpush.bf16.msra.mxu0 %v4514
    %4795 = vmatpush.bf16.msra.mxu0 %v4510
    %4796 = vmatpush.bf16.msra.mxu0 %v4506
    %4797 = vmatpush.bf16.msra.mxu0 %v4502
    %4798 = vmatmul.bf16.gmra.mxu0 %v3954
    %v4799 = vpop.f32.mrf.mxu0
    %v4800 = vadd.f32 %v4787, %v4799
    %v4801 = vpop.f32.mrf.mxu0
    %4802 = vdwg.mxu0
    %4803 = vmatpush.bf16.msra.mxu0 %v4562
    %4804 = vmatpush.bf16.msra.mxu0 %v4558
    %4805 = vmatpush.bf16.msra.mxu0 %v4554
    %4806 = vmatpush.bf16.msra.mxu0 %v4550
    %4807 = vmatpush.bf16.msra.mxu0 %v4546
    %4808 = vmatpush.bf16.msra.mxu0 %v4542
    %4809 = vmatpush.bf16.msra.mxu0 %v4538
    %4810 = vmatpush.bf16.msra.mxu0 %v4534
    %4811 = vmatmul.bf16.gmra.mxu0 %v3955
    %v4812 = vpop.f32.mrf.mxu0
    %v4813 = vadd.f32 %v4800, %v4812
    %v4814 = vpop.f32.mrf.mxu0
    %4815 = vdwg.mxu0
    %4816 = vmatpush.bf16.msra.mxu0 %v4594
    %4817 = vmatpush.bf16.msra.mxu0 %v4590
    %4818 = vmatpush.bf16.msra.mxu0 %v4586
    %4819 = vmatpush.bf16.msra.mxu0 %v4582
    %4820 = vmatpush.bf16.msra.mxu0 %v4578
    %4821 = vmatpush.bf16.msra.mxu0 %v4574
    %4822 = vmatpush.bf16.msra.mxu0 %v4570
    %4823 = vmatpush.bf16.msra.mxu0 %v4566
    %4824 = vmatmul.bf16.gmra.mxu0 %v3956
    %v4825 = vpop.f32.mrf.mxu0
    %v4826 = vadd.f32 %v4813, %v4825
    %v4827 = vpop.f32.mrf.mxu0
    %4828 = vdwg.mxu0
    %4829 = vmatpush.bf16.msra.mxu0 %v4499
    %4830 = vmatpush.bf16.msra.mxu0 %v4495
    %4831 = vmatpush.bf16.msra.mxu0 %v4491
    %4832 = vmatpush.bf16.msra.mxu0 %v4487
    %4833 = vmatpush.bf16.msra.mxu0 %v4483
    %4834 = vmatpush.bf16.msra.mxu0 %v4479
    %4835 = vmatpush.bf16.msra.mxu0 %v4475
    %4836 = vmatpush.bf16.msra.mxu0 %v4471
    %4837 = vmatmul.bf16.gmra.mxu0 %v3953
    %v4838 = vpop.f32.mrf.mxu0
    %v4839 = vadd.f32 0.0, %v4838
    %v4840 = vpop.f32.mrf.mxu0
    %4841 = vdwg.mxu0
    %4842 = vmatpush.bf16.msra.mxu0 %v4531
    %4843 = vmatpush.bf16.msra.mxu0 %v4527
    %4844 = vmatpush.bf16.msra.mxu0 %v4523
    %4845 = vmatpush.bf16.msra.mxu0 %v4519
    %4846 = vmatpush.bf16.msra.mxu0 %v4515
    %4847 = vmatpush.bf16.msra.mxu0 %v4511
    %4848 = vmatpush.bf16.msra.mxu0 %v4507
    %4849 = vmatpush.bf16.msra.mxu0 %v4503
    %4850 = vmatmul.bf16.gmra.mxu0 %v3954
    %v4851 = vpop.f32.mrf.mxu0
    %v4852 = vadd.f32 %v4839, %v4851
    %v4853 = vpop.f32.mrf.mxu0
    %4854 = vdwg.mxu0
    %4855 = vmatpush.bf16.msra.mxu0 %v4563
    %4856 = vmatpush.bf16.msra.mxu0 %v4559
    %4857 = vmatpush.bf16.msra.mxu0 %v4555
    %4858 = vmatpush.bf16.msra.mxu0 %v4551
    %4859 = vmatpush.bf16.msra.mxu0 %v4547
    %4860 = vmatpush.bf16.msra.mxu0 %v4543
    %4861 = vmatpush.bf16.msra.mxu0 %v4539
    %4862 = vmatpush.bf16.msra.mxu0 %v4535
    %4863 = vmatmul.bf16.gmra.mxu0 %v3955
    %v4864 = vpop.f32.mrf.mxu0
    %v4865 = vadd.f32 %v4852, %v4864
    %v4866 = vpop.f32.mrf.mxu0
    %4867 = vdwg.mxu0
    %4868 = vmatpush.bf16.msra.mxu0 %v4595
    %4869 = vmatpush.bf16.msra.mxu0 %v4591
    %4870 = vmatpush.bf16.msra.mxu0 %v4587
    %4871 = vmatpush.bf16.msra.mxu0 %v4583
    %4872 = vmatpush.bf16.msra.mxu0 %v4579
    %4873 = vmatpush.bf16.msra.mxu0 %v4575
    %4874 = vmatpush.bf16.msra.mxu0 %v4571
    %4875 = vmatpush.bf16.msra.mxu0 %v4567
    %4876 = vmatmul.bf16.gmra.mxu0 %v3956
    %v4877 = vpop.f32.mrf.mxu0
    %v4878 = vadd.f32 %v4865, %v4877
    %v4879 = vpop.f32.mrf.mxu0
    %4880 = vdwg.mxu0
    %4881 = vmatpush.bf16.msra.mxu0 %v4500
    %4882 = vmatpush.bf16.msra.mxu0 %v4496
    %4883 = vmatpush.bf16.msra.mxu0 %v4492
    %4884 = vmatpush.bf16.msra.mxu0 %v4488
    %4885 = vmatpush.bf16.msra.mxu0 %v4484
    %4886 = vmatpush.bf16.msra.mxu0 %v4480
    %4887 = vmatpush.bf16.msra.mxu0 %v4476
    %4888 = vmatpush.bf16.msra.mxu0 %v4472
    %4889 = vmatmul.bf16.gmra.mxu0 %v3953
    %v4890 = vpop.f32.mrf.mxu0
    %v4891 = vadd.f32 0.0, %v4890
    %v4892 = vpop.f32.mrf.mxu0
    %4893 = vdwg.mxu0
    %4894 = vmatpush.bf16.msra.mxu0 %v4532
    %4895 = vmatpush.bf16.msra.mxu0 %v4528
    %4896 = vmatpush.bf16.msra.mxu0 %v4524
    %4897 = vmatpush.bf16.msra.mxu0 %v4520
    %4898 = vmatpush.bf16.msra.mxu0 %v4516
    %4899 = vmatpush.bf16.msra.mxu0 %v4512
    %4900 = vmatpush.bf16.msra.mxu0 %v4508
    %4901 = vmatpush.bf16.msra.mxu0 %v4504
    %4902 = vmatmul.bf16.gmra.mxu0 %v3954
    %v4903 = vpop.f32.mrf.mxu0
    %v4904 = vadd.f32 %v4891, %v4903
    %v4905 = vpop.f32.mrf.mxu0
    %4906 = vdwg.mxu0
    %4907 = vmatpush.bf16.msra.mxu0 %v4564
    %4908 = vmatpush.bf16.msra.mxu0 %v4560
    %4909 = vmatpush.bf16.msra.mxu0 %v4556
    %4910 = vmatpush.bf16.msra.mxu0 %v4552
    %4911 = vmatpush.bf16.msra.mxu0 %v4548
    %4912 = vmatpush.bf16.msra.mxu0 %v4544
    %4913 = vmatpush.bf16.msra.mxu0 %v4540
    %4914 = vmatpush.bf16.msra.mxu0 %v4536
    %4915 = vmatmul.bf16.gmra.mxu0 %v3955
    %v4916 = vpop.f32.mrf.mxu0
    %v4917 = vadd.f32 %v4904, %v4916
    %v4918 = vpop.f32.mrf.mxu0
    %4919 = vdwg.mxu0
    %4920 = vmatpush.bf16.msra.mxu0 %v4596
    %4921 = vmatpush.bf16.msra.mxu0 %v4592
    %4922 = vmatpush.bf16.msra.mxu0 %v4588
    %4923 = vmatpush.bf16.msra.mxu0 %v4584
    %4924 = vmatpush.bf16.msra.mxu0 %v4580
    %4925 = vmatpush.bf16.msra.mxu0 %v4576
    %4926 = vmatpush.bf16.msra.mxu0 %v4572
    %4927 = vmatpush.bf16.msra.mxu0 %v4568
    %4928 = vmatmul.bf16.gmra.mxu0 %v3956
    %v4929 = vpop.f32.mrf.mxu0
    %v4930 = vadd.f32 %v4917, %v4929
    %v4931 = vpop.f32.mrf.mxu0
    %4932 = vdwg.mxu0
    %v4933 = vadd.f32 %v3945, %v4774
    %v4934 = vadd.f32 %v3946, %v4826
    %v4935 = vadd.f32 %v3947, %v4878
    %v4936 = vadd.f32 %v3948, %v4930
    %v4937 = vadd.s32 %v89, 128
    %v4938 = vadd.s32 %v89, 256
    %v4939 = vadd.s32 %v89, 384
    %vm4940 = vcmp.lt.s32.totalorder %v89, 480
    %vm4941 = vcmp.lt.s32.totalorder %v4937, 480
    %vm4942 = vcmp.lt.s32.totalorder %v4938, 480
    %vm4943 = vcmp.lt.s32.totalorder %v4939, 480
    %v4944 = vsel %vm4940, 1, 0
    %v4945 = vsel %vm4941, 1, 0
    %v4946 = vsel %vm4942, 1, 0
    %v4947 = vsel %vm4943, 1, 0
    %v4948 = vcvt.s32.f32 %v4944
    %v4949 = vcvt.s32.f32 %v4945
    %v4950 = vcvt.s32.f32 %v4946
    %v4951 = vcvt.s32.f32 %v4947
    %v4952 = vmul.f32 %v4933, %v4948
    %v4953 = vmul.f32 %v4934, %v4949
    %v4954 = vmul.f32 %v4935, %v4950
    %v4955 = vmul.f32 %v4936, %v4951
    %vm4956 = vcmask 1041408
    %v4957 = vsel %vm4956, %v4952, 0.0
    %v4958 = vsel %vm4956, %v4953, 0.0
    %v4959 = vadd.f32 %v4957, %v4958
    %v4960 = vsel %vm4956, %v4954, 0.0
    %v4961 = vadd.f32 %v4959, %v4960
    %v4962 = vsel %vm4956, %v4955, 0.0
    %v4963 = vadd.f32 %v4961, %v4962
    %4964 = vadd.xlane.f32.xlu0 %v4963
    %v4965 = vpop.xlane.xlu0 %4964
    %v4966 = vmul.f32 %v4965, 0.0020833334
    %v4967 = vsub.f32 %v4933, %v4966
    %v4968 = vsub.f32 %v4934, %v4966
    %v4969 = vsub.f32 %v4935, %v4966
    %v4970 = vsub.f32 %v4936, %v4966
    %v4971 = vmul.f32 %v4967, %v4948
    %v4972 = vmul.f32 %v4968, %v4949
    %v4973 = vmul.f32 %v4969, %v4950
    %v4974 = vmul.f32 %v4970, %v4951
    %v4975 = vmul.f32 %v4971, %v4971
    %v4976 = vmul.f32 %v4972, %v4972
    %v4977 = vmul.f32 %v4973, %v4973
    %v4978 = vmul.f32 %v4974, %v4974
    %v4979 = vsel %vm4956, %v4975, 0.0
    %v4980 = vsel %vm4956, %v4976, 0.0
    %v4981 = vadd.f32 %v4979, %v4980
    %v4982 = vsel %vm4956, %v4977, 0.0
    %v4983 = vadd.f32 %v4981, %v4982
    %v4984 = vsel %vm4956, %v4978, 0.0
    %v4985 = vadd.f32 %v4983, %v4984
    %4986 = vadd.xlane.f32.xlu0 %v4985
    %v4987 = vpop.xlane.xlu0 %4986
    %v4988 = vmul.f32 %v4987, 0.0020833334
    %v4989 = vadd.f32 %v4988, 1e-05
    %v4990 = vrsqrt.pop %v4989
    %v4991 = vmul.f32 %v4990, %v4989
    %v4992 = vmul.f32 %v4991, %v4990
    %v4993 = vmul.f32 0.5, %v4992
    %v4994 = vsub.f32 1.5, %v4993
    %v4995 = vmul.f32 %v4990, %v4994
    %vm4996 = vweird.f32 %v4989
    %vm4997 = vweird.f32 %v4990
    %vm4998 = vmor %vm4996, %vm4997
    %v4999 = vsel %vm4998, %v4990, %v4995
    %v5000 = vmul.f32 %v4971, %v4999
    %v5001 = vmul.f32 %v4972, %v4999
    %v5002 = vmul.f32 %v4973, %v4999
    %v5003 = vmul.f32 %v4974, %v4999
    %v5004 = vld [vmem:[%s4] sm:$0xf]
    %v5006 = vperm.slane %v5004, 0
    %v5007 = vperm.slane %v5004, 1
    %v5008 = vperm.slane %v5004, 2
    %v5009 = vperm.slane %v5004, 3
    %v5014 = vmul.f32 %v5000, %v5006
    %v5015 = vmul.f32 %v5001, %v5007
    %v5016 = vmul.f32 %v5002, %v5008
    %v5017 = vmul.f32 %v5003, %v5009
    %v5018 = vld [vmem:[%s5] sm:$0xf]
    %v5020 = vperm.slane %v5018, 0
    %v5021 = vperm.slane %v5018, 1
    %v5022 = vperm.slane %v5018, 2
    %v5023 = vperm.slane %v5018, 3
    %v5028 = vadd.f32 %v5014, %v5020
    %v5029 = vadd.f32 %v5015, %v5021
    %v5030 = vadd.f32 %v5016, %v5022
    %v5031 = vadd.f32 %v5017, %v5023
    %v5032 = vpack.c.bf16 %v5028, %v5028
    %v5033 = vpack.c.bf16 %v5029, %v5029
    %v5034 = vpack.c.bf16 %v5030, %v5030
    %v5035 = vpack.c.bf16 %v5031, %v5031
    %v5036 = vld [vmem:[#allocation5] sm:$0xf]
    %v5037 = vld [vmem:[#allocation5 + $0x4] sm:$0xf]
    %v5038 = vld [vmem:[#allocation5 + $0x8] sm:$0xf]
    %v5039 = vld [vmem:[#allocation5 + $0xc] sm:$0xf]
    %v5040 = vld [vmem:[#allocation5 + $0x10] sm:$0xf]
    %v5041 = vld [vmem:[#allocation5 + $0x14] sm:$0xf]
    %v5042 = vld [vmem:[#allocation5 + $0x18] sm:$0xf]
    %v5043 = vld [vmem:[#allocation5 + $0x1c] sm:$0xf]
    %v5044 = vld [vmem:[#allocation5 + $0x20] sm:$0xf]
    %v5045 = vld [vmem:[#allocation5 + $0x24] sm:$0xf]
    %v5046 = vld [vmem:[#allocation5 + $0x28] sm:$0xf]
    %v5047 = vld [vmem:[#allocation5 + $0x2c] sm:$0xf]
    %v5048 = vld [vmem:[#allocation5 + $0x30] sm:$0xf]
    %v5049 = vld [vmem:[#allocation5 + $0x34] sm:$0xf]
    %v5050 = vld [vmem:[#allocation5 + $0x38] sm:$0xf]
    %v5051 = vld [vmem:[#allocation5 + $0x3c] sm:$0xf]
    %v5052 = vld [vmem:[#allocation5 + $0x40] sm:$0xf]
    %v5053 = vld [vmem:[#allocation5 + $0x44] sm:$0xf]
    %v5054 = vld [vmem:[#allocation5 + $0x48] sm:$0xf]
    %v5055 = vld [vmem:[#allocation5 + $0x4c] sm:$0xf]
    %v5056 = vld [vmem:[#allocation5 + $0x50] sm:$0xf]
    %v5057 = vld [vmem:[#allocation5 + $0x54] sm:$0xf]
    %v5058 = vld [vmem:[#allocation5 + $0x58] sm:$0xf]
    %v5059 = vld [vmem:[#allocation5 + $0x5c] sm:$0xf]
    %v5060 = vld [vmem:[#allocation5 + $0x60] sm:$0xf]
    %v5061 = vld [vmem:[#allocation5 + $0x64] sm:$0xf]
    %v5062 = vld [vmem:[#allocation5 + $0x68] sm:$0xf]
    %v5063 = vld [vmem:[#allocation5 + $0x6c] sm:$0xf]
    %v5064 = vld [vmem:[#allocation5 + $0x70] sm:$0xf]
    %v5065 = vld [vmem:[#allocation5 + $0x74] sm:$0xf]
    %v5066 = vld [vmem:[#allocation5 + $0x78] sm:$0xf]
    %v5067 = vld [vmem:[#allocation5 + $0x7c] sm:$0xf]
    %v5068 = vld [vmem:[#allocation5 + $0x80] sm:$0xf]
    %v5069 = vld [vmem:[#allocation5 + $0x84] sm:$0xf]
    %v5070 = vld [vmem:[#allocation5 + $0x88] sm:$0xf]
    %v5071 = vld [vmem:[#allocation5 + $0x8c] sm:$0xf]
    %v5072 = vld [vmem:[#allocation5 + $0x90] sm:$0xf]
    %v5073 = vld [vmem:[#allocation5 + $0x94] sm:$0xf]
    %v5074 = vld [vmem:[#allocation5 + $0x98] sm:$0xf]
    %v5075 = vld [vmem:[#allocation5 + $0x9c] sm:$0xf]
    %v5076 = vld [vmem:[#allocation5 + $0xa0] sm:$0xf]
    %v5077 = vld [vmem:[#allocation5 + $0xa4] sm:$0xf]
    %v5078 = vld [vmem:[#allocation5 + $0xa8] sm:$0xf]
    %v5079 = vld [vmem:[#allocation5 + $0xac] sm:$0xf]
    %v5080 = vld [vmem:[#allocation5 + $0xb0] sm:$0xf]
    %v5081 = vld [vmem:[#allocation5 + $0xb4] sm:$0xf]
    %v5082 = vld [vmem:[#allocation5 + $0xb8] sm:$0xf]
    %v5083 = vld [vmem:[#allocation5 + $0xbc] sm:$0xf]
    %v5084 = vld [vmem:[#allocation5 + $0xc0] sm:$0xf]
    %v5085 = vld [vmem:[#allocation5 + $0xc4] sm:$0xf]
    %v5086 = vld [vmem:[#allocation5 + $0xc8] sm:$0xf]
    %v5087 = vld [vmem:[#allocation5 + $0xcc] sm:$0xf]
    %v5088 = vld [vmem:[#allocation5 + $0xd0] sm:$0xf]
    %v5089 = vld [vmem:[#allocation5 + $0xd4] sm:$0xf]
    %v5090 = vld [vmem:[#allocation5 + $0xd8] sm:$0xf]
    %v5091 = vld [vmem:[#allocation5 + $0xdc] sm:$0xf]
    %v5092 = vld [vmem:[#allocation5 + $0xe0] sm:$0xf]
    %v5093 = vld [vmem:[#allocation5 + $0xe4] sm:$0xf]
    %v5094 = vld [vmem:[#allocation5 + $0xe8] sm:$0xf]
    %v5095 = vld [vmem:[#allocation5 + $0xec] sm:$0xf]
    %v5096 = vld [vmem:[#allocation5 + $0xf0] sm:$0xf]
    %v5097 = vld [vmem:[#allocation5 + $0xf4] sm:$0xf]
    %v5098 = vld [vmem:[#allocation5 + $0xf8] sm:$0xf]
    %v5099 = vld [vmem:[#allocation5 + $0xfc] sm:$0xf]
    %v5100 = vld [vmem:[%s7] sm:$0x1]
    %v5102 = vperm.slane %v5100, 0
    %v5168 = vunpack.c.l.b16 %v5036
    %v5169 = vunpack.c.l.b16 %v5037
    %v5170 = vunpack.c.l.b16 %v5038
    %v5171 = vunpack.c.l.b16 %v5039
    %v5172 = vunpack.c.l.b16 %v5040
    %v5173 = vunpack.c.l.b16 %v5041
    %v5174 = vunpack.c.l.b16 %v5042
    %v5175 = vunpack.c.l.b16 %v5043
    %v5176 = vunpack.c.l.b16 %v5044
    %v5177 = vunpack.c.l.b16 %v5045
    %v5178 = vunpack.c.l.b16 %v5046
    %v5179 = vunpack.c.l.b16 %v5047
    %v5180 = vunpack.c.l.b16 %v5048
    %v5181 = vunpack.c.l.b16 %v5049
    %v5182 = vunpack.c.l.b16 %v5050
    %v5183 = vunpack.c.l.b16 %v5051
    %v5184 = vunpack.c.l.b16 %v5052
    %v5185 = vunpack.c.l.b16 %v5053
    %v5186 = vunpack.c.l.b16 %v5054
    %v5187 = vunpack.c.l.b16 %v5055
    %v5188 = vunpack.c.l.b16 %v5056
    %v5189 = vunpack.c.l.b16 %v5057
    %v5190 = vunpack.c.l.b16 %v5058
    %v5191 = vunpack.c.l.b16 %v5059
    %v5192 = vunpack.c.l.b16 %v5060
    %v5193 = vunpack.c.l.b16 %v5061
    %v5194 = vunpack.c.l.b16 %v5062
    %v5195 = vunpack.c.l.b16 %v5063
    %v5196 = vunpack.c.l.b16 %v5064
    %v5197 = vunpack.c.l.b16 %v5065
    %v5198 = vunpack.c.l.b16 %v5066
    %v5199 = vunpack.c.l.b16 %v5067
    %v5200 = vunpack.c.l.b16 %v5068
    %v5201 = vunpack.c.l.b16 %v5069
    %v5202 = vunpack.c.l.b16 %v5070
    %v5203 = vunpack.c.l.b16 %v5071
    %v5204 = vunpack.c.l.b16 %v5072
    %v5205 = vunpack.c.l.b16 %v5073
    %v5206 = vunpack.c.l.b16 %v5074
    %v5207 = vunpack.c.l.b16 %v5075
    %v5208 = vunpack.c.l.b16 %v5076
    %v5209 = vunpack.c.l.b16 %v5077
    %v5210 = vunpack.c.l.b16 %v5078
    %v5211 = vunpack.c.l.b16 %v5079
    %v5212 = vunpack.c.l.b16 %v5080
    %v5213 = vunpack.c.l.b16 %v5081
    %v5214 = vunpack.c.l.b16 %v5082
    %v5215 = vunpack.c.l.b16 %v5083
    %v5216 = vunpack.c.l.b16 %v5084
    %v5217 = vunpack.c.l.b16 %v5085
    %v5218 = vunpack.c.l.b16 %v5086
    %v5219 = vunpack.c.l.b16 %v5087
    %v5220 = vunpack.c.l.b16 %v5088
    %v5221 = vunpack.c.l.b16 %v5089
    %v5222 = vunpack.c.l.b16 %v5090
    %v5223 = vunpack.c.l.b16 %v5091
    %v5224 = vunpack.c.l.b16 %v5092
    %v5225 = vunpack.c.l.b16 %v5093
    %v5226 = vunpack.c.l.b16 %v5094
    %v5227 = vunpack.c.l.b16 %v5095
    %v5228 = vunpack.c.l.b16 %v5096
    %v5229 = vunpack.c.l.b16 %v5097
    %v5230 = vunpack.c.l.b16 %v5098
    %v5231 = vunpack.c.l.b16 %v5099
    %v5232 = vpack.c.b16 %v5169, %v5168
    %v5233 = vpack.c.b16 %v5171, %v5170
    %v5234 = vpack.c.b16 %v5173, %v5172
    %v5235 = vpack.c.b16 %v5175, %v5174
    %v5236 = vpack.c.b16 %v5177, %v5176
    %v5237 = vpack.c.b16 %v5179, %v5178
    %v5238 = vpack.c.b16 %v5181, %v5180
    %v5239 = vpack.c.b16 %v5183, %v5182
    %v5240 = vpack.c.b16 %v5185, %v5184
    %v5241 = vpack.c.b16 %v5187, %v5186
    %v5242 = vpack.c.b16 %v5189, %v5188
    %v5243 = vpack.c.b16 %v5191, %v5190
    %v5244 = vpack.c.b16 %v5193, %v5192
    %v5245 = vpack.c.b16 %v5195, %v5194
    %v5246 = vpack.c.b16 %v5197, %v5196
    %v5247 = vpack.c.b16 %v5199, %v5198
    %v5248 = vpack.c.b16 %v5201, %v5200
    %v5249 = vpack.c.b16 %v5203, %v5202
    %v5250 = vpack.c.b16 %v5205, %v5204
    %v5251 = vpack.c.b16 %v5207, %v5206
    %v5252 = vpack.c.b16 %v5209, %v5208
    %v5253 = vpack.c.b16 %v5211, %v5210
    %v5254 = vpack.c.b16 %v5213, %v5212
    %v5255 = vpack.c.b16 %v5215, %v5214
    %v5256 = vpack.c.b16 %v5217, %v5216
    %v5257 = vpack.c.b16 %v5219, %v5218
    %v5258 = vpack.c.b16 %v5221, %v5220
    %v5259 = vpack.c.b16 %v5223, %v5222
    %v5260 = vpack.c.b16 %v5225, %v5224
    %v5261 = vpack.c.b16 %v5227, %v5226
    %v5262 = vpack.c.b16 %v5229, %v5228
    %v5263 = vpack.c.b16 %v5231, %v5230
    %5296 = vmatpush.bf16.msra.mxu0 %v5239
    %5297 = vmatpush.bf16.msra.mxu0 %v5238
    %5298 = vmatpush.bf16.msra.mxu0 %v5237
    %5299 = vmatpush.bf16.msra.mxu0 %v5236
    %5300 = vmatpush.bf16.msra.mxu0 %v5235
    %5301 = vmatpush.bf16.msra.mxu0 %v5234
    %5302 = vmatpush.bf16.msra.mxu0 %v5233
    %5303 = vmatpush.bf16.msra.mxu0 %v5232
    %5304 = vmatmul.bf16.gmra.mxu0 %v5032
    %v5305 = vpop.f32.mrf.mxu0
    %v5306 = vadd.f32 %v5102, %v5305
    %v5307 = vpop.f32.mrf.mxu0
    %5308 = vdwg.mxu0
    %5309 = vmatpush.bf16.msra.mxu0 %v5247
    %5310 = vmatpush.bf16.msra.mxu0 %v5246
    %5311 = vmatpush.bf16.msra.mxu0 %v5245
    %5312 = vmatpush.bf16.msra.mxu0 %v5244
    %5313 = vmatpush.bf16.msra.mxu0 %v5243
    %5314 = vmatpush.bf16.msra.mxu0 %v5242
    %5315 = vmatpush.bf16.msra.mxu0 %v5241
    %5316 = vmatpush.bf16.msra.mxu0 %v5240
    %5317 = vmatmul.bf16.gmra.mxu0 %v5033
    %v5318 = vpop.f32.mrf.mxu0
    %v5319 = vadd.f32 %v5306, %v5318
    %v5320 = vpop.f32.mrf.mxu0
    %5321 = vdwg.mxu0
    %5322 = vmatpush.bf16.msra.mxu0 %v5255
    %5323 = vmatpush.bf16.msra.mxu0 %v5254
    %5324 = vmatpush.bf16.msra.mxu0 %v5253
    %5325 = vmatpush.bf16.msra.mxu0 %v5252
    %5326 = vmatpush.bf16.msra.mxu0 %v5251
    %5327 = vmatpush.bf16.msra.mxu0 %v5250
    %5328 = vmatpush.bf16.msra.mxu0 %v5249
    %5329 = vmatpush.bf16.msra.mxu0 %v5248
    %5330 = vmatmul.bf16.gmra.mxu0 %v5034
    %v5331 = vpop.f32.mrf.mxu0
    %v5332 = vadd.f32 %v5319, %v5331
    %v5333 = vpop.f32.mrf.mxu0
    %5334 = vdwg.mxu0
    %5335 = vmatpush.bf16.msra.mxu0 %v5263
    %5336 = vmatpush.bf16.msra.mxu0 %v5262
    %5337 = vmatpush.bf16.msra.mxu0 %v5261
    %5338 = vmatpush.bf16.msra.mxu0 %v5260
    %5339 = vmatpush.bf16.msra.mxu0 %v5259
    %5340 = vmatpush.bf16.msra.mxu0 %v5258
    %5341 = vmatpush.bf16.msra.mxu0 %v5257
    %5342 = vmatpush.bf16.msra.mxu0 %v5256
    %5343 = vmatmul.bf16.gmra.mxu0 %v5035
    %v5344 = vpop.f32.mrf.mxu0
    %v5345 = vadd.f32 %v5332, %v5344
    %v5346 = vpop.f32.mrf.mxu0
    %5347 = vdwg.mxu0
    %v5348 = vxor.u32 %v5345, 2147483648
    %v5349 = vmul.f32 %v5348, 1.442695
    %v5350 = vpow.pop %v5349
    %v5351 = vadd.f32 %v5350, 1.0
    %v5352 = vrcp.pop %v5351
    %v5353 = vmul.f32 %v5351, %v5352
    %v5354 = vsub.f32 1.0, %v5353
    %v5355 = vmul.f32 %v5352, %v5354
    %v5356 = vadd.f32 %v5352, %v5355
    %vm5357 = vweird.f32 %v5351
    %vm5358 = vweird.f32 %v5352
    %vm5359 = vmor %vm5357, %vm5358
    %v5360 = vsel %vm5359, %v5352, %v5356
    %v5361 = vand.u32 2147483647, %v5351
    %vm5362 = vcmp.eq.f32.partialorder %v5361, 8.507059e+37
    %v5363 = vand.u32 %v5351, 2147483648
    %v5364 = vor.u32 1.1754944e-38, %v5363
    %v5365 = vsel %vm5362, %v5364, %v5360
    %v5366 = vmul.f32 1.0, %v5365
    %5367 = vst [vmem:[#allocation7] sm:$0x3] %v5366
    // Predicated region
    $region42: #{deco_forward.1} parent=1 // pred_check
      _
    $region43: #{deco_forward.1} parent=1 // pred_check_branch
      %5369 = sbr.rel (0) target = $region45
    $region44: #{deco_forward.1} parent=1 // pred_region
      %5371 = vsyncadd [#allocation4], 0
      %s5373 = sshll.u32 [#allocation7], 4
      %s5374 = int_to_ptr.vmem [resolvable:$true] %s5373
      %s5375 = sshll.u32 %s8, 4
      %s5376 = int_to_ptr.hbm [resolvable:$true] %s5375
      %5378 = dma.vmem_to_hbm [thread:$0]  %s5374, 32, %s5376, [#allocation4]
    $region45: #{deco_forward.1} parent=1 // pred_fallthru
      _
    // Predicated region
    $region46: #{deco_forward.1} parent=1 // pred_check
      _
    $region47: #{deco_forward.1} parent=1 // pred_check_branch
      %5380 = sbr.rel (0) target = $region49
    $region48: #{deco_forward.1} parent=1 // pred_region
      %5382 = dma.done [#allocation4], 32
    $region49: #{deco_forward.1} parent=1 // pred_fallthru
      _
    %5383 = vsyncpa [#allocation3], 1
    %5384 = vsyncpa [#allocation6], 1
    %5385 = vsyncpa [#allocation4], 1

</llo_original>
